<compile_context>
chip_gen: v6e
topology: v6e:2x2x1
jax: 0.10.0
libtpu: 0.0.40
codegen_flags: <defaults>
</compile_context>

<pallas_src>
import functools

import jax
import jax.numpy as jnp
from jax.experimental import pallas as pl
from jax.experimental.pallas import tpu as pltpu

INPUT_SIZE = 1
HIDDEN = 50
NUM_LAYERS = 2
GATE = 128  # lane-aligned per-gate width (>= HIDDEN, multiple of 128)


# ----------------------------------------------------------------------------- kernel


def _gru_cell(gi, gh, bhn, h, G):
    """One GRU gate block.

    gi already contains b_ih (+ b_hh folded in for the r/z gates); bhn is the n-gate
    slice of b_hh (kept separate because it is scaled by r).  gh=None means h_prev == 0,
    so the recurrent matmul contribution is identically zero and is skipped (t == 0).
    """
    if gh is None:
        rz = jax.nn.sigmoid(gi[:, :2 * G])
        n = jnp.tanh(gi[:, 2 * G:] + rz[:, :G] * bhn)
    else:
        rz = jax.nn.sigmoid(gi[:, :2 * G] + gh[:, :2 * G])
        n = jnp.tanh(gi[:, 2 * G:] + rz[:, :G] * (gh[:, 2 * G:] + bhn))
    z = rz[:, G:]
    return n + z * (h - n)          # == (1 - z) * n + z * h, one fewer VPU op


def gru_kernel(x_ref,            # (T*Bp, I)  time-major, batch-padded input
               wi0_ref,          # (I, 3G)    layer-0 input weights, f32 (VPU path)
               b0c_ref,          # (1, 3G)    layer-0 folded bias: r/z -> bi+bh, n -> bi
               bh0n_ref,         # (1, G)     layer-0 b_hh n-gate slice
               wh0_ref,          # (G, 3G)    layer-0 recurrent weights, bf16
               wi1_ref,          # (G, 3G)    layer-1 input weights, bf16
               b1c_ref,          # (1, 3G)    layer-1 folded bias
               bh1n_ref,         # (1, G)     layer-1 b_hh n-gate slice
               wh1_ref,          # (G, 3G)    layer-1 recurrent weights, bf16
               wl_ref,           # (1, G)     final linear weight row (lanes >= H are 0)
               bl_ref,           # (1, G)     final linear bias (lane 0 real)
               out_ref,          # (Bp, G)    output tile, real value at [:B, 0]
               gi0_ref,          # scratch (T*Bp, 3G) f32: layer-0 input projections
               h0b_ref,          # scratch (T*Bp, G)  f32: all layer-0 hidden states
               gi1_ref,          # scratch (T*Bp, 3G) f32: layer-1 input projections
               *, T, Bp, I, G):
    bf16 = jnp.bfloat16

    # ---- hoisted layer-0 input projection for ALL timesteps (off the serial chain) ----
    if I == 1:
        # (T*Bp, 1) * (1, 3G) -> (T*Bp, 3G): broadcast multiply, no matmul needed.
        gi0_ref[...] = x_ref[...] * wi0_ref[...] + b0c_ref[...]
    else:
        gi0_ref[...] = (jnp.dot(x_ref[...], wi0_ref[...],
                                preferred_element_type=jnp.float32) + b0c_ref[...])

    # ------------------------------- layer 0 time loop --------------------------------
    # t = 0: h_prev == 0 -> skip the recurrent matmul entirely.
    h0 = _gru_cell(gi0_ref[pl.ds(0, Bp), :], None, bh0n_ref[...],
                   jnp.zeros((Bp, G), jnp.float32), G)
    h0b_ref[pl.ds(0, Bp), :] = h0

    def step0(t, h0):
        off = pl.multiple_of(t * Bp, Bp)
        gi0 = gi0_ref[pl.ds(off, Bp), :]
        gh0 = jnp.dot(h0.astype(bf16), wh0_ref[...],            # weight read at call site
                      preferred_element_type=jnp.float32)
        h0 = _gru_cell(gi0, gh0, bh0n_ref[...], h0, G)
        h0b_ref[pl.ds(off, Bp), :] = h0                         # off-chain store
        return h0

    jax.lax.fori_loop(1, T, step0, h0, unroll=True)

    # ---- hoisted layer-1 input projection: ONE batched matmul, off the serial chain ----
    gi1_ref[...] = (jnp.dot(h0b_ref[...].astype(bf16), wi1_ref[...],
                            preferred_element_type=jnp.float32) + b1c_ref[...])

    # ------------------------------- layer 1 time loop --------------------------------
    h1 = _gru_cell(gi1_ref[pl.ds(0, Bp), :], None, bh1n_ref[...],
                   jnp.zeros((Bp, G), jnp.float32), G)

    def step1(t, h1):
        off = pl.multiple_of(t * Bp, Bp)
        gi1 = gi1_ref[pl.ds(off, Bp), :]
        gh1 = jnp.dot(h1.astype(bf16), wh1_ref[...],
                      preferred_element_type=jnp.float32)
        return _gru_cell(gi1, gh1, bh1n_ref[...], h1, G)

    h1 = jax.lax.fori_loop(1, T, step1, h1, unroll=True)

    # ---- final Linear(hidden, 1): VPU multiply + XLU lane-reduce (no weight tile) ----
    red = jnp.sum(h1 * wl_ref[...], axis=-1, keepdims=True)     # (Bp, 1)
    out_ref[...] = red + bl_ref[...]                            # lane-dense (Bp, G) store


# ----------------------------------------------------------------------------- wrapper


def prepare_params(params):
    """One-time prep: transpose, pad each gate to 128 lanes, fold biases, cast the MXU
    weight operands to bf16, and build the (1, G) final-linear row."""
    H, G = HIDDEN, GATE

    def pad_w(w, rows_pad, dtype):
        # (3H, in) torch layout -> (rows_pad, 3G), transposed, gate g at lanes [g*G, g*G+H)
        wt = jnp.asarray(w, jnp.float32).T
        in_dim = wt.shape[0]
        out = jnp.zeros((rows_pad, 3 * G), jnp.float32)
        for g in range(3):
            out = out.at[:in_dim, g * G:g * G + H].set(wt[:, g * H:(g + 1) * H])
        return out.astype(dtype)

    def pad_b(b):
        b = jnp.asarray(b, jnp.float32)
        out = jnp.zeros((1, 3 * G), jnp.float32)
        for g in range(3):
            out = out.at[0, g * G:g * G + H].set(b[g * H:(g + 1) * H])
        return out

    def fold_bias(bi, bh):
        bi_p, bh_p = pad_b(bi), pad_b(bh)
        b_c = bi_p + bh_p.at[:, 2 * G:].set(0.0)       # r,z: bi+bh ; n: bi only
        bh_n = bh_p[:, 2 * G:3 * G]                    # (1, G): must stay separate (scaled by r)
        return b_c, bh_n

    I = params["w_ih0"].shape[1]

    wi0 = pad_w(params["w_ih0"], I, jnp.float32)       # (I, 3G) — VPU broadcast path, keep f32
    wi1 = pad_w(params["w_ih1"], G, jnp.bfloat16)      # (G, 3G) — MXU operand
    wh0 = pad_w(params["w_hh0"], G, jnp.bfloat16)      # (G, 3G)
    wh1 = pad_w(params["w_hh1"], G, jnp.bfloat16)      # (G, 3G)

    b0c, bh0n = fold_bias(params["b_ih0"], params["b_hh0"])
    b1c, bh1n = fold_bias(params["b_ih1"], params["b_hh1"])

    w_lin = jnp.asarray(params["w_lin"], jnp.float32)  # (1, H)
    b_lin = jnp.asarray(params["b_lin"], jnp.float32)  # (1,)
    wl = jnp.zeros((1, G), jnp.float32).at[0, :H].set(w_lin[0, :])
    bl = jnp.zeros((1, G), jnp.float32).at[0, 0].set(b_lin[0])

    return dict(wi0=wi0, b0c=b0c, bh0n=bh0n, wh0=wh0,
                wi1=wi1, b1c=b1c, bh1n=bh1n, wh1=wh1, wl=wl, bl=bl)


def gru_model_forward(x, prep):
    """x: (B, T, I) float32, batch_first like the PyTorch module. Returns (B, 1)."""
    B, T, I = x.shape
    Bp = max(8, ((B + 7) // 8) * 8)                    # sublane-aligned batch
    G = GATE

    x_tm = jnp.transpose(x, (1, 0, 2)).astype(jnp.float32)   # (T, B, I) time-major
    if Bp != B:
        x_tm = jnp.pad(x_tm, ((0, 0), (0, Bp - B), (0, 0)))
    x2d = x_tm.reshape(T * Bp, I)

    args = (x2d,
            prep["wi0"], prep["b0c"], prep["bh0n"], prep["wh0"],
            prep["wi1"], prep["b1c"], prep["bh1n"], prep["wh1"],
            prep["wl"], prep["bl"])

    vmem = pl.BlockSpec(memory_space=pltpu.MemorySpace.VMEM)
    kernel = functools.partial(gru_kernel, T=T, Bp=Bp, I=I, G=G)

    out = pl.pallas_call(
        kernel,
        out_shape=jax.ShapeDtypeStruct((Bp, G), jnp.float32),
        in_specs=[vmem] * len(args),
        out_specs=vmem,
        scratch_shapes=[pltpu.VMEM((T * Bp, 3 * G), jnp.float32),   # gi0 (hoisted)
                        pltpu.VMEM((T * Bp, G), jnp.float32),       # all h0_t
                        pltpu.VMEM((T * Bp, 3 * G), jnp.float32)],  # gi1 (hoisted)
    )(*args)
    return out[:B, :1]


# --------------------------------------------------------------------------- init / ref


def init_params(key, input_size=INPUT_SIZE, hidden=HIDDEN):
    """Deterministic init mirroring PyTorch's U(-1/sqrt(H), 1/sqrt(H)) scheme."""
    k = 1.0 / jnp.sqrt(jnp.float32(hidden))
    keys = jax.random.split(key, 10)

    def u(rk, shape):
        return jax.random.uniform(rk, shape, jnp.float32, minval=-k, maxval=k)

    return {
        "w_ih0": u(keys[0], (3 * hidden, input_size)),
        "w_hh0": u(keys[1], (3 * hidden, hidden)),
        "b_ih0": u(keys[2], (3 * hidden,)),
        "b_hh0": u(keys[3], (3 * hidden,)),
        "w_ih1": u(keys[4], (3 * hidden, hidden)),
        "w_hh1": u(keys[5], (3 * hidden, hidden)),
        "b_ih1": u(keys[6], (3 * hidden,)),
        "b_hh1": u(keys[7], (3 * hidden,)),
        "w_lin": u(keys[8], (1, hidden)),
        "b_lin": u(keys[9], (1,)),
    }


def _reference_forward(x, params):
    """Pure-JAX float32 reference (lax.scan) replicating torch.nn.GRU + Linear."""
    H = HIDDEN
    B = x.shape[0]

    def cell(x_t, h_prev, wi, wh, bi, bh):
        gi = x_t @ wi.T + bi
        gh = h_prev @ wh.T + bh
        r = jax.nn.sigmoid(gi[:, :H] + gh[:, :H])
        z = jax.nn.sigmoid(gi[:, H:2 * H] + gh[:, H:2 * H])
        n = jnp.tanh(gi[:, 2 * H:] + r * gh[:, 2 * H:])
        return (1.0 - z) * n + z * h_prev

    def step(carry, x_t):
        h0, h1 = carry
        h0 = cell(x_t, h0, params["w_ih0"], params["w_hh0"], params["b_ih0"], params["b_hh0"])
        h1 = cell(h0, h1, params["w_ih1"], params["w_hh1"], params["b_ih1"], params["b_hh1"])
        return (h0, h1), None

    h0 = jnp.zeros((B, H), jnp.float32)
    h1 = jnp.zeros((B, H), jnp.float32)
    (h0, h1), _ = jax.lax.scan(step, (h0, h1), jnp.transpose(x, (1, 0, 2)))
    return h1 @ params["w_lin"].T + params["b_lin"]


if __name__ == "__main__":
    key = jax.random.PRNGKey(0)
    pkey, xkey = jax.random.split(key)

    B, T, I = 2, 8, INPUT_SIZE
    x = jax.random.normal(xkey, (B, T, I), jnp.float32)
    params = init_params(pkey)

    prep = prepare_params(params)          # pre-transpose / pad / fold / bf16-cast ONCE
    fwd = jax.jit(gru_model_forward)

    out = jax.block_until_ready(fwd(x, prep))

    ref = _reference_forward(x, params)
    assert out.shape == (B, 1)
    # Tolerance accounts for bf16 MXU weight/activation quantization (f32 reference);
    # structural bugs would produce O(1e-1) errors, well above this threshold.
    assert jnp.allclose(out, ref, rtol=1e-2, atol=2e-3), (out, ref)

    print("KERNEL_OK")
</pallas_src>

<mosaic_0001>
module attributes {stable_mosaic.version = 11 : i64} {
  func.func @gru_kernel(%arg0: memref<64x1xf32, #tpu.memory_space<vmem>>, %arg1: memref<1x384xf32, #tpu.memory_space<vmem>>, %arg2: memref<1x384xf32, #tpu.memory_space<vmem>>, %arg3: memref<1x128xf32, #tpu.memory_space<vmem>>, %arg4: memref<128x384xbf16, #tpu.memory_space<vmem>>, %arg5: memref<128x384xbf16, #tpu.memory_space<vmem>>, %arg6: memref<1x384xf32, #tpu.memory_space<vmem>>, %arg7: memref<1x128xf32, #tpu.memory_space<vmem>>, %arg8: memref<128x384xbf16, #tpu.memory_space<vmem>>, %arg9: memref<1x128xf32, #tpu.memory_space<vmem>>, %arg10: memref<1x128xf32, #tpu.memory_space<vmem>>, %arg11: memref<8x128xf32, #tpu.memory_space<vmem>>, %arg12: memref<64x384xf32, #tpu.memory_space<vmem>>, %arg13: memref<64x128xf32, #tpu.memory_space<vmem>>, %arg14: memref<64x384xf32, #tpu.memory_space<vmem>>) attributes {dimension_semantics = [], scalar_prefetch = 0 : i64, scratch_operands = 3 : i64, tpu.core_type = #tpu.core_type<tc>} {
    %c0 = arith.constant 0 : index
    %c0_0 = arith.constant 0 : index
    %0 = vector.load %arg0[%c0, %c0_0] : memref<64x1xf32, #tpu.memory_space<vmem>>, vector<64x1xf32>
    %c0_1 = arith.constant 0 : index
    %c0_2 = arith.constant 0 : index
    %1 = vector.load %arg1[%c0_1, %c0_2] : memref<1x384xf32, #tpu.memory_space<vmem>>, vector<1x384xf32>
    %2 = vector.broadcast %0 : vector<64x1xf32> to vector<64x384xf32>
    %3 = vector.broadcast %1 : vector<1x384xf32> to vector<64x384xf32>
    %4 = arith.mulf %2, %3 : vector<64x384xf32>
    %c0_3 = arith.constant 0 : index
    %c0_4 = arith.constant 0 : index
    %5 = vector.load %arg2[%c0_3, %c0_4] : memref<1x384xf32, #tpu.memory_space<vmem>>, vector<1x384xf32>
    %6 = vector.broadcast %5 : vector<1x384xf32> to vector<64x384xf32>
    %7 = arith.addf %4, %6 : vector<64x384xf32>
    %c0_5 = arith.constant 0 : index
    %c0_6 = arith.constant 0 : index
    %8 = vector.load %arg12[%c0_5, %c0_6] : memref<64x384xf32, #tpu.memory_space<vmem>>, vector<64x384xf32>
    tpu.vector_store %arg12[%c0_5, %c0_6], %7 {strides = array<i32>} : memref<64x384xf32, #tpu.memory_space<vmem>>, vector<64x384xf32>,
    %c0_7 = arith.constant 0 : index
    %c0_8 = arith.constant 0 : index
    %9 = vector.load %arg12[%c0_7, %c0_8] : memref<64x384xf32, #tpu.memory_space<vmem>>, vector<8x384xf32>
    %c0_9 = arith.constant 0 : index
    %c0_10 = arith.constant 0 : index
    %10 = vector.load %arg3[%c0_9, %c0_10] : memref<1x128xf32, #tpu.memory_space<vmem>>, vector<1x128xf32>
    %cst = arith.constant 0.000000e+00 : f32
    %11 = vector.broadcast %cst : f32 to vector<8x128xf32>
    %12 = vector.extract_strided_slice %9 {offsets = [0, 0], sizes = [8, 256], strides = [1, 1]} : vector<8x384xf32> to vector<8x256xf32>
    %13 = arith.negf %12 : vector<8x256xf32>
    %14 = math.exp %13 : vector<8x256xf32>
    %cst_11 = arith.constant 1.000000e+00 : f32
    %15 = vector.broadcast %cst_11 : f32 to vector<8x256xf32>
    %16 = arith.addf %15, %14 : vector<8x256xf32>
    %17 = arith.divf %15, %16 : vector<8x256xf32>
    %18 = vector.extract_strided_slice %9 {offsets = [0, 256], sizes = [8, 128], strides = [1, 1]} : vector<8x384xf32> to vector<8x128xf32>
    %19 = vector.extract_strided_slice %17 {offsets = [0, 0], sizes = [8, 128], strides = [1, 1]} : vector<8x256xf32> to vector<8x128xf32>
    %20 = vector.broadcast %10 : vector<1x128xf32> to vector<8x128xf32>
    %21 = arith.mulf %19, %20 : vector<8x128xf32>
    %22 = arith.addf %18, %21 : vector<8x128xf32>
    %23 = math.tanh %22 : vector<8x128xf32>
    %24 = vector.extract_strided_slice %17 {offsets = [0, 128], sizes = [8, 128], strides = [1, 1]} : vector<8x256xf32> to vector<8x128xf32>
    %25 = arith.subf %11, %23 : vector<8x128xf32>
    %26 = arith.mulf %24, %25 : vector<8x128xf32>
    %27 = arith.addf %23, %26 : vector<8x128xf32>
    %c0_12 = arith.constant 0 : index
    %c0_13 = arith.constant 0 : index
    %28 = vector.load %arg13[%c0_12, %c0_13] : memref<64x128xf32, #tpu.memory_space<vmem>>, vector<8x128xf32>
    tpu.vector_store %arg13[%c0_12, %c0_13], %27 {strides = array<i32>} : memref<64x128xf32, #tpu.memory_space<vmem>>, vector<8x128xf32>,
    %c1_i32 = arith.constant 1 : i32
    %c8_i32 = arith.constant 8 : i32
    %29 = arith.muli %c1_i32, %c8_i32 : i32
    %30 = tpu.assume_multiple %29, 8 : i32
    %31 = arith.index_cast %30 : i32 to index
    %c0_14 = arith.constant 0 : index
    %32 = vector.load %arg12[%31, %c0_14] : memref<64x384xf32, #tpu.memory_space<vmem>>, vector<8x384xf32>
    %33 = arith.truncf %27 : vector<8x128xf32> to vector<8x128xbf16>
    %c0_15 = arith.constant 0 : index
    %c0_16 = arith.constant 0 : index
    %34 = vector.load %arg4[%c0_15, %c0_16] : memref<128x384xbf16, #tpu.memory_space<vmem>>, vector<128x384xbf16>
    %cst_17 = arith.constant dense<0.000000e+00> : vector<8x384xf32>
    %35 = tpu.matmul %33, %34, %cst_17 {dimension_numbers = #tpu.dot_dimension_numbers<[1], [0], [0], [1], [0, 0, 1, 1], [], []>} : vector<8x128xbf16>, vector<128x384xbf16>, vector<8x384xf32> -> vector<8x384xf32>
    %c0_18 = arith.constant 0 : index
    %c0_19 = arith.constant 0 : index
    %36 = vector.load %arg3[%c0_18, %c0_19] : memref<1x128xf32, #tpu.memory_space<vmem>>, vector<1x128xf32>
    %37 = vector.extract_strided_slice %32 {offsets = [0, 0], sizes = [8, 256], strides = [1, 1]} : vector<8x384xf32> to vector<8x256xf32>
    %38 = vector.extract_strided_slice %35 {offsets = [0, 0], sizes = [8, 256], strides = [1, 1]} : vector<8x384xf32> to vector<8x256xf32>
    %39 = arith.addf %37, %38 : vector<8x256xf32>
    %40 = arith.negf %39 : vector<8x256xf32>
    %41 = math.exp %40 : vector<8x256xf32>
    %cst_20 = arith.constant 1.000000e+00 : f32
    %42 = vector.broadcast %cst_20 : f32 to vector<8x256xf32>
    %43 = arith.addf %42, %41 : vector<8x256xf32>
    %44 = arith.divf %42, %43 : vector<8x256xf32>
    %45 = vector.extract_strided_slice %32 {offsets = [0, 256], sizes = [8, 128], strides = [1, 1]} : vector<8x384xf32> to vector<8x128xf32>
    %46 = vector.extract_strided_slice %44 {offsets = [0, 0], sizes = [8, 128], strides = [1, 1]} : vector<8x256xf32> to vector<8x128xf32>
    %47 = vector.extract_strided_slice %35 {offsets = [0, 256], sizes = [8, 128], strides = [1, 1]} : vector<8x384xf32> to vector<8x128xf32>
    %48 = vector.broadcast %36 : vector<1x128xf32> to vector<8x128xf32>
    %49 = arith.addf %47, %48 : vector<8x128xf32>
    %50 = arith.mulf %46, %49 : vector<8x128xf32>
    %51 = arith.addf %45, %50 : vector<8x128xf32>
    %52 = math.tanh %51 : vector<8x128xf32>
    %53 = vector.extract_strided_slice %44 {offsets = [0, 128], sizes = [8, 128], strides = [1, 1]} : vector<8x256xf32> to vector<8x128xf32>
    %54 = arith.subf %27, %52 : vector<8x128xf32>
    %55 = arith.mulf %53, %54 : vector<8x128xf32>
    %56 = arith.addf %52, %55 : vector<8x128xf32>
    %57 = arith.index_cast %30 : i32 to index
    %c0_21 = arith.constant 0 : index
    %58 = vector.load %arg13[%57, %c0_21] : memref<64x128xf32, #tpu.memory_space<vmem>>, vector<8x128xf32>
    tpu.vector_store %arg13[%57, %c0_21], %56 {strides = array<i32>} : memref<64x128xf32, #tpu.memory_space<vmem>>, vector<8x128xf32>,
    %c2_i32 = arith.constant 2 : i32
    %c8_i32_22 = arith.constant 8 : i32
    %59 = arith.muli %c2_i32, %c8_i32_22 : i32
    %60 = tpu.assume_multiple %59, 8 : i32
    %61 = arith.index_cast %60 : i32 to index
    %c0_23 = arith.constant 0 : index
    %62 = vector.load %arg12[%61, %c0_23] : memref<64x384xf32, #tpu.memory_space<vmem>>, vector<8x384xf32>
    %63 = arith.truncf %56 : vector<8x128xf32> to vector<8x128xbf16>
    %c0_24 = arith.constant 0 : index
    %c0_25 = arith.constant 0 : index
    %64 = vector.load %arg4[%c0_24, %c0_25] : memref<128x384xbf16, #tpu.memory_space<vmem>>, vector<128x384xbf16>
    %cst_26 = arith.constant dense<0.000000e+00> : vector<8x384xf32>
    %65 = tpu.matmul %63, %64, %cst_26 {dimension_numbers = #tpu.dot_dimension_numbers<[1], [0], [0], [1], [0, 0, 1, 1], [], []>} : vector<8x128xbf16>, vector<128x384xbf16>, vector<8x384xf32> -> vector<8x384xf32>
    %c0_27 = arith.constant 0 : index
    %c0_28 = arith.constant 0 : index
    %66 = vector.load %arg3[%c0_27, %c0_28] : memref<1x128xf32, #tpu.memory_space<vmem>>, vector<1x128xf32>
    %67 = vector.extract_strided_slice %62 {offsets = [0, 0], sizes = [8, 256], strides = [1, 1]} : vector<8x384xf32> to vector<8x256xf32>
    %68 = vector.extract_strided_slice %65 {offsets = [0, 0], sizes = [8, 256], strides = [1, 1]} : vector<8x384xf32> to vector<8x256xf32>
    %69 = arith.addf %67, %68 : vector<8x256xf32>
    %70 = arith.negf %69 : vector<8x256xf32>
    %71 = math.exp %70 : vector<8x256xf32>
    %cst_29 = arith.constant 1.000000e+00 : f32
    %72 = vector.broadcast %cst_29 : f32 to vector<8x256xf32>
    %73 = arith.addf %72, %71 : vector<8x256xf32>
    %74 = arith.divf %72, %73 : vector<8x256xf32>
    %75 = vector.extract_strided_slice %62 {offsets = [0, 256], sizes = [8, 128], strides = [1, 1]} : vector<8x384xf32> to vector<8x128xf32>
    %76 = vector.extract_strided_slice %74 {offsets = [0, 0], sizes = [8, 128], strides = [1, 1]} : vector<8x256xf32> to vector<8x128xf32>
    %77 = vector.extract_strided_slice %65 {offsets = [0, 256], sizes = [8, 128], strides = [1, 1]} : vector<8x384xf32> to vector<8x128xf32>
    %78 = vector.broadcast %66 : vector<1x128xf32> to vector<8x128xf32>
    %79 = arith.addf %77, %78 : vector<8x128xf32>
    %80 = arith.mulf %76, %79 : vector<8x128xf32>
    %81 = arith.addf %75, %80 : vector<8x128xf32>
    %82 = math.tanh %81 : vector<8x128xf32>
    %83 = vector.extract_strided_slice %74 {offsets = [0, 128], sizes = [8, 128], strides = [1, 1]} : vector<8x256xf32> to vector<8x128xf32>
    %84 = arith.subf %56, %82 : vector<8x128xf32>
    %85 = arith.mulf %83, %84 : vector<8x128xf32>
    %86 = arith.addf %82, %85 : vector<8x128xf32>
    %87 = arith.index_cast %60 : i32 to index
    %c0_30 = arith.constant 0 : index
    %88 = vector.load %arg13[%87, %c0_30] : memref<64x128xf32, #tpu.memory_space<vmem>>, vector<8x128xf32>
    tpu.vector_store %arg13[%87, %c0_30], %86 {strides = array<i32>} : memref<64x128xf32, #tpu.memory_space<vmem>>, vector<8x128xf32>,
    %c3_i32 = arith.constant 3 : i32
    %c8_i32_31 = arith.constant 8 : i32
    %89 = arith.muli %c3_i32, %c8_i32_31 : i32
    %90 = tpu.assume_multiple %89, 8 : i32
    %91 = arith.index_cast %90 : i32 to index
    %c0_32 = arith.constant 0 : index
    %92 = vector.load %arg12[%91, %c0_32] : memref<64x384xf32, #tpu.memory_space<vmem>>, vector<8x384xf32>
    %93 = arith.truncf %86 : vector<8x128xf32> to vector<8x128xbf16>
    %c0_33 = arith.constant 0 : index
    %c0_34 = arith.constant 0 : index
    %94 = vector.load %arg4[%c0_33, %c0_34] : memref<128x384xbf16, #tpu.memory_space<vmem>>, vector<128x384xbf16>
    %cst_35 = arith.constant dense<0.000000e+00> : vector<8x384xf32>
    %95 = tpu.matmul %93, %94, %cst_35 {dimension_numbers = #tpu.dot_dimension_numbers<[1], [0], [0], [1], [0, 0, 1, 1], [], []>} : vector<8x128xbf16>, vector<128x384xbf16>, vector<8x384xf32> -> vector<8x384xf32>
    %c0_36 = arith.constant 0 : index
    %c0_37 = arith.constant 0 : index
    %96 = vector.load %arg3[%c0_36, %c0_37] : memref<1x128xf32, #tpu.memory_space<vmem>>, vector<1x128xf32>
    %97 = vector.extract_strided_slice %92 {offsets = [0, 0], sizes = [8, 256], strides = [1, 1]} : vector<8x384xf32> to vector<8x256xf32>
    %98 = vector.extract_strided_slice %95 {offsets = [0, 0], sizes = [8, 256], strides = [1, 1]} : vector<8x384xf32> to vector<8x256xf32>
    %99 = arith.addf %97, %98 : vector<8x256xf32>
    %100 = arith.negf %99 : vector<8x256xf32>
    %101 = math.exp %100 : vector<8x256xf32>
    %cst_38 = arith.constant 1.000000e+00 : f32
    %102 = vector.broadcast %cst_38 : f32 to vector<8x256xf32>
    %103 = arith.addf %102, %101 : vector<8x256xf32>
    %104 = arith.divf %102, %103 : vector<8x256xf32>
    %105 = vector.extract_strided_slice %92 {offsets = [0, 256], sizes = [8, 128], strides = [1, 1]} : vector<8x384xf32> to vector<8x128xf32>
    %106 = vector.extract_strided_slice %104 {offsets = [0, 0], sizes = [8, 128], strides = [1, 1]} : vector<8x256xf32> to vector<8x128xf32>
    %107 = vector.extract_strided_slice %95 {offsets = [0, 256], sizes = [8, 128], strides = [1, 1]} : vector<8x384xf32> to vector<8x128xf32>
    %108 = vector.broadcast %96 : vector<1x128xf32> to vector<8x128xf32>
    %109 = arith.addf %107, %108 : vector<8x128xf32>
    %110 = arith.mulf %106, %109 : vector<8x128xf32>
    %111 = arith.addf %105, %110 : vector<8x128xf32>
    %112 = math.tanh %111 : vector<8x128xf32>
    %113 = vector.extract_strided_slice %104 {offsets = [0, 128], sizes = [8, 128], strides = [1, 1]} : vector<8x256xf32> to vector<8x128xf32>
    %114 = arith.subf %86, %112 : vector<8x128xf32>
    %115 = arith.mulf %113, %114 : vector<8x128xf32>
    %116 = arith.addf %112, %115 : vector<8x128xf32>
    %117 = arith.index_cast %90 : i32 to index
    %c0_39 = arith.constant 0 : index
    %118 = vector.load %arg13[%117, %c0_39] : memref<64x128xf32, #tpu.memory_space<vmem>>, vector<8x128xf32>
    tpu.vector_store %arg13[%117, %c0_39], %116 {strides = array<i32>} : memref<64x128xf32, #tpu.memory_space<vmem>>, vector<8x128xf32>,
    %c4_i32 = arith.constant 4 : i32
    %c8_i32_40 = arith.constant 8 : i32
    %119 = arith.muli %c4_i32, %c8_i32_40 : i32
    %120 = tpu.assume_multiple %119, 8 : i32
    %121 = arith.index_cast %120 : i32 to index
    %c0_41 = arith.constant 0 : index
    %122 = vector.load %arg12[%121, %c0_41] : memref<64x384xf32, #tpu.memory_space<vmem>>, vector<8x384xf32>
    %123 = arith.truncf %116 : vector<8x128xf32> to vector<8x128xbf16>
    %c0_42 = arith.constant 0 : index
    %c0_43 = arith.constant 0 : index
    %124 = vector.load %arg4[%c0_42, %c0_43] : memref<128x384xbf16, #tpu.memory_space<vmem>>, vector<128x384xbf16>
    %cst_44 = arith.constant dense<0.000000e+00> : vector<8x384xf32>
    %125 = tpu.matmul %123, %124, %cst_44 {dimension_numbers = #tpu.dot_dimension_numbers<[1], [0], [0], [1], [0, 0, 1, 1], [], []>} : vector<8x128xbf16>, vector<128x384xbf16>, vector<8x384xf32> -> vector<8x384xf32>
    %c0_45 = arith.constant 0 : index
    %c0_46 = arith.constant 0 : index
    %126 = vector.load %arg3[%c0_45, %c0_46] : memref<1x128xf32, #tpu.memory_space<vmem>>, vector<1x128xf32>
    %127 = vector.extract_strided_slice %122 {offsets = [0, 0], sizes = [8, 256], strides = [1, 1]} : vector<8x384xf32> to vector<8x256xf32>
    %128 = vector.extract_strided_slice %125 {offsets = [0, 0], sizes = [8, 256], strides = [1, 1]} : vector<8x384xf32> to vector<8x256xf32>
    %129 = arith.addf %127, %128 : vector<8x256xf32>
    %130 = arith.negf %129 : vector<8x256xf32>
    %131 = math.exp %130 : vector<8x256xf32>
    %cst_47 = arith.constant 1.000000e+00 : f32
    %132 = vector.broadcast %cst_47 : f32 to vector<8x256xf32>
    %133 = arith.addf %132, %131 : vector<8x256xf32>
    %134 = arith.divf %132, %133 : vector<8x256xf32>
    %135 = vector.extract_strided_slice %122 {offsets = [0, 256], sizes = [8, 128], strides = [1, 1]} : vector<8x384xf32> to vector<8x128xf32>
    %136 = vector.extract_strided_slice %134 {offsets = [0, 0], sizes = [8, 128], strides = [1, 1]} : vector<8x256xf32> to vector<8x128xf32>
    %137 = vector.extract_strided_slice %125 {offsets = [0, 256], sizes = [8, 128], strides = [1, 1]} : vector<8x384xf32> to vector<8x128xf32>
    %138 = vector.broadcast %126 : vector<1x128xf32> to vector<8x128xf32>
    %139 = arith.addf %137, %138 : vector<8x128xf32>
    %140 = arith.mulf %136, %139 : vector<8x128xf32>
    %141 = arith.addf %135, %140 : vector<8x128xf32>
    %142 = math.tanh %141 : vector<8x128xf32>
    %143 = vector.extract_strided_slice %134 {offsets = [0, 128], sizes = [8, 128], strides = [1, 1]} : vector<8x256xf32> to vector<8x128xf32>
    %144 = arith.subf %116, %142 : vector<8x128xf32>
    %145 = arith.mulf %143, %144 : vector<8x128xf32>
    %146 = arith.addf %142, %145 : vector<8x128xf32>
    %147 = arith.index_cast %120 : i32 to index
    %c0_48 = arith.constant 0 : index
    %148 = vector.load %arg13[%147, %c0_48] : memref<64x128xf32, #tpu.memory_space<vmem>>, vector<8x128xf32>
    tpu.vector_store %arg13[%147, %c0_48], %146 {strides = array<i32>} : memref<64x128xf32, #tpu.memory_space<vmem>>, vector<8x128xf32>,
    %c5_i32 = arith.constant 5 : i32
    %c8_i32_49 = arith.constant 8 : i32
    %149 = arith.muli %c5_i32, %c8_i32_49 : i32
    %150 = tpu.assume_multiple %149, 8 : i32
    %151 = arith.index_cast %150 : i32 to index
    %c0_50 = arith.constant 0 : index
    %152 = vector.load %arg12[%151, %c0_50] : memref<64x384xf32, #tpu.memory_space<vmem>>, vector<8x384xf32>
    %153 = arith.truncf %146 : vector<8x128xf32> to vector<8x128xbf16>
    %c0_51 = arith.constant 0 : index
    %c0_52 = arith.constant 0 : index
    %154 = vector.load %arg4[%c0_51, %c0_52] : memref<128x384xbf16, #tpu.memory_space<vmem>>, vector<128x384xbf16>
    %cst_53 = arith.constant dense<0.000000e+00> : vector<8x384xf32>
    %155 = tpu.matmul %153, %154, %cst_53 {dimension_numbers = #tpu.dot_dimension_numbers<[1], [0], [0], [1], [0, 0, 1, 1], [], []>} : vector<8x128xbf16>, vector<128x384xbf16>, vector<8x384xf32> -> vector<8x384xf32>
    %c0_54 = arith.constant 0 : index
    %c0_55 = arith.constant 0 : index
    %156 = vector.load %arg3[%c0_54, %c0_55] : memref<1x128xf32, #tpu.memory_space<vmem>>, vector<1x128xf32>
    %157 = vector.extract_strided_slice %152 {offsets = [0, 0], sizes = [8, 256], strides = [1, 1]} : vector<8x384xf32> to vector<8x256xf32>
    %158 = vector.extract_strided_slice %155 {offsets = [0, 0], sizes = [8, 256], strides = [1, 1]} : vector<8x384xf32> to vector<8x256xf32>
    %159 = arith.addf %157, %158 : vector<8x256xf32>
    %160 = arith.negf %159 : vector<8x256xf32>
    %161 = math.exp %160 : vector<8x256xf32>
    %cst_56 = arith.constant 1.000000e+00 : f32
    %162 = vector.broadcast %cst_56 : f32 to vector<8x256xf32>
    %163 = arith.addf %162, %161 : vector<8x256xf32>
    %164 = arith.divf %162, %163 : vector<8x256xf32>
    %165 = vector.extract_strided_slice %152 {offsets = [0, 256], sizes = [8, 128], strides = [1, 1]} : vector<8x384xf32> to vector<8x128xf32>
    %166 = vector.extract_strided_slice %164 {offsets = [0, 0], sizes = [8, 128], strides = [1, 1]} : vector<8x256xf32> to vector<8x128xf32>
    %167 = vector.extract_strided_slice %155 {offsets = [0, 256], sizes = [8, 128], strides = [1, 1]} : vector<8x384xf32> to vector<8x128xf32>
    %168 = vector.broadcast %156 : vector<1x128xf32> to vector<8x128xf32>
    %169 = arith.addf %167, %168 : vector<8x128xf32>
    %170 = arith.mulf %166, %169 : vector<8x128xf32>
    %171 = arith.addf %165, %170 : vector<8x128xf32>
    %172 = math.tanh %171 : vector<8x128xf32>
    %173 = vector.extract_strided_slice %164 {offsets = [0, 128], sizes = [8, 128], strides = [1, 1]} : vector<8x256xf32> to vector<8x128xf32>
    %174 = arith.subf %146, %172 : vector<8x128xf32>
    %175 = arith.mulf %173, %174 : vector<8x128xf32>
    %176 = arith.addf %172, %175 : vector<8x128xf32>
    %177 = arith.index_cast %150 : i32 to index
    %c0_57 = arith.constant 0 : index
    %178 = vector.load %arg13[%177, %c0_57] : memref<64x128xf32, #tpu.memory_space<vmem>>, vector<8x128xf32>
    tpu.vector_store %arg13[%177, %c0_57], %176 {strides = array<i32>} : memref<64x128xf32, #tpu.memory_space<vmem>>, vector<8x128xf32>,
    %c6_i32 = arith.constant 6 : i32
    %c8_i32_58 = arith.constant 8 : i32
    %179 = arith.muli %c6_i32, %c8_i32_58 : i32
    %180 = tpu.assume_multiple %179, 8 : i32
    %181 = arith.index_cast %180 : i32 to index
    %c0_59 = arith.constant 0 : index
    %182 = vector.load %arg12[%181, %c0_59] : memref<64x384xf32, #tpu.memory_space<vmem>>, vector<8x384xf32>
    %183 = arith.truncf %176 : vector<8x128xf32> to vector<8x128xbf16>
    %c0_60 = arith.constant 0 : index
    %c0_61 = arith.constant 0 : index
    %184 = vector.load %arg4[%c0_60, %c0_61] : memref<128x384xbf16, #tpu.memory_space<vmem>>, vector<128x384xbf16>
    %cst_62 = arith.constant dense<0.000000e+00> : vector<8x384xf32>
    %185 = tpu.matmul %183, %184, %cst_62 {dimension_numbers = #tpu.dot_dimension_numbers<[1], [0], [0], [1], [0, 0, 1, 1], [], []>} : vector<8x128xbf16>, vector<128x384xbf16>, vector<8x384xf32> -> vector<8x384xf32>
    %c0_63 = arith.constant 0 : index
    %c0_64 = arith.constant 0 : index
    %186 = vector.load %arg3[%c0_63, %c0_64] : memref<1x128xf32, #tpu.memory_space<vmem>>, vector<1x128xf32>
    %187 = vector.extract_strided_slice %182 {offsets = [0, 0], sizes = [8, 256], strides = [1, 1]} : vector<8x384xf32> to vector<8x256xf32>
    %188 = vector.extract_strided_slice %185 {offsets = [0, 0], sizes = [8, 256], strides = [1, 1]} : vector<8x384xf32> to vector<8x256xf32>
    %189 = arith.addf %187, %188 : vector<8x256xf32>
    %190 = arith.negf %189 : vector<8x256xf32>
    %191 = math.exp %190 : vector<8x256xf32>
    %cst_65 = arith.constant 1.000000e+00 : f32
    %192 = vector.broadcast %cst_65 : f32 to vector<8x256xf32>
    %193 = arith.addf %192, %191 : vector<8x256xf32>
    %194 = arith.divf %192, %193 : vector<8x256xf32>
    %195 = vector.extract_strided_slice %182 {offsets = [0, 256], sizes = [8, 128], strides = [1, 1]} : vector<8x384xf32> to vector<8x128xf32>
    %196 = vector.extract_strided_slice %194 {offsets = [0, 0], sizes = [8, 128], strides = [1, 1]} : vector<8x256xf32> to vector<8x128xf32>
    %197 = vector.extract_strided_slice %185 {offsets = [0, 256], sizes = [8, 128], strides = [1, 1]} : vector<8x384xf32> to vector<8x128xf32>
    %198 = vector.broadcast %186 : vector<1x128xf32> to vector<8x128xf32>
    %199 = arith.addf %197, %198 : vector<8x128xf32>
    %200 = arith.mulf %196, %199 : vector<8x128xf32>
    %201 = arith.addf %195, %200 : vector<8x128xf32>
    %202 = math.tanh %201 : vector<8x128xf32>
    %203 = vector.extract_strided_slice %194 {offsets = [0, 128], sizes = [8, 128], strides = [1, 1]} : vector<8x256xf32> to vector<8x128xf32>
    %204 = arith.subf %176, %202 : vector<8x128xf32>
    %205 = arith.mulf %203, %204 : vector<8x128xf32>
    %206 = arith.addf %202, %205 : vector<8x128xf32>
    %207 = arith.index_cast %180 : i32 to index
    %c0_66 = arith.constant 0 : index
    %208 = vector.load %arg13[%207, %c0_66] : memref<64x128xf32, #tpu.memory_space<vmem>>, vector<8x128xf32>
    tpu.vector_store %arg13[%207, %c0_66], %206 {strides = array<i32>} : memref<64x128xf32, #tpu.memory_space<vmem>>, vector<8x128xf32>,
    %c7_i32 = arith.constant 7 : i32
    %c8_i32_67 = arith.constant 8 : i32
    %209 = arith.muli %c7_i32, %c8_i32_67 : i32
    %210 = tpu.assume_multiple %209, 8 : i32
    %211 = arith.index_cast %210 : i32 to index
    %c0_68 = arith.constant 0 : index
    %212 = vector.load %arg12[%211, %c0_68] : memref<64x384xf32, #tpu.memory_space<vmem>>, vector<8x384xf32>
    %213 = arith.truncf %206 : vector<8x128xf32> to vector<8x128xbf16>
    %c0_69 = arith.constant 0 : index
    %c0_70 = arith.constant 0 : index
    %214 = vector.load %arg4[%c0_69, %c0_70] : memref<128x384xbf16, #tpu.memory_space<vmem>>, vector<128x384xbf16>
    %cst_71 = arith.constant dense<0.000000e+00> : vector<8x384xf32>
    %215 = tpu.matmul %213, %214, %cst_71 {dimension_numbers = #tpu.dot_dimension_numbers<[1], [0], [0], [1], [0, 0, 1, 1], [], []>} : vector<8x128xbf16>, vector<128x384xbf16>, vector<8x384xf32> -> vector<8x384xf32>
    %c0_72 = arith.constant 0 : index
    %c0_73 = arith.constant 0 : index
    %216 = vector.load %arg3[%c0_72, %c0_73] : memref<1x128xf32, #tpu.memory_space<vmem>>, vector<1x128xf32>
    %217 = vector.extract_strided_slice %212 {offsets = [0, 0], sizes = [8, 256], strides = [1, 1]} : vector<8x384xf32> to vector<8x256xf32>
    %218 = vector.extract_strided_slice %215 {offsets = [0, 0], sizes = [8, 256], strides = [1, 1]} : vector<8x384xf32> to vector<8x256xf32>
    %219 = arith.addf %217, %218 : vector<8x256xf32>
    %220 = arith.negf %219 : vector<8x256xf32>
    %221 = math.exp %220 : vector<8x256xf32>
    %cst_74 = arith.constant 1.000000e+00 : f32
    %222 = vector.broadcast %cst_74 : f32 to vector<8x256xf32>
    %223 = arith.addf %222, %221 : vector<8x256xf32>
    %224 = arith.divf %222, %223 : vector<8x256xf32>
    %225 = vector.extract_strided_slice %212 {offsets = [0, 256], sizes = [8, 128], strides = [1, 1]} : vector<8x384xf32> to vector<8x128xf32>
    %226 = vector.extract_strided_slice %224 {offsets = [0, 0], sizes = [8, 128], strides = [1, 1]} : vector<8x256xf32> to vector<8x128xf32>
    %227 = vector.extract_strided_slice %215 {offsets = [0, 256], sizes = [8, 128], strides = [1, 1]} : vector<8x384xf32> to vector<8x128xf32>
    %228 = vector.broadcast %216 : vector<1x128xf32> to vector<8x128xf32>
    %229 = arith.addf %227, %228 : vector<8x128xf32>
    %230 = arith.mulf %226, %229 : vector<8x128xf32>
    %231 = arith.addf %225, %230 : vector<8x128xf32>
    %232 = math.tanh %231 : vector<8x128xf32>
    %233 = vector.extract_strided_slice %224 {offsets = [0, 128], sizes = [8, 128], strides = [1, 1]} : vector<8x256xf32> to vector<8x128xf32>
    %234 = arith.subf %206, %232 : vector<8x128xf32>
    %235 = arith.mulf %233, %234 : vector<8x128xf32>
    %236 = arith.addf %232, %235 : vector<8x128xf32>
    %237 = arith.index_cast %210 : i32 to index
    %c0_75 = arith.constant 0 : index
    %238 = vector.load %arg13[%237, %c0_75] : memref<64x128xf32, #tpu.memory_space<vmem>>, vector<8x128xf32>
    tpu.vector_store %arg13[%237, %c0_75], %236 {strides = array<i32>} : memref<64x128xf32, #tpu.memory_space<vmem>>, vector<8x128xf32>,
    %c7_i32_76 = arith.constant 7 : i32
    %c0_77 = arith.constant 0 : index
    %c0_78 = arith.constant 0 : index
    %239 = vector.load %arg13[%c0_77, %c0_78] : memref<64x128xf32, #tpu.memory_space<vmem>>, vector<64x128xf32>
    %240 = arith.truncf %239 : vector<64x128xf32> to vector<64x128xbf16>
    %c0_79 = arith.constant 0 : index
    %c0_80 = arith.constant 0 : index
    %241 = vector.load %arg5[%c0_79, %c0_80] : memref<128x384xbf16, #tpu.memory_space<vmem>>, vector<128x384xbf16>
    %cst_81 = arith.constant dense<0.000000e+00> : vector<64x384xf32>
    %242 = tpu.matmul %240, %241, %cst_81 {dimension_numbers = #tpu.dot_dimension_numbers<[1], [0], [0], [1], [0, 0, 1, 1], [], []>} : vector<64x128xbf16>, vector<128x384xbf16>, vector<64x384xf32> -> vector<64x384xf32>
    %c0_82 = arith.constant 0 : index
    %c0_83 = arith.constant 0 : index
    %243 = vector.load %arg6[%c0_82, %c0_83] : memref<1x384xf32, #tpu.memory_space<vmem>>, vector<1x384xf32>
    %244 = vector.broadcast %243 : vector<1x384xf32> to vector<64x384xf32>
    %245 = arith.addf %242, %244 : vector<64x384xf32>
    %c0_84 = arith.constant 0 : index
    %c0_85 = arith.constant 0 : index
    %246 = vector.load %arg14[%c0_84, %c0_85] : memref<64x384xf32, #tpu.memory_space<vmem>>, vector<64x384xf32>
    tpu.vector_store %arg14[%c0_84, %c0_85], %245 {strides = array<i32>} : memref<64x384xf32, #tpu.memory_space<vmem>>, vector<64x384xf32>,
    %c0_86 = arith.constant 0 : index
    %c0_87 = arith.constant 0 : index
    %247 = vector.load %arg14[%c0_86, %c0_87] : memref<64x384xf32, #tpu.memory_space<vmem>>, vector<8x384xf32>
    %c0_88 = arith.constant 0 : index
    %c0_89 = arith.constant 0 : index
    %248 = vector.load %arg7[%c0_88, %c0_89] : memref<1x128xf32, #tpu.memory_space<vmem>>, vector<1x128xf32>
    %cst_90 = arith.constant 0.000000e+00 : f32
    %249 = vector.broadcast %cst_90 : f32 to vector<8x128xf32>
    %250 = vector.extract_strided_slice %247 {offsets = [0, 0], sizes = [8, 256], strides = [1, 1]} : vector<8x384xf32> to vector<8x256xf32>
    %251 = arith.negf %250 : vector<8x256xf32>
    %252 = math.exp %251 : vector<8x256xf32>
    %cst_91 = arith.constant 1.000000e+00 : f32
    %253 = vector.broadcast %cst_91 : f32 to vector<8x256xf32>
    %254 = arith.addf %253, %252 : vector<8x256xf32>
    %255 = arith.divf %253, %254 : vector<8x256xf32>
    %256 = vector.extract_strided_slice %247 {offsets = [0, 256], sizes = [8, 128], strides = [1, 1]} : vector<8x384xf32> to vector<8x128xf32>
    %257 = vector.extract_strided_slice %255 {offsets = [0, 0], sizes = [8, 128], strides = [1, 1]} : vector<8x256xf32> to vector<8x128xf32>
    %258 = vector.broadcast %248 : vector<1x128xf32> to vector<8x128xf32>
    %259 = arith.mulf %257, %258 : vector<8x128xf32>
    %260 = arith.addf %256, %259 : vector<8x128xf32>
    %261 = math.tanh %260 : vector<8x128xf32>
    %262 = vector.extract_strided_slice %255 {offsets = [0, 128], sizes = [8, 128], strides = [1, 1]} : vector<8x256xf32> to vector<8x128xf32>
    %263 = arith.subf %249, %261 : vector<8x128xf32>
    %264 = arith.mulf %262, %263 : vector<8x128xf32>
    %265 = arith.addf %261, %264 : vector<8x128xf32>
    %c1_i32_92 = arith.constant 1 : i32
    %c8_i32_93 = arith.constant 8 : i32
    %266 = arith.muli %c1_i32_92, %c8_i32_93 : i32
    %267 = tpu.assume_multiple %266, 8 : i32
    %268 = arith.index_cast %267 : i32 to index
    %c0_94 = arith.constant 0 : index
    %269 = vector.load %arg14[%268, %c0_94] : memref<64x384xf32, #tpu.memory_space<vmem>>, vector<8x384xf32>
    %270 = arith.truncf %265 : vector<8x128xf32> to vector<8x128xbf16>
    %c0_95 = arith.constant 0 : index
    %c0_96 = arith.constant 0 : index
    %271 = vector.load %arg8[%c0_95, %c0_96] : memref<128x384xbf16, #tpu.memory_space<vmem>>, vector<128x384xbf16>
    %cst_97 = arith.constant dense<0.000000e+00> : vector<8x384xf32>
    %272 = tpu.matmul %270, %271, %cst_97 {dimension_numbers = #tpu.dot_dimension_numbers<[1], [0], [0], [1], [0, 0, 1, 1], [], []>} : vector<8x128xbf16>, vector<128x384xbf16>, vector<8x384xf32> -> vector<8x384xf32>
    %c0_98 = arith.constant 0 : index
    %c0_99 = arith.constant 0 : index
    %273 = vector.load %arg7[%c0_98, %c0_99] : memref<1x128xf32, #tpu.memory_space<vmem>>, vector<1x128xf32>
    %274 = vector.extract_strided_slice %269 {offsets = [0, 0], sizes = [8, 256], strides = [1, 1]} : vector<8x384xf32> to vector<8x256xf32>
    %275 = vector.extract_strided_slice %272 {offsets = [0, 0], sizes = [8, 256], strides = [1, 1]} : vector<8x384xf32> to vector<8x256xf32>
    %276 = arith.addf %274, %275 : vector<8x256xf32>
    %277 = arith.negf %276 : vector<8x256xf32>
    %278 = math.exp %277 : vector<8x256xf32>
    %cst_100 = arith.constant 1.000000e+00 : f32
    %279 = vector.broadcast %cst_100 : f32 to vector<8x256xf32>
    %280 = arith.addf %279, %278 : vector<8x256xf32>
    %281 = arith.divf %279, %280 : vector<8x256xf32>
    %282 = vector.extract_strided_slice %269 {offsets = [0, 256], sizes = [8, 128], strides = [1, 1]} : vector<8x384xf32> to vector<8x128xf32>
    %283 = vector.extract_strided_slice %281 {offsets = [0, 0], sizes = [8, 128], strides = [1, 1]} : vector<8x256xf32> to vector<8x128xf32>
    %284 = vector.extract_strided_slice %272 {offsets = [0, 256], sizes = [8, 128], strides = [1, 1]} : vector<8x384xf32> to vector<8x128xf32>
    %285 = vector.broadcast %273 : vector<1x128xf32> to vector<8x128xf32>
    %286 = arith.addf %284, %285 : vector<8x128xf32>
    %287 = arith.mulf %283, %286 : vector<8x128xf32>
    %288 = arith.addf %282, %287 : vector<8x128xf32>
    %289 = math.tanh %288 : vector<8x128xf32>
    %290 = vector.extract_strided_slice %281 {offsets = [0, 128], sizes = [8, 128], strides = [1, 1]} : vector<8x256xf32> to vector<8x128xf32>
    %291 = arith.subf %265, %289 : vector<8x128xf32>
    %292 = arith.mulf %290, %291 : vector<8x128xf32>
    %293 = arith.addf %289, %292 : vector<8x128xf32>
    %c2_i32_101 = arith.constant 2 : i32
    %c8_i32_102 = arith.constant 8 : i32
    %294 = arith.muli %c2_i32_101, %c8_i32_102 : i32
    %295 = tpu.assume_multiple %294, 8 : i32
    %296 = arith.index_cast %295 : i32 to index
    %c0_103 = arith.constant 0 : index
    %297 = vector.load %arg14[%296, %c0_103] : memref<64x384xf32, #tpu.memory_space<vmem>>, vector<8x384xf32>
    %298 = arith.truncf %293 : vector<8x128xf32> to vector<8x128xbf16>
    %c0_104 = arith.constant 0 : index
    %c0_105 = arith.constant 0 : index
    %299 = vector.load %arg8[%c0_104, %c0_105] : memref<128x384xbf16, #tpu.memory_space<vmem>>, vector<128x384xbf16>
    %cst_106 = arith.constant dense<0.000000e+00> : vector<8x384xf32>
    %300 = tpu.matmul %298, %299, %cst_106 {dimension_numbers = #tpu.dot_dimension_numbers<[1], [0], [0], [1], [0, 0, 1, 1], [], []>} : vector<8x128xbf16>, vector<128x384xbf16>, vector<8x384xf32> -> vector<8x384xf32>
    %c0_107 = arith.constant 0 : index
    %c0_108 = arith.constant 0 : index
    %301 = vector.load %arg7[%c0_107, %c0_108] : memref<1x128xf32, #tpu.memory_space<vmem>>, vector<1x128xf32>
    %302 = vector.extract_strided_slice %297 {offsets = [0, 0], sizes = [8, 256], strides = [1, 1]} : vector<8x384xf32> to vector<8x256xf32>
    %303 = vector.extract_strided_slice %300 {offsets = [0, 0], sizes = [8, 256], strides = [1, 1]} : vector<8x384xf32> to vector<8x256xf32>
    %304 = arith.addf %302, %303 : vector<8x256xf32>
    %305 = arith.negf %304 : vector<8x256xf32>
    %306 = math.exp %305 : vector<8x256xf32>
    %cst_109 = arith.constant 1.000000e+00 : f32
    %307 = vector.broadcast %cst_109 : f32 to vector<8x256xf32>
    %308 = arith.addf %307, %306 : vector<8x256xf32>
    %309 = arith.divf %307, %308 : vector<8x256xf32>
    %310 = vector.extract_strided_slice %297 {offsets = [0, 256], sizes = [8, 128], strides = [1, 1]} : vector<8x384xf32> to vector<8x128xf32>
    %311 = vector.extract_strided_slice %309 {offsets = [0, 0], sizes = [8, 128], strides = [1, 1]} : vector<8x256xf32> to vector<8x128xf32>
    %312 = vector.extract_strided_slice %300 {offsets = [0, 256], sizes = [8, 128], strides = [1, 1]} : vector<8x384xf32> to vector<8x128xf32>
    %313 = vector.broadcast %301 : vector<1x128xf32> to vector<8x128xf32>
    %314 = arith.addf %312, %313 : vector<8x128xf32>
    %315 = arith.mulf %311, %314 : vector<8x128xf32>
    %316 = arith.addf %310, %315 : vector<8x128xf32>
    %317 = math.tanh %316 : vector<8x128xf32>
    %318 = vector.extract_strided_slice %309 {offsets = [0, 128], sizes = [8, 128], strides = [1, 1]} : vector<8x256xf32> to vector<8x128xf32>
    %319 = arith.subf %293, %317 : vector<8x128xf32>
    %320 = arith.mulf %318, %319 : vector<8x128xf32>
    %321 = arith.addf %317, %320 : vector<8x128xf32>
    %c3_i32_110 = arith.constant 3 : i32
    %c8_i32_111 = arith.constant 8 : i32
    %322 = arith.muli %c3_i32_110, %c8_i32_111 : i32
    %323 = tpu.assume_multiple %322, 8 : i32
    %324 = arith.index_cast %323 : i32 to index
    %c0_112 = arith.constant 0 : index
    %325 = vector.load %arg14[%324, %c0_112] : memref<64x384xf32, #tpu.memory_space<vmem>>, vector<8x384xf32>
    %326 = arith.truncf %321 : vector<8x128xf32> to vector<8x128xbf16>
    %c0_113 = arith.constant 0 : index
    %c0_114 = arith.constant 0 : index
    %327 = vector.load %arg8[%c0_113, %c0_114] : memref<128x384xbf16, #tpu.memory_space<vmem>>, vector<128x384xbf16>
    %cst_115 = arith.constant dense<0.000000e+00> : vector<8x384xf32>
    %328 = tpu.matmul %326, %327, %cst_115 {dimension_numbers = #tpu.dot_dimension_numbers<[1], [0], [0], [1], [0, 0, 1, 1], [], []>} : vector<8x128xbf16>, vector<128x384xbf16>, vector<8x384xf32> -> vector<8x384xf32>
    %c0_116 = arith.constant 0 : index
    %c0_117 = arith.constant 0 : index
    %329 = vector.load %arg7[%c0_116, %c0_117] : memref<1x128xf32, #tpu.memory_space<vmem>>, vector<1x128xf32>
    %330 = vector.extract_strided_slice %325 {offsets = [0, 0], sizes = [8, 256], strides = [1, 1]} : vector<8x384xf32> to vector<8x256xf32>
    %331 = vector.extract_strided_slice %328 {offsets = [0, 0], sizes = [8, 256], strides = [1, 1]} : vector<8x384xf32> to vector<8x256xf32>
    %332 = arith.addf %330, %331 : vector<8x256xf32>
    %333 = arith.negf %332 : vector<8x256xf32>
    %334 = math.exp %333 : vector<8x256xf32>
    %cst_118 = arith.constant 1.000000e+00 : f32
    %335 = vector.broadcast %cst_118 : f32 to vector<8x256xf32>
    %336 = arith.addf %335, %334 : vector<8x256xf32>
    %337 = arith.divf %335, %336 : vector<8x256xf32>
    %338 = vector.extract_strided_slice %325 {offsets = [0, 256], sizes = [8, 128], strides = [1, 1]} : vector<8x384xf32> to vector<8x128xf32>
    %339 = vector.extract_strided_slice %337 {offsets = [0, 0], sizes = [8, 128], strides = [1, 1]} : vector<8x256xf32> to vector<8x128xf32>
    %340 = vector.extract_strided_slice %328 {offsets = [0, 256], sizes = [8, 128], strides = [1, 1]} : vector<8x384xf32> to vector<8x128xf32>
    %341 = vector.broadcast %329 : vector<1x128xf32> to vector<8x128xf32>
    %342 = arith.addf %340, %341 : vector<8x128xf32>
    %343 = arith.mulf %339, %342 : vector<8x128xf32>
    %344 = arith.addf %338, %343 : vector<8x128xf32>
    %345 = math.tanh %344 : vector<8x128xf32>
    %346 = vector.extract_strided_slice %337 {offsets = [0, 128], sizes = [8, 128], strides = [1, 1]} : vector<8x256xf32> to vector<8x128xf32>
    %347 = arith.subf %321, %345 : vector<8x128xf32>
    %348 = arith.mulf %346, %347 : vector<8x128xf32>
    %349 = arith.addf %345, %348 : vector<8x128xf32>
    %c4_i32_119 = arith.constant 4 : i32
    %c8_i32_120 = arith.constant 8 : i32
    %350 = arith.muli %c4_i32_119, %c8_i32_120 : i32
    %351 = tpu.assume_multiple %350, 8 : i32
    %352 = arith.index_cast %351 : i32 to index
    %c0_121 = arith.constant 0 : index
    %353 = vector.load %arg14[%352, %c0_121] : memref<64x384xf32, #tpu.memory_space<vmem>>, vector<8x384xf32>
    %354 = arith.truncf %349 : vector<8x128xf32> to vector<8x128xbf16>
    %c0_122 = arith.constant 0 : index
    %c0_123 = arith.constant 0 : index
    %355 = vector.load %arg8[%c0_122, %c0_123] : memref<128x384xbf16, #tpu.memory_space<vmem>>, vector<128x384xbf16>
    %cst_124 = arith.constant dense<0.000000e+00> : vector<8x384xf32>
    %356 = tpu.matmul %354, %355, %cst_124 {dimension_numbers = #tpu.dot_dimension_numbers<[1], [0], [0], [1], [0, 0, 1, 1], [], []>} : vector<8x128xbf16>, vector<128x384xbf16>, vector<8x384xf32> -> vector<8x384xf32>
    %c0_125 = arith.constant 0 : index
    %c0_126 = arith.constant 0 : index
    %357 = vector.load %arg7[%c0_125, %c0_126] : memref<1x128xf32, #tpu.memory_space<vmem>>, vector<1x128xf32>
    %358 = vector.extract_strided_slice %353 {offsets = [0, 0], sizes = [8, 256], strides = [1, 1]} : vector<8x384xf32> to vector<8x256xf32>
    %359 = vector.extract_strided_slice %356 {offsets = [0, 0], sizes = [8, 256], strides = [1, 1]} : vector<8x384xf32> to vector<8x256xf32>
    %360 = arith.addf %358, %359 : vector<8x256xf32>
    %361 = arith.negf %360 : vector<8x256xf32>
    %362 = math.exp %361 : vector<8x256xf32>
    %cst_127 = arith.constant 1.000000e+00 : f32
    %363 = vector.broadcast %cst_127 : f32 to vector<8x256xf32>
    %364 = arith.addf %363, %362 : vector<8x256xf32>
    %365 = arith.divf %363, %364 : vector<8x256xf32>
    %366 = vector.extract_strided_slice %353 {offsets = [0, 256], sizes = [8, 128], strides = [1, 1]} : vector<8x384xf32> to vector<8x128xf32>
    %367 = vector.extract_strided_slice %365 {offsets = [0, 0], sizes = [8, 128], strides = [1, 1]} : vector<8x256xf32> to vector<8x128xf32>
    %368 = vector.extract_strided_slice %356 {offsets = [0, 256], sizes = [8, 128], strides = [1, 1]} : vector<8x384xf32> to vector<8x128xf32>
    %369 = vector.broadcast %357 : vector<1x128xf32> to vector<8x128xf32>
    %370 = arith.addf %368, %369 : vector<8x128xf32>
    %371 = arith.mulf %367, %370 : vector<8x128xf32>
    %372 = arith.addf %366, %371 : vector<8x128xf32>
    %373 = math.tanh %372 : vector<8x128xf32>
    %374 = vector.extract_strided_slice %365 {offsets = [0, 128], sizes = [8, 128], strides = [1, 1]} : vector<8x256xf32> to vector<8x128xf32>
    %375 = arith.subf %349, %373 : vector<8x128xf32>
    %376 = arith.mulf %374, %375 : vector<8x128xf32>
    %377 = arith.addf %373, %376 : vector<8x128xf32>
    %c5_i32_128 = arith.constant 5 : i32
    %c8_i32_129 = arith.constant 8 : i32
    %378 = arith.muli %c5_i32_128, %c8_i32_129 : i32
    %379 = tpu.assume_multiple %378, 8 : i32
    %380 = arith.index_cast %379 : i32 to index
    %c0_130 = arith.constant 0 : index
    %381 = vector.load %arg14[%380, %c0_130] : memref<64x384xf32, #tpu.memory_space<vmem>>, vector<8x384xf32>
    %382 = arith.truncf %377 : vector<8x128xf32> to vector<8x128xbf16>
    %c0_131 = arith.constant 0 : index
    %c0_132 = arith.constant 0 : index
    %383 = vector.load %arg8[%c0_131, %c0_132] : memref<128x384xbf16, #tpu.memory_space<vmem>>, vector<128x384xbf16>
    %cst_133 = arith.constant dense<0.000000e+00> : vector<8x384xf32>
    %384 = tpu.matmul %382, %383, %cst_133 {dimension_numbers = #tpu.dot_dimension_numbers<[1], [0], [0], [1], [0, 0, 1, 1], [], []>} : vector<8x128xbf16>, vector<128x384xbf16>, vector<8x384xf32> -> vector<8x384xf32>
    %c0_134 = arith.constant 0 : index
    %c0_135 = arith.constant 0 : index
    %385 = vector.load %arg7[%c0_134, %c0_135] : memref<1x128xf32, #tpu.memory_space<vmem>>, vector<1x128xf32>
    %386 = vector.extract_strided_slice %381 {offsets = [0, 0], sizes = [8, 256], strides = [1, 1]} : vector<8x384xf32> to vector<8x256xf32>
    %387 = vector.extract_strided_slice %384 {offsets = [0, 0], sizes = [8, 256], strides = [1, 1]} : vector<8x384xf32> to vector<8x256xf32>
    %388 = arith.addf %386, %387 : vector<8x256xf32>
    %389 = arith.negf %388 : vector<8x256xf32>
    %390 = math.exp %389 : vector<8x256xf32>
    %cst_136 = arith.constant 1.000000e+00 : f32
    %391 = vector.broadcast %cst_136 : f32 to vector<8x256xf32>
    %392 = arith.addf %391, %390 : vector<8x256xf32>
    %393 = arith.divf %391, %392 : vector<8x256xf32>
    %394 = vector.extract_strided_slice %381 {offsets = [0, 256], sizes = [8, 128], strides = [1, 1]} : vector<8x384xf32> to vector<8x128xf32>
    %395 = vector.extract_strided_slice %393 {offsets = [0, 0], sizes = [8, 128], strides = [1, 1]} : vector<8x256xf32> to vector<8x128xf32>
    %396 = vector.extract_strided_slice %384 {offsets = [0, 256], sizes = [8, 128], strides = [1, 1]} : vector<8x384xf32> to vector<8x128xf32>
    %397 = vector.broadcast %385 : vector<1x128xf32> to vector<8x128xf32>
    %398 = arith.addf %396, %397 : vector<8x128xf32>
    %399 = arith.mulf %395, %398 : vector<8x128xf32>
    %400 = arith.addf %394, %399 : vector<8x128xf32>
    %401 = math.tanh %400 : vector<8x128xf32>
    %402 = vector.extract_strided_slice %393 {offsets = [0, 128], sizes = [8, 128], strides = [1, 1]} : vector<8x256xf32> to vector<8x128xf32>
    %403 = arith.subf %377, %401 : vector<8x128xf32>
    %404 = arith.mulf %402, %403 : vector<8x128xf32>
    %405 = arith.addf %401, %404 : vector<8x128xf32>
    %c6_i32_137 = arith.constant 6 : i32
    %c8_i32_138 = arith.constant 8 : i32
    %406 = arith.muli %c6_i32_137, %c8_i32_138 : i32
    %407 = tpu.assume_multiple %406, 8 : i32
    %408 = arith.index_cast %407 : i32 to index
    %c0_139 = arith.constant 0 : index
    %409 = vector.load %arg14[%408, %c0_139] : memref<64x384xf32, #tpu.memory_space<vmem>>, vector<8x384xf32>
    %410 = arith.truncf %405 : vector<8x128xf32> to vector<8x128xbf16>
    %c0_140 = arith.constant 0 : index
    %c0_141 = arith.constant 0 : index
    %411 = vector.load %arg8[%c0_140, %c0_141] : memref<128x384xbf16, #tpu.memory_space<vmem>>, vector<128x384xbf16>
    %cst_142 = arith.constant dense<0.000000e+00> : vector<8x384xf32>
    %412 = tpu.matmul %410, %411, %cst_142 {dimension_numbers = #tpu.dot_dimension_numbers<[1], [0], [0], [1], [0, 0, 1, 1], [], []>} : vector<8x128xbf16>, vector<128x384xbf16>, vector<8x384xf32> -> vector<8x384xf32>
    %c0_143 = arith.constant 0 : index
    %c0_144 = arith.constant 0 : index
    %413 = vector.load %arg7[%c0_143, %c0_144] : memref<1x128xf32, #tpu.memory_space<vmem>>, vector<1x128xf32>
    %414 = vector.extract_strided_slice %409 {offsets = [0, 0], sizes = [8, 256], strides = [1, 1]} : vector<8x384xf32> to vector<8x256xf32>
    %415 = vector.extract_strided_slice %412 {offsets = [0, 0], sizes = [8, 256], strides = [1, 1]} : vector<8x384xf32> to vector<8x256xf32>
    %416 = arith.addf %414, %415 : vector<8x256xf32>
    %417 = arith.negf %416 : vector<8x256xf32>
    %418 = math.exp %417 : vector<8x256xf32>
    %cst_145 = arith.constant 1.000000e+00 : f32
    %419 = vector.broadcast %cst_145 : f32 to vector<8x256xf32>
    %420 = arith.addf %419, %418 : vector<8x256xf32>
    %421 = arith.divf %419, %420 : vector<8x256xf32>
    %422 = vector.extract_strided_slice %409 {offsets = [0, 256], sizes = [8, 128], strides = [1, 1]} : vector<8x384xf32> to vector<8x128xf32>
    %423 = vector.extract_strided_slice %421 {offsets = [0, 0], sizes = [8, 128], strides = [1, 1]} : vector<8x256xf32> to vector<8x128xf32>
    %424 = vector.extract_strided_slice %412 {offsets = [0, 256], sizes = [8, 128], strides = [1, 1]} : vector<8x384xf32> to vector<8x128xf32>
    %425 = vector.broadcast %413 : vector<1x128xf32> to vector<8x128xf32>
    %426 = arith.addf %424, %425 : vector<8x128xf32>
    %427 = arith.mulf %423, %426 : vector<8x128xf32>
    %428 = arith.addf %422, %427 : vector<8x128xf32>
    %429 = math.tanh %428 : vector<8x128xf32>
    %430 = vector.extract_strided_slice %421 {offsets = [0, 128], sizes = [8, 128], strides = [1, 1]} : vector<8x256xf32> to vector<8x128xf32>
    %431 = arith.subf %405, %429 : vector<8x128xf32>
    %432 = arith.mulf %430, %431 : vector<8x128xf32>
    %433 = arith.addf %429, %432 : vector<8x128xf32>
    %c7_i32_146 = arith.constant 7 : i32
    %c8_i32_147 = arith.constant 8 : i32
    %434 = arith.muli %c7_i32_146, %c8_i32_147 : i32
    %435 = tpu.assume_multiple %434, 8 : i32
    %436 = arith.index_cast %435 : i32 to index
    %c0_148 = arith.constant 0 : index
    %437 = vector.load %arg14[%436, %c0_148] : memref<64x384xf32, #tpu.memory_space<vmem>>, vector<8x384xf32>
    %438 = arith.truncf %433 : vector<8x128xf32> to vector<8x128xbf16>
    %c0_149 = arith.constant 0 : index
    %c0_150 = arith.constant 0 : index
    %439 = vector.load %arg8[%c0_149, %c0_150] : memref<128x384xbf16, #tpu.memory_space<vmem>>, vector<128x384xbf16>
    %cst_151 = arith.constant dense<0.000000e+00> : vector<8x384xf32>
    %440 = tpu.matmul %438, %439, %cst_151 {dimension_numbers = #tpu.dot_dimension_numbers<[1], [0], [0], [1], [0, 0, 1, 1], [], []>} : vector<8x128xbf16>, vector<128x384xbf16>, vector<8x384xf32> -> vector<8x384xf32>
    %c0_152 = arith.constant 0 : index
    %c0_153 = arith.constant 0 : index
    %441 = vector.load %arg7[%c0_152, %c0_153] : memref<1x128xf32, #tpu.memory_space<vmem>>, vector<1x128xf32>
    %442 = vector.extract_strided_slice %437 {offsets = [0, 0], sizes = [8, 256], strides = [1, 1]} : vector<8x384xf32> to vector<8x256xf32>
    %443 = vector.extract_strided_slice %440 {offsets = [0, 0], sizes = [8, 256], strides = [1, 1]} : vector<8x384xf32> to vector<8x256xf32>
    %444 = arith.addf %442, %443 : vector<8x256xf32>
    %445 = arith.negf %444 : vector<8x256xf32>
    %446 = math.exp %445 : vector<8x256xf32>
    %cst_154 = arith.constant 1.000000e+00 : f32
    %447 = vector.broadcast %cst_154 : f32 to vector<8x256xf32>
    %448 = arith.addf %447, %446 : vector<8x256xf32>
    %449 = arith.divf %447, %448 : vector<8x256xf32>
    %450 = vector.extract_strided_slice %437 {offsets = [0, 256], sizes = [8, 128], strides = [1, 1]} : vector<8x384xf32> to vector<8x128xf32>
    %451 = vector.extract_strided_slice %449 {offsets = [0, 0], sizes = [8, 128], strides = [1, 1]} : vector<8x256xf32> to vector<8x128xf32>
    %452 = vector.extract_strided_slice %440 {offsets = [0, 256], sizes = [8, 128], strides = [1, 1]} : vector<8x384xf32> to vector<8x128xf32>
    %453 = vector.broadcast %441 : vector<1x128xf32> to vector<8x128xf32>
    %454 = arith.addf %452, %453 : vector<8x128xf32>
    %455 = arith.mulf %451, %454 : vector<8x128xf32>
    %456 = arith.addf %450, %455 : vector<8x128xf32>
    %457 = math.tanh %456 : vector<8x128xf32>
    %458 = vector.extract_strided_slice %449 {offsets = [0, 128], sizes = [8, 128], strides = [1, 1]} : vector<8x256xf32> to vector<8x128xf32>
    %459 = arith.subf %433, %457 : vector<8x128xf32>
    %460 = arith.mulf %458, %459 : vector<8x128xf32>
    %461 = arith.addf %457, %460 : vector<8x128xf32>
    %c7_i32_155 = arith.constant 7 : i32
    %c0_156 = arith.constant 0 : index
    %c0_157 = arith.constant 0 : index
    %462 = vector.load %arg9[%c0_156, %c0_157] : memref<1x128xf32, #tpu.memory_space<vmem>>, vector<1x128xf32>
    %463 = vector.broadcast %462 : vector<1x128xf32> to vector<8x128xf32>
    %464 = arith.mulf %461, %463 : vector<8x128xf32>
    %cst_158 = arith.constant dense<0.000000e+00> : vector<8xf32>
    %465 = vector.multi_reduction <add>, %464, %cst_158 [1] : vector<8x128xf32> to vector<8xf32>
    %466 = vector.shape_cast %465 : vector<8xf32> to vector<8x1xf32>
    %c0_159 = arith.constant 0 : index
    %c0_160 = arith.constant 0 : index
    %467 = vector.load %arg10[%c0_159, %c0_160] : memref<1x128xf32, #tpu.memory_space<vmem>>, vector<1x128xf32>
    %468 = vector.broadcast %466 : vector<8x1xf32> to vector<8x128xf32>
    %469 = vector.broadcast %467 : vector<1x128xf32> to vector<8x128xf32>
    %470 = arith.addf %468, %469 : vector<8x128xf32>
    %c0_161 = arith.constant 0 : index
    %c0_162 = arith.constant 0 : index
    %471 = vector.load %arg11[%c0_161, %c0_162] : memref<8x128xf32, #tpu.memory_space<vmem>>, vector<8x128xf32>
    tpu.vector_store %arg11[%c0_161, %c0_162], %470 {strides = array<i32>} : memref<8x128xf32, #tpu.memory_space<vmem>>, vector<8x128xf32>,
    return
  }
}

</mosaic_0001>

<llo_original>
// kernel: gru_model_forward.1
$region0: #{gru_model_forward.1}
  #allocation0 [shape = 'u32[]', space=smem, size = 0x4, offset = 0x4, fixed_abs, tag = 'smem constant byte address 0x4 - core index']
  #allocation1 [shape = 'u32[144,128]{1,0:T(1,128)}', space=vmem, size = 0x12000, scoped, tag = 'internal scratch']
  #allocation2 [shape = 'f32[64,384]{1,0:T(8,128)}', space=vmem, size = 0x18000, scoped, tag = 'scratch operand']
  #allocation3 [shape = 'f32[64,128]{1,0:T(8,128)}', space=vmem, size = 0x8000, scoped, tag = 'scratch operand']
  #allocation4 [shape = 'f32[64,384]{1,0:T(8,128)}', space=vmem, size = 0x18000, scoped, tag = 'scratch operand']
  %s0 = inlined_call_operand.vmem [shape: f32[64,1], index: 0, kind: input, shape index: {}]
  %s1 = inlined_call_operand.vmem [shape: f32[1,384], index: 1, kind: input, shape index: {}]
  %s2 = inlined_call_operand.vmem [shape: f32[1,384], index: 2, kind: input, shape index: {}]
  %s3 = inlined_call_operand.vmem [shape: f32[1,128], index: 3, kind: input, shape index: {}]
  %s4 = inlined_call_operand.hbm [shape: bf16[128,384], index: 4, kind: input, shape index: {}]
  %s5 = inlined_call_operand.hbm [shape: bf16[128,384], index: 5, kind: input, shape index: {}]
  %s6 = inlined_call_operand.vmem [shape: f32[1,384], index: 6, kind: input, shape index: {}]
  %s7 = inlined_call_operand.vmem [shape: f32[1,128], index: 7, kind: input, shape index: {}]
  %s8 = inlined_call_operand.hbm [shape: bf16[128,384], index: 8, kind: input, shape index: {}]
  %s9 = inlined_call_operand.vmem [shape: f32[1,128], index: 9, kind: input, shape index: {}]
  %s10 = inlined_call_operand.vmem [shape: f32[1,128], index: 10, kind: input, shape index: {}]
  %s11 = inlined_call_operand.vmem [shape: f32[8,128], index: 11, kind: output, shape index: {}]
  %s12 = sld [smem:[#allocation0]]
  $region66: #{gru_model_forward.1} parent=0
    _
  %s14 = ssub.s32 1, %s12
  %s15 = scalar_select 0, %s14, %s12
  $region1: #{gru_model_forward.1} parent=0
    #allocation5 [shape = 'u8[98304]{0}', space=vmem, size = 0x18000, scoped, tag = 'input window, operand 4, single buffered']
    #allocation6 [shape = 's32[1]{0}', space=sflag, size = 0x4, scoped, tag = 'scoped memory for gru_model_forward.1']
    #allocation7 [shape = 'u8[98304]{0}', space=vmem, size = 0x18000, scoped, tag = 'input window, operand 5, single buffered']
    #allocation8 [shape = 's32[1]{0}', space=sflag, size = 0x4, scoped, tag = 'scoped memory for gru_model_forward.1']
    #allocation9 [shape = 'u8[98304]{0}', space=vmem, size = 0x18000, scoped, tag = 'input window, operand 8, single buffered']
    %16 = vsyncpa [#allocation6], 0
    %17 = vsyncpa [#allocation8], 0
    // Predicated region
    $region2: #{gru_model_forward.1} parent=1 // pred_check
      _
    $region3: #{gru_model_forward.1} parent=1 // pred_check_branch
      %19 = sbr.rel (0) target = $region5
    $region4: #{gru_model_forward.1} parent=1 // pred_region
      _
    $region5: #{gru_model_forward.1} parent=1 // pred_fallthru
      _
    // Predicated region
    $region6: #{gru_model_forward.1} parent=1 // pred_check
      _
    $region7: #{gru_model_forward.1} parent=1 // pred_check_branch
      %21 = sbr.rel (0) target = $region9
    $region8: #{gru_model_forward.1} parent=1 // pred_region
      _
    $region9: #{gru_model_forward.1} parent=1 // pred_fallthru
      _
    // Predicated region
    $region10: #{gru_model_forward.1} parent=1 // pred_check
      _
    $region11: #{gru_model_forward.1} parent=1 // pred_check_branch
      %23 = sbr.rel (0) target = $region13
    $region12: #{gru_model_forward.1} parent=1 // pred_region
      _
    $region13: #{gru_model_forward.1} parent=1 // pred_fallthru
      _
    // Predicated region
    $region14: #{gru_model_forward.1} parent=1 // pred_check
      _
    $region15: #{gru_model_forward.1} parent=1 // pred_check_branch
      %25 = sbr.rel (0) target = $region17
    $region16: #{gru_model_forward.1} parent=1 // pred_region
      _
    $region17: #{gru_model_forward.1} parent=1 // pred_fallthru
      _
    // Predicated region
    $region18: #{gru_model_forward.1} parent=1 // pred_check
      _
    $region19: #{gru_model_forward.1} parent=1 // pred_check_branch
      %27 = sbr.rel (0) target = $region21
    $region20: #{gru_model_forward.1} parent=1 // pred_region
      %s29 = ssub.s32 3072, 3072
      %30 = vsyncadd [#allocation6], %s29
      %s31 = sshll.u32 [#allocation5], 4
      %s32 = int_to_ptr.vmem [resolvable:$true] %s31
      %37 = dma.hbm_to_vmem [thread:$0]  %s4, 3072, %s32, [#allocation6], 192, 192, 12
    $region21: #{gru_model_forward.1} parent=1 // pred_fallthru
      _
    // Predicated region
    $region22: #{gru_model_forward.1} parent=1 // pred_check
      _
    $region23: #{gru_model_forward.1} parent=1 // pred_check_branch
      %39 = sbr.rel (0) target = $region25
    $region24: #{gru_model_forward.1} parent=1 // pred_region
      %s41 = ssub.s32 3072, 3072
      %42 = vsyncadd [#allocation8], %s41
      %s43 = sshll.u32 [#allocation7], 4
      %s44 = int_to_ptr.vmem [resolvable:$true] %s43
      %49 = dma.hbm_to_vmem [thread:$0]  %s5, 3072, %s44, [#allocation8], 192, 192, 12
    $region25: #{gru_model_forward.1} parent=1 // pred_fallthru
      _
    // Predicated region
    $region26: #{gru_model_forward.1} parent=1 // pred_check
      _
    $region27: #{gru_model_forward.1} parent=1 // pred_check_branch
      %51 = sbr.rel (0) target = $region29
    $region28: #{gru_model_forward.1} parent=1 // pred_region
      _
    $region29: #{gru_model_forward.1} parent=1 // pred_fallthru
      _
    // Predicated region
    $region30: #{gru_model_forward.1} parent=1 // pred_check
      _
    $region31: #{gru_model_forward.1} parent=1 // pred_check_branch
      %53 = sbr.rel (0) target = $region33
    $region32: #{gru_model_forward.1} parent=1 // pred_region
      _
    $region33: #{gru_model_forward.1} parent=1 // pred_fallthru
      _
    // Predicated region
    $region34: #{gru_model_forward.1} parent=1 // pred_check
      _
    $region35: #{gru_model_forward.1} parent=1 // pred_check_branch
      %55 = sbr.rel (0) target = $region37
    $region36: #{gru_model_forward.1} parent=1 // pred_region
      %s57 = ssub.s32 3072, 3072
      %58 = vsyncadd [#allocation8], %s57
      %s59 = sshll.u32 [#allocation9], 4
      %s60 = int_to_ptr.vmem [resolvable:$true] %s59
      %65 = dma.hbm_to_vmem [thread:$0]  %s8, 3072, %s60, [#allocation8], 192, 192, 12
    $region37: #{gru_model_forward.1} parent=1 // pred_fallthru
      _
    // Predicated region
    $region38: #{gru_model_forward.1} parent=1 // pred_check
      _
    $region39: #{gru_model_forward.1} parent=1 // pred_check_branch
      %67 = sbr.rel (0) target = $region41
    $region40: #{gru_model_forward.1} parent=1 // pred_region
      _
    $region41: #{gru_model_forward.1} parent=1 // pred_fallthru
      _
    // Predicated region
    $region42: #{gru_model_forward.1} parent=1 // pred_check
      _
    $region43: #{gru_model_forward.1} parent=1 // pred_check_branch
      %69 = sbr.rel (0) target = $region45
    $region44: #{gru_model_forward.1} parent=1 // pred_region
      _
    $region45: #{gru_model_forward.1} parent=1 // pred_fallthru
      _
    // Predicated region
    $region46: #{gru_model_forward.1} parent=1 // pred_check
      _
    $region47: #{gru_model_forward.1} parent=1 // pred_check_branch
      %71 = sbr.rel (0) target = $region49
    $region48: #{gru_model_forward.1} parent=1 // pred_region
      %72 = dma.done [#allocation6], 3072
    $region49: #{gru_model_forward.1} parent=1 // pred_fallthru
      _
    // Predicated region
    $region50: #{gru_model_forward.1} parent=1 // pred_check
      _
    $region51: #{gru_model_forward.1} parent=1 // pred_check_branch
      %74 = sbr.rel (0) target = $region53
    $region52: #{gru_model_forward.1} parent=1 // pred_region
      %75 = dma.done [#allocation8], 3072
    $region53: #{gru_model_forward.1} parent=1 // pred_fallthru
      _
    // Predicated region
    $region54: #{gru_model_forward.1} parent=1 // pred_check
      _
    $region55: #{gru_model_forward.1} parent=1 // pred_check_branch
      %77 = sbr.rel (0) target = $region57
    $region56: #{gru_model_forward.1} parent=1 // pred_region
      %78 = dma.done [#allocation8], 3072
    $region57: #{gru_model_forward.1} parent=1 // pred_fallthru
      _
    %v80 = vld [vmem:[%s0] sm:$0xff]
    %v81 = vld [vmem:[%s0 + $0x8] sm:$0xff]
    %v82 = vld [vmem:[%s0 + $0x10] sm:$0xff]
    %v83 = vld [vmem:[%s0 + $0x18] sm:$0xff]
    %v84 = vld [vmem:[%s0 + $0x20] sm:$0xff]
    %v85 = vld [vmem:[%s0 + $0x28] sm:$0xff]
    %v86 = vld [vmem:[%s0 + $0x30] sm:$0xff]
    %v87 = vld [vmem:[%s0 + $0x38] sm:$0xff]
    %v88 = vld [vmem:[%s1] sm:$0x7]
    %90 = vset.pattern.permute.xlu0 0
    %91 = vperm.xlu0 %90, %v80
    %v92 = vpop.permute.xlu0 %91
    %95 = vset.pattern.permute.xlu0 0
    %96 = vperm.xlu0 %95, %v81
    %v97 = vpop.permute.xlu0 %96
    %100 = vset.pattern.permute.xlu0 0
    %101 = vperm.xlu0 %100, %v82
    %v102 = vpop.permute.xlu0 %101
    %105 = vset.pattern.permute.xlu0 0
    %106 = vperm.xlu0 %105, %v83
    %v107 = vpop.permute.xlu0 %106
    %110 = vset.pattern.permute.xlu0 0
    %111 = vperm.xlu0 %110, %v84
    %v112 = vpop.permute.xlu0 %111
    %115 = vset.pattern.permute.xlu0 0
    %116 = vperm.xlu0 %115, %v85
    %v117 = vpop.permute.xlu0 %116
    %120 = vset.pattern.permute.xlu0 0
    %121 = vperm.xlu0 %120, %v86
    %v122 = vpop.permute.xlu0 %121
    %125 = vset.pattern.permute.xlu0 0
    %126 = vperm.xlu0 %125, %v87
    %v127 = vpop.permute.xlu0 %126
    %v130 = vlaneseq
    %v131 = vshrl.u32 %v130, 7
    %v132 = vsub.s32 0, %v131
    %v133 = vrot.slane %v88, %v132
    %v134 = vlaneseq
    %v135 = vshrl.u32 %v134, 7
    %v136 = vsub.s32 1, %v135
    %v137 = vrot.slane %v88, %v136
    %v138 = vlaneseq
    %v139 = vshrl.u32 %v138, 7
    %v140 = vsub.s32 2, %v139
    %v141 = vrot.slane %v88, %v140
    %v145 = vmul.f32 %v92, %v133
    %v146 = vmul.f32 %v92, %v137
    %v147 = vmul.f32 %v92, %v141
    %v148 = vmul.f32 %v97, %v133
    %v149 = vmul.f32 %v97, %v137
    %v150 = vmul.f32 %v97, %v141
    %v151 = vmul.f32 %v102, %v133
    %v152 = vmul.f32 %v102, %v137
    %v153 = vmul.f32 %v102, %v141
    %v154 = vmul.f32 %v107, %v133
    %v155 = vmul.f32 %v107, %v137
    %v156 = vmul.f32 %v107, %v141
    %v157 = vmul.f32 %v112, %v133
    %v158 = vmul.f32 %v112, %v137
    %v159 = vmul.f32 %v112, %v141
    %v160 = vmul.f32 %v117, %v133
    %v161 = vmul.f32 %v117, %v137
    %v162 = vmul.f32 %v117, %v141
    %v163 = vmul.f32 %v122, %v133
    %v164 = vmul.f32 %v122, %v137
    %v165 = vmul.f32 %v122, %v141
    %v166 = vmul.f32 %v127, %v133
    %v167 = vmul.f32 %v127, %v137
    %v168 = vmul.f32 %v127, %v141
    %v169 = vld [vmem:[%s2] sm:$0x7]
    %v171 = vlaneseq
    %v172 = vshrl.u32 %v171, 7
    %v173 = vsub.s32 0, %v172
    %v174 = vrot.slane %v169, %v173
    %v175 = vlaneseq
    %v176 = vshrl.u32 %v175, 7
    %v177 = vsub.s32 1, %v176
    %v178 = vrot.slane %v169, %v177
    %v179 = vlaneseq
    %v180 = vshrl.u32 %v179, 7
    %v181 = vsub.s32 2, %v180
    %v182 = vrot.slane %v169, %v181
    %v186 = vadd.f32 %v145, %v174
    %v187 = vadd.f32 %v146, %v178
    %v188 = vadd.f32 %v147, %v182
    %v189 = vadd.f32 %v148, %v174
    %v190 = vadd.f32 %v149, %v178
    %v191 = vadd.f32 %v150, %v182
    %v192 = vadd.f32 %v151, %v174
    %v193 = vadd.f32 %v152, %v178
    %v194 = vadd.f32 %v153, %v182
    %v195 = vadd.f32 %v154, %v174
    %v196 = vadd.f32 %v155, %v178
    %v197 = vadd.f32 %v156, %v182
    %v198 = vadd.f32 %v157, %v174
    %v199 = vadd.f32 %v158, %v178
    %v200 = vadd.f32 %v159, %v182
    %v201 = vadd.f32 %v160, %v174
    %v202 = vadd.f32 %v161, %v178
    %v203 = vadd.f32 %v162, %v182
    %v204 = vadd.f32 %v163, %v174
    %v205 = vadd.f32 %v164, %v178
    %v206 = vadd.f32 %v165, %v182
    %v207 = vadd.f32 %v166, %v174
    %v208 = vadd.f32 %v167, %v178
    %v209 = vadd.f32 %v168, %v182
    %210 = vst [vmem:[#allocation2] sm:$0xff] %v186
    %211 = vst [vmem:[#allocation2 + $0x8] sm:$0xff] %v187
    %212 = vst [vmem:[#allocation2 + $0x10] sm:$0xff] %v188
    %213 = vst [vmem:[#allocation2 + $0x18] sm:$0xff] %v189
    %214 = vst [vmem:[#allocation2 + $0x20] sm:$0xff] %v190
    %215 = vst [vmem:[#allocation2 + $0x28] sm:$0xff] %v191
    %216 = vst [vmem:[#allocation2 + $0x30] sm:$0xff] %v192
    %217 = vst [vmem:[#allocation2 + $0x38] sm:$0xff] %v193
    %218 = vst [vmem:[#allocation2 + $0x40] sm:$0xff] %v194
    %219 = vst [vmem:[#allocation2 + $0x48] sm:$0xff] %v195
    %220 = vst [vmem:[#allocation2 + $0x50] sm:$0xff] %v196
    %221 = vst [vmem:[#allocation2 + $0x58] sm:$0xff] %v197
    %222 = vst [vmem:[#allocation2 + $0x60] sm:$0xff] %v198
    %223 = vst [vmem:[#allocation2 + $0x68] sm:$0xff] %v199
    %224 = vst [vmem:[#allocation2 + $0x70] sm:$0xff] %v200
    %225 = vst [vmem:[#allocation2 + $0x78] sm:$0xff] %v201
    %226 = vst [vmem:[#allocation2 + $0x80] sm:$0xff] %v202
    %227 = vst [vmem:[#allocation2 + $0x88] sm:$0xff] %v203
    %228 = vst [vmem:[#allocation2 + $0x90] sm:$0xff] %v204
    %229 = vst [vmem:[#allocation2 + $0x98] sm:$0xff] %v205
    %230 = vst [vmem:[#allocation2 + $0xa0] sm:$0xff] %v206
    %231 = vst [vmem:[#allocation2 + $0xa8] sm:$0xff] %v207
    %232 = vst [vmem:[#allocation2 + $0xb0] sm:$0xff] %v208
    %233 = vst [vmem:[#allocation2 + $0xb8] sm:$0xff] %v209
    %v234 = vld [vmem:[#allocation2] sm:$0xff]
    %v235 = vld [vmem:[#allocation2 + $0x8] sm:$0xff]
    %v236 = vld [vmem:[#allocation2 + $0x10] sm:$0xff]
    %v237 = vld [vmem:[%s3] sm:$0x1]
    %v238 = vxor.u32 %v234, 2147483648
    %v239 = vxor.u32 %v235, 2147483648
    %v240 = vmul.f32 %v238, 1.442695
    %v241 = vpow.pop %v240
    %v242 = vmul.f32 %v239, 1.442695
    %v243 = vpow.pop %v242
    %v244 = vadd.f32 %v241, 1.0
    %v245 = vadd.f32 %v243, 1.0
    %v246 = vrcp.pop %v244
    %v247 = vmul.f32 1.0, %v246
    %v248 = vrcp.pop %v245
    %v249 = vmul.f32 1.0, %v248
    %v251 = vlaneseq
    %v252 = vshrl.u32 %v251, 7
    %v253 = vsub.s32 0, %v252
    %v254 = vrot.slane %v237, %v253
    %v256 = vmul.f32 %v247, %v254
    %v257 = vadd.f32 %v236, %v256
    %v258 = vtanh.pop %v257
    %v259 = vsub.f32 0.0, %v258
    %v260 = vmul.f32 %v249, %v259
    %v261 = vadd.f32 %v258, %v260
    %262 = vst [vmem:[#allocation3] sm:$0xff] %v261
    %s263 = smul.u32 1, 3
    %s264 = smul.addr %s263, 8
    %s265 = scalar_lea.vmem [#allocation2], %s264
    %v266 = vld [vmem:[%s265] sm:$0xff]
    %v267 = vld [vmem:[%s265 + $0x8] sm:$0xff]
    %v268 = vld [vmem:[%s265 + $0x10] sm:$0xff]
    %v269 = vpack.c.bf16 %v261, %v261
    %v270 = vld [vmem:[#allocation5] sm:$0xff]
    %v271 = vld [vmem:[#allocation5 + $0x8] sm:$0xf]
    %v272 = vld [vmem:[#allocation5 + $0xc] sm:$0xff]
    %v273 = vld [vmem:[#allocation5 + $0x14] sm:$0xf]
    %v274 = vld [vmem:[#allocation5 + $0x18] sm:$0xff]
    %v275 = vld [vmem:[#allocation5 + $0x20] sm:$0xf]
    %v276 = vld [vmem:[#allocation5 + $0x24] sm:$0xff]
    %v277 = vld [vmem:[#allocation5 + $0x2c] sm:$0xf]
    %v278 = vld [vmem:[#allocation5 + $0x30] sm:$0xff]
    %v279 = vld [vmem:[#allocation5 + $0x38] sm:$0xf]
    %v280 = vld [vmem:[#allocation5 + $0x3c] sm:$0xff]
    %v281 = vld [vmem:[#allocation5 + $0x44] sm:$0xf]
    %v282 = vld [vmem:[#allocation5 + $0x48] sm:$0xff]
    %v283 = vld [vmem:[#allocation5 + $0x50] sm:$0xf]
    %v284 = vld [vmem:[#allocation5 + $0x54] sm:$0xff]
    %v285 = vld [vmem:[#allocation5 + $0x5c] sm:$0xf]
    %v286 = vld [vmem:[#allocation5 + $0x60] sm:$0xff]
    %v287 = vld [vmem:[#allocation5 + $0x68] sm:$0xf]
    %v288 = vld [vmem:[#allocation5 + $0x6c] sm:$0xff]
    %v289 = vld [vmem:[#allocation5 + $0x74] sm:$0xf]
    %v290 = vld [vmem:[#allocation5 + $0x78] sm:$0xff]
    %v291 = vld [vmem:[#allocation5 + $0x80] sm:$0xf]
    %v292 = vld [vmem:[#allocation5 + $0x84] sm:$0xff]
    %v293 = vld [vmem:[#allocation5 + $0x8c] sm:$0xf]
    %v294 = vld [vmem:[#allocation5 + $0x90] sm:$0xff]
    %v295 = vld [vmem:[#allocation5 + $0x98] sm:$0xf]
    %v296 = vld [vmem:[#allocation5 + $0x9c] sm:$0xff]
    %v297 = vld [vmem:[#allocation5 + $0xa4] sm:$0xf]
    %v298 = vld [vmem:[#allocation5 + $0xa8] sm:$0xff]
    %v299 = vld [vmem:[#allocation5 + $0xb0] sm:$0xf]
    %v300 = vld [vmem:[#allocation5 + $0xb4] sm:$0xff]
    %v301 = vld [vmem:[#allocation5 + $0xbc] sm:$0xf]
    %v334 = vunpack.c.l.b16 %v270
    %v335 = vunpack.c.h.b16 %v270
    %v336 = vunpack.c.l.b16 %v271
    %v337 = vunpack.c.l.b16 %v272
    %v338 = vunpack.c.h.b16 %v272
    %v339 = vunpack.c.l.b16 %v273
    %v340 = vunpack.c.l.b16 %v274
    %v341 = vunpack.c.h.b16 %v274
    %v342 = vunpack.c.l.b16 %v275
    %v343 = vunpack.c.l.b16 %v276
    %v344 = vunpack.c.h.b16 %v276
    %v345 = vunpack.c.l.b16 %v277
    %v346 = vunpack.c.l.b16 %v278
    %v347 = vunpack.c.h.b16 %v278
    %v348 = vunpack.c.l.b16 %v279
    %v349 = vunpack.c.l.b16 %v280
    %v350 = vunpack.c.h.b16 %v280
    %v351 = vunpack.c.l.b16 %v281
    %v352 = vunpack.c.l.b16 %v282
    %v353 = vunpack.c.h.b16 %v282
    %v354 = vunpack.c.l.b16 %v283
    %v355 = vunpack.c.l.b16 %v284
    %v356 = vunpack.c.h.b16 %v284
    %v357 = vunpack.c.l.b16 %v285
    %v358 = vunpack.c.l.b16 %v286
    %v359 = vunpack.c.h.b16 %v286
    %v360 = vunpack.c.l.b16 %v287
    %v361 = vunpack.c.l.b16 %v288
    %v362 = vunpack.c.h.b16 %v288
    %v363 = vunpack.c.l.b16 %v289
    %v364 = vunpack.c.l.b16 %v290
    %v365 = vunpack.c.h.b16 %v290
    %v366 = vunpack.c.l.b16 %v291
    %v367 = vunpack.c.l.b16 %v292
    %v368 = vunpack.c.h.b16 %v292
    %v369 = vunpack.c.l.b16 %v293
    %v370 = vunpack.c.l.b16 %v294
    %v371 = vunpack.c.h.b16 %v294
    %v372 = vunpack.c.l.b16 %v295
    %v373 = vunpack.c.l.b16 %v296
    %v374 = vunpack.c.h.b16 %v296
    %v375 = vunpack.c.l.b16 %v297
    %v376 = vunpack.c.l.b16 %v298
    %v377 = vunpack.c.h.b16 %v298
    %v378 = vunpack.c.l.b16 %v299
    %v379 = vunpack.c.l.b16 %v300
    %v380 = vunpack.c.h.b16 %v300
    %v381 = vunpack.c.l.b16 %v301
    %v382 = vpack.c.b16 %v337, %v334
    %v383 = vpack.c.b16 %v338, %v335
    %v384 = vpack.c.b16 %v339, %v336
    %v385 = vpack.c.b16 %v343, %v340
    %v386 = vpack.c.b16 %v344, %v341
    %v387 = vpack.c.b16 %v345, %v342
    %v388 = vpack.c.b16 %v349, %v346
    %v389 = vpack.c.b16 %v350, %v347
    %v390 = vpack.c.b16 %v351, %v348
    %v391 = vpack.c.b16 %v355, %v352
    %v392 = vpack.c.b16 %v356, %v353
    %v393 = vpack.c.b16 %v357, %v354
    %v394 = vpack.c.b16 %v361, %v358
    %v395 = vpack.c.b16 %v362, %v359
    %v396 = vpack.c.b16 %v363, %v360
    %v397 = vpack.c.b16 %v367, %v364
    %v398 = vpack.c.b16 %v368, %v365
    %v399 = vpack.c.b16 %v369, %v366
    %v400 = vpack.c.b16 %v373, %v370
    %v401 = vpack.c.b16 %v374, %v371
    %v402 = vpack.c.b16 %v375, %v372
    %v403 = vpack.c.b16 %v379, %v376
    %v404 = vpack.c.b16 %v380, %v377
    %v405 = vpack.c.b16 %v381, %v378
    %430 = vmatprep.subr.bf16.mxu0 %v404
    %431 = vmatpush1.bf16.msra.mxu0 %v403
    %432 = vmatprep.subr.bf16.mxu0 %v401
    %433 = vmatpush1.bf16.msra.mxu0 %v400
    %434 = vmatprep.subr.bf16.mxu0 %v398
    %435 = vmatpush1.bf16.msra.mxu0 %v397
    %436 = vmatprep.subr.bf16.mxu0 %v395
    %437 = vmatpush1.bf16.msra.mxu0 %v394
    %438 = vmatprep.subr.bf16.mxu0 %v392
    %439 = vmatpush1.bf16.msra.mxu0 %v391
    %440 = vmatprep.subr.bf16.mxu0 %v389
    %441 = vmatpush1.bf16.msra.mxu0 %v388
    %442 = vmatprep.subr.bf16.mxu0 %v386
    %443 = vmatpush1.bf16.msra.mxu0 %v385
    %444 = vmatprep.subr.bf16.mxu0 %v383
    %445 = vmatpush1.bf16.msra.mxu0 %v382
    %446 = vmatprep.subr.bf16.mxu0 0
    %447 = vmatpush2.bf16.msra.mxu0 0
    %448 = vmatprep.subr.bf16.mxu0 0
    %449 = vmatpush2.bf16.msra.mxu0 0
    %450 = vmatprep.subr.bf16.mxu0 0
    %451 = vmatpush2.bf16.msra.mxu0 0
    %452 = vmatprep.subr.bf16.mxu0 0
    %453 = vmatpush2.bf16.msra.mxu0 0
    %454 = vmatprep.subr.bf16.mxu0 0
    %455 = vmatpush2.bf16.msra.mxu0 0
    %456 = vmatprep.subr.bf16.mxu0 0
    %457 = vmatpush2.bf16.msra.mxu0 0
    %458 = vmatprep.subr.bf16.mxu0 0
    %459 = vmatpush2.bf16.msra.mxu0 0
    %460 = vmatprep.subr.bf16.mxu0 0
    %461 = vmatpush2.bf16.msra.mxu0 0
    %462 = vmatprep.mubr.bf16.mxu0 0
    %463 = vmatmul.mubr.bf16.gmra.mxu0 %v269
    %v464 = vpop.f32.mrf.mxu0
    %v465 = vadd.f32 0.0, %v464
    %v466 = vpop.f32.mrf.mxu0
    %v467 = vadd.f32 0.0, %v466
    %v468 = vpop.f32.mrf.mxu0
    %v469 = vpop.f32.mrf.mxu0
    %470 = vdwg.mxu0
    %471 = vmatprep.subr.bf16.mxu0 0
    %472 = vmatpush1.bf16.msra.mxu0 %v405
    %473 = vmatprep.subr.bf16.mxu0 0
    %474 = vmatpush1.bf16.msra.mxu0 %v402
    %475 = vmatprep.subr.bf16.mxu0 0
    %476 = vmatpush1.bf16.msra.mxu0 %v399
    %477 = vmatprep.subr.bf16.mxu0 0
    %478 = vmatpush1.bf16.msra.mxu0 %v396
    %479 = vmatprep.subr.bf16.mxu0 0
    %480 = vmatpush1.bf16.msra.mxu0 %v393
    %481 = vmatprep.subr.bf16.mxu0 0
    %482 = vmatpush1.bf16.msra.mxu0 %v390
    %483 = vmatprep.subr.bf16.mxu0 0
    %484 = vmatpush1.bf16.msra.mxu0 %v387
    %485 = vmatprep.subr.bf16.mxu0 0
    %486 = vmatpush1.bf16.msra.mxu0 %v384
    %487 = vmatprep.subr.bf16.mxu0 0
    %488 = vmatpush2.bf16.msra.mxu0 0
    %489 = vmatprep.subr.bf16.mxu0 0
    %490 = vmatpush2.bf16.msra.mxu0 0
    %491 = vmatprep.subr.bf16.mxu0 0
    %492 = vmatpush2.bf16.msra.mxu0 0
    %493 = vmatprep.subr.bf16.mxu0 0
    %494 = vmatpush2.bf16.msra.mxu0 0
    %495 = vmatprep.subr.bf16.mxu0 0
    %496 = vmatpush2.bf16.msra.mxu0 0
    %497 = vmatprep.subr.bf16.mxu0 0
    %498 = vmatpush2.bf16.msra.mxu0 0
    %499 = vmatprep.subr.bf16.mxu0 0
    %500 = vmatpush2.bf16.msra.mxu0 0
    %501 = vmatprep.subr.bf16.mxu0 0
    %502 = vmatpush2.bf16.msra.mxu0 0
    %503 = vmatprep.mubr.bf16.mxu0 0
    %504 = vmatmul.mubr.bf16.gmra.mxu0 %v269
    %v505 = vpop.f32.mrf.mxu0
    %v506 = vadd.f32 0.0, %v505
    %v507 = vpop.f32.mrf.mxu0
    %v508 = vpop.f32.mrf.mxu0
    %v509 = vpop.f32.mrf.mxu0
    %510 = vdwg.mxu0
    %v511 = vld [vmem:[%s3] sm:$0x1]
    %v512 = vadd.f32 %v266, %v465
    %v513 = vadd.f32 %v267, %v467
    %v514 = vxor.u32 %v512, 2147483648
    %v515 = vxor.u32 %v513, 2147483648
    %v516 = vmul.f32 %v514, 1.442695
    %v517 = vpow.pop %v516
    %v518 = vmul.f32 %v515, 1.442695
    %v519 = vpow.pop %v518
    %v520 = vadd.f32 %v517, 1.0
    %v521 = vadd.f32 %v519, 1.0
    %v522 = vrcp.pop %v520
    %v523 = vmul.f32 1.0, %v522
    %v524 = vrcp.pop %v521
    %v525 = vmul.f32 1.0, %v524
    %v527 = vlaneseq
    %v528 = vshrl.u32 %v527, 7
    %v529 = vsub.s32 0, %v528
    %v530 = vrot.slane %v511, %v529
    %v532 = vadd.f32 %v506, %v530
    %v533 = vmul.f32 %v523, %v532
    %v534 = vadd.f32 %v268, %v533
    %v535 = vtanh.pop %v534
    %v536 = vsub.f32 %v261, %v535
    %v537 = vmul.f32 %v525, %v536
    %v538 = vadd.f32 %v535, %v537
    %s539 = scalar_lea.vmem [#allocation3], 8
    %540 = vst [vmem:[%s539] sm:$0xff] %v538
    %s541 = smul.u32 2, 3
    %s542 = smul.addr %s541, 8
    %s543 = scalar_lea.vmem [#allocation2], %s542
    %v544 = vld [vmem:[%s543] sm:$0xff]
    %v545 = vld [vmem:[%s543 + $0x8] sm:$0xff]
    %v546 = vld [vmem:[%s543 + $0x10] sm:$0xff]
    %v547 = vpack.c.bf16 %v538, %v538
    %v548 = vld [vmem:[#allocation5] sm:$0xff]
    %v549 = vld [vmem:[#allocation5 + $0x8] sm:$0xf]
    %v550 = vld [vmem:[#allocation5 + $0xc] sm:$0xff]
    %v551 = vld [vmem:[#allocation5 + $0x14] sm:$0xf]
    %v552 = vld [vmem:[#allocation5 + $0x18] sm:$0xff]
    %v553 = vld [vmem:[#allocation5 + $0x20] sm:$0xf]
    %v554 = vld [vmem:[#allocation5 + $0x24] sm:$0xff]
    %v555 = vld [vmem:[#allocation5 + $0x2c] sm:$0xf]
    %v556 = vld [vmem:[#allocation5 + $0x30] sm:$0xff]
    %v557 = vld [vmem:[#allocation5 + $0x38] sm:$0xf]
    %v558 = vld [vmem:[#allocation5 + $0x3c] sm:$0xff]
    %v559 = vld [vmem:[#allocation5 + $0x44] sm:$0xf]
    %v560 = vld [vmem:[#allocation5 + $0x48] sm:$0xff]
    %v561 = vld [vmem:[#allocation5 + $0x50] sm:$0xf]
    %v562 = vld [vmem:[#allocation5 + $0x54] sm:$0xff]
    %v563 = vld [vmem:[#allocation5 + $0x5c] sm:$0xf]
    %v564 = vld [vmem:[#allocation5 + $0x60] sm:$0xff]
    %v565 = vld [vmem:[#allocation5 + $0x68] sm:$0xf]
    %v566 = vld [vmem:[#allocation5 + $0x6c] sm:$0xff]
    %v567 = vld [vmem:[#allocation5 + $0x74] sm:$0xf]
    %v568 = vld [vmem:[#allocation5 + $0x78] sm:$0xff]
    %v569 = vld [vmem:[#allocation5 + $0x80] sm:$0xf]
    %v570 = vld [vmem:[#allocation5 + $0x84] sm:$0xff]
    %v571 = vld [vmem:[#allocation5 + $0x8c] sm:$0xf]
    %v572 = vld [vmem:[#allocation5 + $0x90] sm:$0xff]
    %v573 = vld [vmem:[#allocation5 + $0x98] sm:$0xf]
    %v574 = vld [vmem:[#allocation5 + $0x9c] sm:$0xff]
    %v575 = vld [vmem:[#allocation5 + $0xa4] sm:$0xf]
    %v576 = vld [vmem:[#allocation5 + $0xa8] sm:$0xff]
    %v577 = vld [vmem:[#allocation5 + $0xb0] sm:$0xf]
    %v578 = vld [vmem:[#allocation5 + $0xb4] sm:$0xff]
    %v579 = vld [vmem:[#allocation5 + $0xbc] sm:$0xf]
    %v612 = vunpack.c.l.b16 %v548
    %v613 = vunpack.c.h.b16 %v548
    %v614 = vunpack.c.l.b16 %v549
    %v615 = vunpack.c.l.b16 %v550
    %v616 = vunpack.c.h.b16 %v550
    %v617 = vunpack.c.l.b16 %v551
    %v618 = vunpack.c.l.b16 %v552
    %v619 = vunpack.c.h.b16 %v552
    %v620 = vunpack.c.l.b16 %v553
    %v621 = vunpack.c.l.b16 %v554
    %v622 = vunpack.c.h.b16 %v554
    %v623 = vunpack.c.l.b16 %v555
    %v624 = vunpack.c.l.b16 %v556
    %v625 = vunpack.c.h.b16 %v556
    %v626 = vunpack.c.l.b16 %v557
    %v627 = vunpack.c.l.b16 %v558
    %v628 = vunpack.c.h.b16 %v558
    %v629 = vunpack.c.l.b16 %v559
    %v630 = vunpack.c.l.b16 %v560
    %v631 = vunpack.c.h.b16 %v560
    %v632 = vunpack.c.l.b16 %v561
    %v633 = vunpack.c.l.b16 %v562
    %v634 = vunpack.c.h.b16 %v562
    %v635 = vunpack.c.l.b16 %v563
    %v636 = vunpack.c.l.b16 %v564
    %v637 = vunpack.c.h.b16 %v564
    %v638 = vunpack.c.l.b16 %v565
    %v639 = vunpack.c.l.b16 %v566
    %v640 = vunpack.c.h.b16 %v566
    %v641 = vunpack.c.l.b16 %v567
    %v642 = vunpack.c.l.b16 %v568
    %v643 = vunpack.c.h.b16 %v568
    %v644 = vunpack.c.l.b16 %v569
    %v645 = vunpack.c.l.b16 %v570
    %v646 = vunpack.c.h.b16 %v570
    %v647 = vunpack.c.l.b16 %v571
    %v648 = vunpack.c.l.b16 %v572
    %v649 = vunpack.c.h.b16 %v572
    %v650 = vunpack.c.l.b16 %v573
    %v651 = vunpack.c.l.b16 %v574
    %v652 = vunpack.c.h.b16 %v574
    %v653 = vunpack.c.l.b16 %v575
    %v654 = vunpack.c.l.b16 %v576
    %v655 = vunpack.c.h.b16 %v576
    %v656 = vunpack.c.l.b16 %v577
    %v657 = vunpack.c.l.b16 %v578
    %v658 = vunpack.c.h.b16 %v578
    %v659 = vunpack.c.l.b16 %v579
    %v660 = vpack.c.b16 %v615, %v612
    %v661 = vpack.c.b16 %v616, %v613
    %v662 = vpack.c.b16 %v617, %v614
    %v663 = vpack.c.b16 %v621, %v618
    %v664 = vpack.c.b16 %v622, %v619
    %v665 = vpack.c.b16 %v623, %v620
    %v666 = vpack.c.b16 %v627, %v624
    %v667 = vpack.c.b16 %v628, %v625
    %v668 = vpack.c.b16 %v629, %v626
    %v669 = vpack.c.b16 %v633, %v630
    %v670 = vpack.c.b16 %v634, %v631
    %v671 = vpack.c.b16 %v635, %v632
    %v672 = vpack.c.b16 %v639, %v636
    %v673 = vpack.c.b16 %v640, %v637
    %v674 = vpack.c.b16 %v641, %v638
    %v675 = vpack.c.b16 %v645, %v642
    %v676 = vpack.c.b16 %v646, %v643
    %v677 = vpack.c.b16 %v647, %v644
    %v678 = vpack.c.b16 %v651, %v648
    %v679 = vpack.c.b16 %v652, %v649
    %v680 = vpack.c.b16 %v653, %v650
    %v681 = vpack.c.b16 %v657, %v654
    %v682 = vpack.c.b16 %v658, %v655
    %v683 = vpack.c.b16 %v659, %v656
    %708 = vmatprep.subr.bf16.mxu0 %v682
    %709 = vmatpush1.bf16.msra.mxu0 %v681
    %710 = vmatprep.subr.bf16.mxu0 %v679
    %711 = vmatpush1.bf16.msra.mxu0 %v678
    %712 = vmatprep.subr.bf16.mxu0 %v676
    %713 = vmatpush1.bf16.msra.mxu0 %v675
    %714 = vmatprep.subr.bf16.mxu0 %v673
    %715 = vmatpush1.bf16.msra.mxu0 %v672
    %716 = vmatprep.subr.bf16.mxu0 %v670
    %717 = vmatpush1.bf16.msra.mxu0 %v669
    %718 = vmatprep.subr.bf16.mxu0 %v667
    %719 = vmatpush1.bf16.msra.mxu0 %v666
    %720 = vmatprep.subr.bf16.mxu0 %v664
    %721 = vmatpush1.bf16.msra.mxu0 %v663
    %722 = vmatprep.subr.bf16.mxu0 %v661
    %723 = vmatpush1.bf16.msra.mxu0 %v660
    %724 = vmatprep.subr.bf16.mxu0 0
    %725 = vmatpush2.bf16.msra.mxu0 0
    %726 = vmatprep.subr.bf16.mxu0 0
    %727 = vmatpush2.bf16.msra.mxu0 0
    %728 = vmatprep.subr.bf16.mxu0 0
    %729 = vmatpush2.bf16.msra.mxu0 0
    %730 = vmatprep.subr.bf16.mxu0 0
    %731 = vmatpush2.bf16.msra.mxu0 0
    %732 = vmatprep.subr.bf16.mxu0 0
    %733 = vmatpush2.bf16.msra.mxu0 0
    %734 = vmatprep.subr.bf16.mxu0 0
    %735 = vmatpush2.bf16.msra.mxu0 0
    %736 = vmatprep.subr.bf16.mxu0 0
    %737 = vmatpush2.bf16.msra.mxu0 0
    %738 = vmatprep.subr.bf16.mxu0 0
    %739 = vmatpush2.bf16.msra.mxu0 0
    %740 = vmatprep.mubr.bf16.mxu0 0
    %741 = vmatmul.mubr.bf16.gmra.mxu0 %v547
    %v742 = vpop.f32.mrf.mxu0
    %v743 = vadd.f32 0.0, %v742
    %v744 = vpop.f32.mrf.mxu0
    %v745 = vadd.f32 0.0, %v744
    %v746 = vpop.f32.mrf.mxu0
    %v747 = vpop.f32.mrf.mxu0
    %748 = vdwg.mxu0
    %749 = vmatprep.subr.bf16.mxu0 0
    %750 = vmatpush1.bf16.msra.mxu0 %v683
    %751 = vmatprep.subr.bf16.mxu0 0
    %752 = vmatpush1.bf16.msra.mxu0 %v680
    %753 = vmatprep.subr.bf16.mxu0 0
    %754 = vmatpush1.bf16.msra.mxu0 %v677
    %755 = vmatprep.subr.bf16.mxu0 0
    %756 = vmatpush1.bf16.msra.mxu0 %v674
    %757 = vmatprep.subr.bf16.mxu0 0
    %758 = vmatpush1.bf16.msra.mxu0 %v671
    %759 = vmatprep.subr.bf16.mxu0 0
    %760 = vmatpush1.bf16.msra.mxu0 %v668
    %761 = vmatprep.subr.bf16.mxu0 0
    %762 = vmatpush1.bf16.msra.mxu0 %v665
    %763 = vmatprep.subr.bf16.mxu0 0
    %764 = vmatpush1.bf16.msra.mxu0 %v662
    %765 = vmatprep.subr.bf16.mxu0 0
    %766 = vmatpush2.bf16.msra.mxu0 0
    %767 = vmatprep.subr.bf16.mxu0 0
    %768 = vmatpush2.bf16.msra.mxu0 0
    %769 = vmatprep.subr.bf16.mxu0 0
    %770 = vmatpush2.bf16.msra.mxu0 0
    %771 = vmatprep.subr.bf16.mxu0 0
    %772 = vmatpush2.bf16.msra.mxu0 0
    %773 = vmatprep.subr.bf16.mxu0 0
    %774 = vmatpush2.bf16.msra.mxu0 0
    %775 = vmatprep.subr.bf16.mxu0 0
    %776 = vmatpush2.bf16.msra.mxu0 0
    %777 = vmatprep.subr.bf16.mxu0 0
    %778 = vmatpush2.bf16.msra.mxu0 0
    %779 = vmatprep.subr.bf16.mxu0 0
    %780 = vmatpush2.bf16.msra.mxu0 0
    %781 = vmatprep.mubr.bf16.mxu0 0
    %782 = vmatmul.mubr.bf16.gmra.mxu0 %v547
    %v783 = vpop.f32.mrf.mxu0
    %v784 = vadd.f32 0.0, %v783
    %v785 = vpop.f32.mrf.mxu0
    %v786 = vpop.f32.mrf.mxu0
    %v787 = vpop.f32.mrf.mxu0
    %788 = vdwg.mxu0
    %v789 = vld [vmem:[%s3] sm:$0x1]
    %v790 = vadd.f32 %v544, %v743
    %v791 = vadd.f32 %v545, %v745
    %v792 = vxor.u32 %v790, 2147483648
    %v793 = vxor.u32 %v791, 2147483648
    %v794 = vmul.f32 %v792, 1.442695
    %v795 = vpow.pop %v794
    %v796 = vmul.f32 %v793, 1.442695
    %v797 = vpow.pop %v796
    %v798 = vadd.f32 %v795, 1.0
    %v799 = vadd.f32 %v797, 1.0
    %v800 = vrcp.pop %v798
    %v801 = vmul.f32 1.0, %v800
    %v802 = vrcp.pop %v799
    %v803 = vmul.f32 1.0, %v802
    %v805 = vlaneseq
    %v806 = vshrl.u32 %v805, 7
    %v807 = vsub.s32 0, %v806
    %v808 = vrot.slane %v789, %v807
    %v810 = vadd.f32 %v784, %v808
    %v811 = vmul.f32 %v801, %v810
    %v812 = vadd.f32 %v546, %v811
    %v813 = vtanh.pop %v812
    %v814 = vsub.f32 %v538, %v813
    %v815 = vmul.f32 %v803, %v814
    %v816 = vadd.f32 %v813, %v815
    %s817 = scalar_lea.vmem [#allocation3], 16
    %818 = vst [vmem:[%s817] sm:$0xff] %v816
    %s819 = smul.u32 3, 3
    %s820 = smul.addr %s819, 8
    %s821 = scalar_lea.vmem [#allocation2], %s820
    %v822 = vld [vmem:[%s821] sm:$0xff]
    %v823 = vld [vmem:[%s821 + $0x8] sm:$0xff]
    %v824 = vld [vmem:[%s821 + $0x10] sm:$0xff]
    %v825 = vpack.c.bf16 %v816, %v816
    %v826 = vld [vmem:[#allocation5] sm:$0xff]
    %v827 = vld [vmem:[#allocation5 + $0x8] sm:$0xf]
    %v828 = vld [vmem:[#allocation5 + $0xc] sm:$0xff]
    %v829 = vld [vmem:[#allocation5 + $0x14] sm:$0xf]
    %v830 = vld [vmem:[#allocation5 + $0x18] sm:$0xff]
    %v831 = vld [vmem:[#allocation5 + $0x20] sm:$0xf]
    %v832 = vld [vmem:[#allocation5 + $0x24] sm:$0xff]
    %v833 = vld [vmem:[#allocation5 + $0x2c] sm:$0xf]
    %v834 = vld [vmem:[#allocation5 + $0x30] sm:$0xff]
    %v835 = vld [vmem:[#allocation5 + $0x38] sm:$0xf]
    %v836 = vld [vmem:[#allocation5 + $0x3c] sm:$0xff]
    %v837 = vld [vmem:[#allocation5 + $0x44] sm:$0xf]
    %v838 = vld [vmem:[#allocation5 + $0x48] sm:$0xff]
    %v839 = vld [vmem:[#allocation5 + $0x50] sm:$0xf]
    %v840 = vld [vmem:[#allocation5 + $0x54] sm:$0xff]
    %v841 = vld [vmem:[#allocation5 + $0x5c] sm:$0xf]
    %v842 = vld [vmem:[#allocation5 + $0x60] sm:$0xff]
    %v843 = vld [vmem:[#allocation5 + $0x68] sm:$0xf]
    %v844 = vld [vmem:[#allocation5 + $0x6c] sm:$0xff]
    %v845 = vld [vmem:[#allocation5 + $0x74] sm:$0xf]
    %v846 = vld [vmem:[#allocation5 + $0x78] sm:$0xff]
    %v847 = vld [vmem:[#allocation5 + $0x80] sm:$0xf]
    %v848 = vld [vmem:[#allocation5 + $0x84] sm:$0xff]
    %v849 = vld [vmem:[#allocation5 + $0x8c] sm:$0xf]
    %v850 = vld [vmem:[#allocation5 + $0x90] sm:$0xff]
    %v851 = vld [vmem:[#allocation5 + $0x98] sm:$0xf]
    %v852 = vld [vmem:[#allocation5 + $0x9c] sm:$0xff]
    %v853 = vld [vmem:[#allocation5 + $0xa4] sm:$0xf]
    %v854 = vld [vmem:[#allocation5 + $0xa8] sm:$0xff]
    %v855 = vld [vmem:[#allocation5 + $0xb0] sm:$0xf]
    %v856 = vld [vmem:[#allocation5 + $0xb4] sm:$0xff]
    %v857 = vld [vmem:[#allocation5 + $0xbc] sm:$0xf]
    %v890 = vunpack.c.l.b16 %v826
    %v891 = vunpack.c.h.b16 %v826
    %v892 = vunpack.c.l.b16 %v827
    %v893 = vunpack.c.l.b16 %v828
    %v894 = vunpack.c.h.b16 %v828
    %v895 = vunpack.c.l.b16 %v829
    %v896 = vunpack.c.l.b16 %v830
    %v897 = vunpack.c.h.b16 %v830
    %v898 = vunpack.c.l.b16 %v831
    %v899 = vunpack.c.l.b16 %v832
    %v900 = vunpack.c.h.b16 %v832
    %v901 = vunpack.c.l.b16 %v833
    %v902 = vunpack.c.l.b16 %v834
    %v903 = vunpack.c.h.b16 %v834
    %v904 = vunpack.c.l.b16 %v835
    %v905 = vunpack.c.l.b16 %v836
    %v906 = vunpack.c.h.b16 %v836
    %v907 = vunpack.c.l.b16 %v837
    %v908 = vunpack.c.l.b16 %v838
    %v909 = vunpack.c.h.b16 %v838
    %v910 = vunpack.c.l.b16 %v839
    %v911 = vunpack.c.l.b16 %v840
    %v912 = vunpack.c.h.b16 %v840
    %v913 = vunpack.c.l.b16 %v841
    %v914 = vunpack.c.l.b16 %v842
    %v915 = vunpack.c.h.b16 %v842
    %v916 = vunpack.c.l.b16 %v843
    %v917 = vunpack.c.l.b16 %v844
    %v918 = vunpack.c.h.b16 %v844
    %v919 = vunpack.c.l.b16 %v845
    %v920 = vunpack.c.l.b16 %v846
    %v921 = vunpack.c.h.b16 %v846
    %v922 = vunpack.c.l.b16 %v847
    %v923 = vunpack.c.l.b16 %v848
    %v924 = vunpack.c.h.b16 %v848
    %v925 = vunpack.c.l.b16 %v849
    %v926 = vunpack.c.l.b16 %v850
    %v927 = vunpack.c.h.b16 %v850
    %v928 = vunpack.c.l.b16 %v851
    %v929 = vunpack.c.l.b16 %v852
    %v930 = vunpack.c.h.b16 %v852
    %v931 = vunpack.c.l.b16 %v853
    %v932 = vunpack.c.l.b16 %v854
    %v933 = vunpack.c.h.b16 %v854
    %v934 = vunpack.c.l.b16 %v855
    %v935 = vunpack.c.l.b16 %v856
    %v936 = vunpack.c.h.b16 %v856
    %v937 = vunpack.c.l.b16 %v857
    %v938 = vpack.c.b16 %v893, %v890
    %v939 = vpack.c.b16 %v894, %v891
    %v940 = vpack.c.b16 %v895, %v892
    %v941 = vpack.c.b16 %v899, %v896
    %v942 = vpack.c.b16 %v900, %v897
    %v943 = vpack.c.b16 %v901, %v898
    %v944 = vpack.c.b16 %v905, %v902
    %v945 = vpack.c.b16 %v906, %v903
    %v946 = vpack.c.b16 %v907, %v904
    %v947 = vpack.c.b16 %v911, %v908
    %v948 = vpack.c.b16 %v912, %v909
    %v949 = vpack.c.b16 %v913, %v910
    %v950 = vpack.c.b16 %v917, %v914
    %v951 = vpack.c.b16 %v918, %v915
    %v952 = vpack.c.b16 %v919, %v916
    %v953 = vpack.c.b16 %v923, %v920
    %v954 = vpack.c.b16 %v924, %v921
    %v955 = vpack.c.b16 %v925, %v922
    %v956 = vpack.c.b16 %v929, %v926
    %v957 = vpack.c.b16 %v930, %v927
    %v958 = vpack.c.b16 %v931, %v928
    %v959 = vpack.c.b16 %v935, %v932
    %v960 = vpack.c.b16 %v936, %v933
    %v961 = vpack.c.b16 %v937, %v934
    %986 = vmatprep.subr.bf16.mxu0 %v960
    %987 = vmatpush1.bf16.msra.mxu0 %v959
    %988 = vmatprep.subr.bf16.mxu0 %v957
    %989 = vmatpush1.bf16.msra.mxu0 %v956
    %990 = vmatprep.subr.bf16.mxu0 %v954
    %991 = vmatpush1.bf16.msra.mxu0 %v953
    %992 = vmatprep.subr.bf16.mxu0 %v951
    %993 = vmatpush1.bf16.msra.mxu0 %v950
    %994 = vmatprep.subr.bf16.mxu0 %v948
    %995 = vmatpush1.bf16.msra.mxu0 %v947
    %996 = vmatprep.subr.bf16.mxu0 %v945
    %997 = vmatpush1.bf16.msra.mxu0 %v944
    %998 = vmatprep.subr.bf16.mxu0 %v942
    %999 = vmatpush1.bf16.msra.mxu0 %v941
    %1000 = vmatprep.subr.bf16.mxu0 %v939
    %1001 = vmatpush1.bf16.msra.mxu0 %v938
    %1002 = vmatprep.subr.bf16.mxu0 0
    %1003 = vmatpush2.bf16.msra.mxu0 0
    %1004 = vmatprep.subr.bf16.mxu0 0
    %1005 = vmatpush2.bf16.msra.mxu0 0
    %1006 = vmatprep.subr.bf16.mxu0 0
    %1007 = vmatpush2.bf16.msra.mxu0 0
    %1008 = vmatprep.subr.bf16.mxu0 0
    %1009 = vmatpush2.bf16.msra.mxu0 0
    %1010 = vmatprep.subr.bf16.mxu0 0
    %1011 = vmatpush2.bf16.msra.mxu0 0
    %1012 = vmatprep.subr.bf16.mxu0 0
    %1013 = vmatpush2.bf16.msra.mxu0 0
    %1014 = vmatprep.subr.bf16.mxu0 0
    %1015 = vmatpush2.bf16.msra.mxu0 0
    %1016 = vmatprep.subr.bf16.mxu0 0
    %1017 = vmatpush2.bf16.msra.mxu0 0
    %1018 = vmatprep.mubr.bf16.mxu0 0
    %1019 = vmatmul.mubr.bf16.gmra.mxu0 %v825
    %v1020 = vpop.f32.mrf.mxu0
    %v1021 = vadd.f32 0.0, %v1020
    %v1022 = vpop.f32.mrf.mxu0
    %v1023 = vadd.f32 0.0, %v1022
    %v1024 = vpop.f32.mrf.mxu0
    %v1025 = vpop.f32.mrf.mxu0
    %1026 = vdwg.mxu0
    %1027 = vmatprep.subr.bf16.mxu0 0
    %1028 = vmatpush1.bf16.msra.mxu0 %v961
    %1029 = vmatprep.subr.bf16.mxu0 0
    %1030 = vmatpush1.bf16.msra.mxu0 %v958
    %1031 = vmatprep.subr.bf16.mxu0 0
    %1032 = vmatpush1.bf16.msra.mxu0 %v955
    %1033 = vmatprep.subr.bf16.mxu0 0
    %1034 = vmatpush1.bf16.msra.mxu0 %v952
    %1035 = vmatprep.subr.bf16.mxu0 0
    %1036 = vmatpush1.bf16.msra.mxu0 %v949
    %1037 = vmatprep.subr.bf16.mxu0 0
    %1038 = vmatpush1.bf16.msra.mxu0 %v946
    %1039 = vmatprep.subr.bf16.mxu0 0
    %1040 = vmatpush1.bf16.msra.mxu0 %v943
    %1041 = vmatprep.subr.bf16.mxu0 0
    %1042 = vmatpush1.bf16.msra.mxu0 %v940
    %1043 = vmatprep.subr.bf16.mxu0 0
    %1044 = vmatpush2.bf16.msra.mxu0 0
    %1045 = vmatprep.subr.bf16.mxu0 0
    %1046 = vmatpush2.bf16.msra.mxu0 0
    %1047 = vmatprep.subr.bf16.mxu0 0
    %1048 = vmatpush2.bf16.msra.mxu0 0
    %1049 = vmatprep.subr.bf16.mxu0 0
    %1050 = vmatpush2.bf16.msra.mxu0 0
    %1051 = vmatprep.subr.bf16.mxu0 0
    %1052 = vmatpush2.bf16.msra.mxu0 0
    %1053 = vmatprep.subr.bf16.mxu0 0
    %1054 = vmatpush2.bf16.msra.mxu0 0
    %1055 = vmatprep.subr.bf16.mxu0 0
    %1056 = vmatpush2.bf16.msra.mxu0 0
    %1057 = vmatprep.subr.bf16.mxu0 0
    %1058 = vmatpush2.bf16.msra.mxu0 0
    %1059 = vmatprep.mubr.bf16.mxu0 0
    %1060 = vmatmul.mubr.bf16.gmra.mxu0 %v825
    %v1061 = vpop.f32.mrf.mxu0
    %v1062 = vadd.f32 0.0, %v1061
    %v1063 = vpop.f32.mrf.mxu0
    %v1064 = vpop.f32.mrf.mxu0
    %v1065 = vpop.f32.mrf.mxu0
    %1066 = vdwg.mxu0
    %v1067 = vld [vmem:[%s3] sm:$0x1]
    %v1068 = vadd.f32 %v822, %v1021
    %v1069 = vadd.f32 %v823, %v1023
    %v1070 = vxor.u32 %v1068, 2147483648
    %v1071 = vxor.u32 %v1069, 2147483648
    %v1072 = vmul.f32 %v1070, 1.442695
    %v1073 = vpow.pop %v1072
    %v1074 = vmul.f32 %v1071, 1.442695
    %v1075 = vpow.pop %v1074
    %v1076 = vadd.f32 %v1073, 1.0
    %v1077 = vadd.f32 %v1075, 1.0
    %v1078 = vrcp.pop %v1076
    %v1079 = vmul.f32 1.0, %v1078
    %v1080 = vrcp.pop %v1077
    %v1081 = vmul.f32 1.0, %v1080
    %v1083 = vlaneseq
    %v1084 = vshrl.u32 %v1083, 7
    %v1085 = vsub.s32 0, %v1084
    %v1086 = vrot.slane %v1067, %v1085
    %v1088 = vadd.f32 %v1062, %v1086
    %v1089 = vmul.f32 %v1079, %v1088
    %v1090 = vadd.f32 %v824, %v1089
    %v1091 = vtanh.pop %v1090
    %v1092 = vsub.f32 %v816, %v1091
    %v1093 = vmul.f32 %v1081, %v1092
    %v1094 = vadd.f32 %v1091, %v1093
    %s1095 = scalar_lea.vmem [#allocation3], 24
    %1096 = vst [vmem:[%s1095] sm:$0xff] %v1094
    %s1097 = smul.u32 4, 3
    %s1098 = smul.addr %s1097, 8
    %s1099 = scalar_lea.vmem [#allocation2], %s1098
    %v1100 = vld [vmem:[%s1099] sm:$0xff]
    %v1101 = vld [vmem:[%s1099 + $0x8] sm:$0xff]
    %v1102 = vld [vmem:[%s1099 + $0x10] sm:$0xff]
    %v1103 = vpack.c.bf16 %v1094, %v1094
    %v1104 = vld [vmem:[#allocation5] sm:$0xff]
    %v1105 = vld [vmem:[#allocation5 + $0x8] sm:$0xf]
    %v1106 = vld [vmem:[#allocation5 + $0xc] sm:$0xff]
    %v1107 = vld [vmem:[#allocation5 + $0x14] sm:$0xf]
    %v1108 = vld [vmem:[#allocation5 + $0x18] sm:$0xff]
    %v1109 = vld [vmem:[#allocation5 + $0x20] sm:$0xf]
    %v1110 = vld [vmem:[#allocation5 + $0x24] sm:$0xff]
    %v1111 = vld [vmem:[#allocation5 + $0x2c] sm:$0xf]
    %v1112 = vld [vmem:[#allocation5 + $0x30] sm:$0xff]
    %v1113 = vld [vmem:[#allocation5 + $0x38] sm:$0xf]
    %v1114 = vld [vmem:[#allocation5 + $0x3c] sm:$0xff]
    %v1115 = vld [vmem:[#allocation5 + $0x44] sm:$0xf]
    %v1116 = vld [vmem:[#allocation5 + $0x48] sm:$0xff]
    %v1117 = vld [vmem:[#allocation5 + $0x50] sm:$0xf]
    %v1118 = vld [vmem:[#allocation5 + $0x54] sm:$0xff]
    %v1119 = vld [vmem:[#allocation5 + $0x5c] sm:$0xf]
    %v1120 = vld [vmem:[#allocation5 + $0x60] sm:$0xff]
    %v1121 = vld [vmem:[#allocation5 + $0x68] sm:$0xf]
    %v1122 = vld [vmem:[#allocation5 + $0x6c] sm:$0xff]
    %v1123 = vld [vmem:[#allocation5 + $0x74] sm:$0xf]
    %v1124 = vld [vmem:[#allocation5 + $0x78] sm:$0xff]
    %v1125 = vld [vmem:[#allocation5 + $0x80] sm:$0xf]
    %v1126 = vld [vmem:[#allocation5 + $0x84] sm:$0xff]
    %v1127 = vld [vmem:[#allocation5 + $0x8c] sm:$0xf]
    %v1128 = vld [vmem:[#allocation5 + $0x90] sm:$0xff]
    %v1129 = vld [vmem:[#allocation5 + $0x98] sm:$0xf]
    %v1130 = vld [vmem:[#allocation5 + $0x9c] sm:$0xff]
    %v1131 = vld [vmem:[#allocation5 + $0xa4] sm:$0xf]
    %v1132 = vld [vmem:[#allocation5 + $0xa8] sm:$0xff]
    %v1133 = vld [vmem:[#allocation5 + $0xb0] sm:$0xf]
    %v1134 = vld [vmem:[#allocation5 + $0xb4] sm:$0xff]
    %v1135 = vld [vmem:[#allocation5 + $0xbc] sm:$0xf]
    %v1168 = vunpack.c.l.b16 %v1104
    %v1169 = vunpack.c.h.b16 %v1104
    %v1170 = vunpack.c.l.b16 %v1105
    %v1171 = vunpack.c.l.b16 %v1106
    %v1172 = vunpack.c.h.b16 %v1106
    %v1173 = vunpack.c.l.b16 %v1107
    %v1174 = vunpack.c.l.b16 %v1108
    %v1175 = vunpack.c.h.b16 %v1108
    %v1176 = vunpack.c.l.b16 %v1109
    %v1177 = vunpack.c.l.b16 %v1110
    %v1178 = vunpack.c.h.b16 %v1110
    %v1179 = vunpack.c.l.b16 %v1111
    %v1180 = vunpack.c.l.b16 %v1112
    %v1181 = vunpack.c.h.b16 %v1112
    %v1182 = vunpack.c.l.b16 %v1113
    %v1183 = vunpack.c.l.b16 %v1114
    %v1184 = vunpack.c.h.b16 %v1114
    %v1185 = vunpack.c.l.b16 %v1115
    %v1186 = vunpack.c.l.b16 %v1116
    %v1187 = vunpack.c.h.b16 %v1116
    %v1188 = vunpack.c.l.b16 %v1117
    %v1189 = vunpack.c.l.b16 %v1118
    %v1190 = vunpack.c.h.b16 %v1118
    %v1191 = vunpack.c.l.b16 %v1119
    %v1192 = vunpack.c.l.b16 %v1120
    %v1193 = vunpack.c.h.b16 %v1120
    %v1194 = vunpack.c.l.b16 %v1121
    %v1195 = vunpack.c.l.b16 %v1122
    %v1196 = vunpack.c.h.b16 %v1122
    %v1197 = vunpack.c.l.b16 %v1123
    %v1198 = vunpack.c.l.b16 %v1124
    %v1199 = vunpack.c.h.b16 %v1124
    %v1200 = vunpack.c.l.b16 %v1125
    %v1201 = vunpack.c.l.b16 %v1126
    %v1202 = vunpack.c.h.b16 %v1126
    %v1203 = vunpack.c.l.b16 %v1127
    %v1204 = vunpack.c.l.b16 %v1128
    %v1205 = vunpack.c.h.b16 %v1128
    %v1206 = vunpack.c.l.b16 %v1129
    %v1207 = vunpack.c.l.b16 %v1130
    %v1208 = vunpack.c.h.b16 %v1130
    %v1209 = vunpack.c.l.b16 %v1131
    %v1210 = vunpack.c.l.b16 %v1132
    %v1211 = vunpack.c.h.b16 %v1132
    %v1212 = vunpack.c.l.b16 %v1133
    %v1213 = vunpack.c.l.b16 %v1134
    %v1214 = vunpack.c.h.b16 %v1134
    %v1215 = vunpack.c.l.b16 %v1135
    %v1216 = vpack.c.b16 %v1171, %v1168
    %v1217 = vpack.c.b16 %v1172, %v1169
    %v1218 = vpack.c.b16 %v1173, %v1170
    %v1219 = vpack.c.b16 %v1177, %v1174
    %v1220 = vpack.c.b16 %v1178, %v1175
    %v1221 = vpack.c.b16 %v1179, %v1176
    %v1222 = vpack.c.b16 %v1183, %v1180
    %v1223 = vpack.c.b16 %v1184, %v1181
    %v1224 = vpack.c.b16 %v1185, %v1182
    %v1225 = vpack.c.b16 %v1189, %v1186
    %v1226 = vpack.c.b16 %v1190, %v1187
    %v1227 = vpack.c.b16 %v1191, %v1188
    %v1228 = vpack.c.b16 %v1195, %v1192
    %v1229 = vpack.c.b16 %v1196, %v1193
    %v1230 = vpack.c.b16 %v1197, %v1194
    %v1231 = vpack.c.b16 %v1201, %v1198
    %v1232 = vpack.c.b16 %v1202, %v1199
    %v1233 = vpack.c.b16 %v1203, %v1200
    %v1234 = vpack.c.b16 %v1207, %v1204
    %v1235 = vpack.c.b16 %v1208, %v1205
    %v1236 = vpack.c.b16 %v1209, %v1206
    %v1237 = vpack.c.b16 %v1213, %v1210
    %v1238 = vpack.c.b16 %v1214, %v1211
    %v1239 = vpack.c.b16 %v1215, %v1212
    %1264 = vmatprep.subr.bf16.mxu0 %v1238
    %1265 = vmatpush1.bf16.msra.mxu0 %v1237
    %1266 = vmatprep.subr.bf16.mxu0 %v1235
    %1267 = vmatpush1.bf16.msra.mxu0 %v1234
    %1268 = vmatprep.subr.bf16.mxu0 %v1232
    %1269 = vmatpush1.bf16.msra.mxu0 %v1231
    %1270 = vmatprep.subr.bf16.mxu0 %v1229
    %1271 = vmatpush1.bf16.msra.mxu0 %v1228
    %1272 = vmatprep.subr.bf16.mxu0 %v1226
    %1273 = vmatpush1.bf16.msra.mxu0 %v1225
    %1274 = vmatprep.subr.bf16.mxu0 %v1223
    %1275 = vmatpush1.bf16.msra.mxu0 %v1222
    %1276 = vmatprep.subr.bf16.mxu0 %v1220
    %1277 = vmatpush1.bf16.msra.mxu0 %v1219
    %1278 = vmatprep.subr.bf16.mxu0 %v1217
    %1279 = vmatpush1.bf16.msra.mxu0 %v1216
    %1280 = vmatprep.subr.bf16.mxu0 0
    %1281 = vmatpush2.bf16.msra.mxu0 0
    %1282 = vmatprep.subr.bf16.mxu0 0
    %1283 = vmatpush2.bf16.msra.mxu0 0
    %1284 = vmatprep.subr.bf16.mxu0 0
    %1285 = vmatpush2.bf16.msra.mxu0 0
    %1286 = vmatprep.subr.bf16.mxu0 0
    %1287 = vmatpush2.bf16.msra.mxu0 0
    %1288 = vmatprep.subr.bf16.mxu0 0
    %1289 = vmatpush2.bf16.msra.mxu0 0
    %1290 = vmatprep.subr.bf16.mxu0 0
    %1291 = vmatpush2.bf16.msra.mxu0 0
    %1292 = vmatprep.subr.bf16.mxu0 0
    %1293 = vmatpush2.bf16.msra.mxu0 0
    %1294 = vmatprep.subr.bf16.mxu0 0
    %1295 = vmatpush2.bf16.msra.mxu0 0
    %1296 = vmatprep.mubr.bf16.mxu0 0
    %1297 = vmatmul.mubr.bf16.gmra.mxu0 %v1103
    %v1298 = vpop.f32.mrf.mxu0
    %v1299 = vadd.f32 0.0, %v1298
    %v1300 = vpop.f32.mrf.mxu0
    %v1301 = vadd.f32 0.0, %v1300
    %v1302 = vpop.f32.mrf.mxu0
    %v1303 = vpop.f32.mrf.mxu0
    %1304 = vdwg.mxu0
    %1305 = vmatprep.subr.bf16.mxu0 0
    %1306 = vmatpush1.bf16.msra.mxu0 %v1239
    %1307 = vmatprep.subr.bf16.mxu0 0
    %1308 = vmatpush1.bf16.msra.mxu0 %v1236
    %1309 = vmatprep.subr.bf16.mxu0 0
    %1310 = vmatpush1.bf16.msra.mxu0 %v1233
    %1311 = vmatprep.subr.bf16.mxu0 0
    %1312 = vmatpush1.bf16.msra.mxu0 %v1230
    %1313 = vmatprep.subr.bf16.mxu0 0
    %1314 = vmatpush1.bf16.msra.mxu0 %v1227
    %1315 = vmatprep.subr.bf16.mxu0 0
    %1316 = vmatpush1.bf16.msra.mxu0 %v1224
    %1317 = vmatprep.subr.bf16.mxu0 0
    %1318 = vmatpush1.bf16.msra.mxu0 %v1221
    %1319 = vmatprep.subr.bf16.mxu0 0
    %1320 = vmatpush1.bf16.msra.mxu0 %v1218
    %1321 = vmatprep.subr.bf16.mxu0 0
    %1322 = vmatpush2.bf16.msra.mxu0 0
    %1323 = vmatprep.subr.bf16.mxu0 0
    %1324 = vmatpush2.bf16.msra.mxu0 0
    %1325 = vmatprep.subr.bf16.mxu0 0
    %1326 = vmatpush2.bf16.msra.mxu0 0
    %1327 = vmatprep.subr.bf16.mxu0 0
    %1328 = vmatpush2.bf16.msra.mxu0 0
    %1329 = vmatprep.subr.bf16.mxu0 0
    %1330 = vmatpush2.bf16.msra.mxu0 0
    %1331 = vmatprep.subr.bf16.mxu0 0
    %1332 = vmatpush2.bf16.msra.mxu0 0
    %1333 = vmatprep.subr.bf16.mxu0 0
    %1334 = vmatpush2.bf16.msra.mxu0 0
    %1335 = vmatprep.subr.bf16.mxu0 0
    %1336 = vmatpush2.bf16.msra.mxu0 0
    %1337 = vmatprep.mubr.bf16.mxu0 0
    %1338 = vmatmul.mubr.bf16.gmra.mxu0 %v1103
    %v1339 = vpop.f32.mrf.mxu0
    %v1340 = vadd.f32 0.0, %v1339
    %v1341 = vpop.f32.mrf.mxu0
    %v1342 = vpop.f32.mrf.mxu0
    %v1343 = vpop.f32.mrf.mxu0
    %1344 = vdwg.mxu0
    %v1345 = vld [vmem:[%s3] sm:$0x1]
    %v1346 = vadd.f32 %v1100, %v1299
    %v1347 = vadd.f32 %v1101, %v1301
    %v1348 = vxor.u32 %v1346, 2147483648
    %v1349 = vxor.u32 %v1347, 2147483648
    %v1350 = vmul.f32 %v1348, 1.442695
    %v1351 = vpow.pop %v1350
    %v1352 = vmul.f32 %v1349, 1.442695
    %v1353 = vpow.pop %v1352
    %v1354 = vadd.f32 %v1351, 1.0
    %v1355 = vadd.f32 %v1353, 1.0
    %v1356 = vrcp.pop %v1354
    %v1357 = vmul.f32 1.0, %v1356
    %v1358 = vrcp.pop %v1355
    %v1359 = vmul.f32 1.0, %v1358
    %v1361 = vlaneseq
    %v1362 = vshrl.u32 %v1361, 7
    %v1363 = vsub.s32 0, %v1362
    %v1364 = vrot.slane %v1345, %v1363
    %v1366 = vadd.f32 %v1340, %v1364
    %v1367 = vmul.f32 %v1357, %v1366
    %v1368 = vadd.f32 %v1102, %v1367
    %v1369 = vtanh.pop %v1368
    %v1370 = vsub.f32 %v1094, %v1369
    %v1371 = vmul.f32 %v1359, %v1370
    %v1372 = vadd.f32 %v1369, %v1371
    %s1373 = scalar_lea.vmem [#allocation3], 32
    %1374 = vst [vmem:[%s1373] sm:$0xff] %v1372
    %s1375 = smul.u32 5, 3
    %s1376 = smul.addr %s1375, 8
    %s1377 = scalar_lea.vmem [#allocation2], %s1376
    %v1378 = vld [vmem:[%s1377] sm:$0xff]
    %v1379 = vld [vmem:[%s1377 + $0x8] sm:$0xff]
    %v1380 = vld [vmem:[%s1377 + $0x10] sm:$0xff]
    %v1381 = vpack.c.bf16 %v1372, %v1372
    %v1382 = vld [vmem:[#allocation5] sm:$0xff]
    %v1383 = vld [vmem:[#allocation5 + $0x8] sm:$0xf]
    %v1384 = vld [vmem:[#allocation5 + $0xc] sm:$0xff]
    %v1385 = vld [vmem:[#allocation5 + $0x14] sm:$0xf]
    %v1386 = vld [vmem:[#allocation5 + $0x18] sm:$0xff]
    %v1387 = vld [vmem:[#allocation5 + $0x20] sm:$0xf]
    %v1388 = vld [vmem:[#allocation5 + $0x24] sm:$0xff]
    %v1389 = vld [vmem:[#allocation5 + $0x2c] sm:$0xf]
    %v1390 = vld [vmem:[#allocation5 + $0x30] sm:$0xff]
    %v1391 = vld [vmem:[#allocation5 + $0x38] sm:$0xf]
    %v1392 = vld [vmem:[#allocation5 + $0x3c] sm:$0xff]
    %v1393 = vld [vmem:[#allocation5 + $0x44] sm:$0xf]
    %v1394 = vld [vmem:[#allocation5 + $0x48] sm:$0xff]
    %v1395 = vld [vmem:[#allocation5 + $0x50] sm:$0xf]
    %v1396 = vld [vmem:[#allocation5 + $0x54] sm:$0xff]
    %v1397 = vld [vmem:[#allocation5 + $0x5c] sm:$0xf]
    %v1398 = vld [vmem:[#allocation5 + $0x60] sm:$0xff]
    %v1399 = vld [vmem:[#allocation5 + $0x68] sm:$0xf]
    %v1400 = vld [vmem:[#allocation5 + $0x6c] sm:$0xff]
    %v1401 = vld [vmem:[#allocation5 + $0x74] sm:$0xf]
    %v1402 = vld [vmem:[#allocation5 + $0x78] sm:$0xff]
    %v1403 = vld [vmem:[#allocation5 + $0x80] sm:$0xf]
    %v1404 = vld [vmem:[#allocation5 + $0x84] sm:$0xff]
    %v1405 = vld [vmem:[#allocation5 + $0x8c] sm:$0xf]
    %v1406 = vld [vmem:[#allocation5 + $0x90] sm:$0xff]
    %v1407 = vld [vmem:[#allocation5 + $0x98] sm:$0xf]
    %v1408 = vld [vmem:[#allocation5 + $0x9c] sm:$0xff]
    %v1409 = vld [vmem:[#allocation5 + $0xa4] sm:$0xf]
    %v1410 = vld [vmem:[#allocation5 + $0xa8] sm:$0xff]
    %v1411 = vld [vmem:[#allocation5 + $0xb0] sm:$0xf]
    %v1412 = vld [vmem:[#allocation5 + $0xb4] sm:$0xff]
    %v1413 = vld [vmem:[#allocation5 + $0xbc] sm:$0xf]
    %v1446 = vunpack.c.l.b16 %v1382
    %v1447 = vunpack.c.h.b16 %v1382
    %v1448 = vunpack.c.l.b16 %v1383
    %v1449 = vunpack.c.l.b16 %v1384
    %v1450 = vunpack.c.h.b16 %v1384
    %v1451 = vunpack.c.l.b16 %v1385
    %v1452 = vunpack.c.l.b16 %v1386
    %v1453 = vunpack.c.h.b16 %v1386
    %v1454 = vunpack.c.l.b16 %v1387
    %v1455 = vunpack.c.l.b16 %v1388
    %v1456 = vunpack.c.h.b16 %v1388
    %v1457 = vunpack.c.l.b16 %v1389
    %v1458 = vunpack.c.l.b16 %v1390
    %v1459 = vunpack.c.h.b16 %v1390
    %v1460 = vunpack.c.l.b16 %v1391
    %v1461 = vunpack.c.l.b16 %v1392
    %v1462 = vunpack.c.h.b16 %v1392
    %v1463 = vunpack.c.l.b16 %v1393
    %v1464 = vunpack.c.l.b16 %v1394
    %v1465 = vunpack.c.h.b16 %v1394
    %v1466 = vunpack.c.l.b16 %v1395
    %v1467 = vunpack.c.l.b16 %v1396
    %v1468 = vunpack.c.h.b16 %v1396
    %v1469 = vunpack.c.l.b16 %v1397
    %v1470 = vunpack.c.l.b16 %v1398
    %v1471 = vunpack.c.h.b16 %v1398
    %v1472 = vunpack.c.l.b16 %v1399
    %v1473 = vunpack.c.l.b16 %v1400
    %v1474 = vunpack.c.h.b16 %v1400
    %v1475 = vunpack.c.l.b16 %v1401
    %v1476 = vunpack.c.l.b16 %v1402
    %v1477 = vunpack.c.h.b16 %v1402
    %v1478 = vunpack.c.l.b16 %v1403
    %v1479 = vunpack.c.l.b16 %v1404
    %v1480 = vunpack.c.h.b16 %v1404
    %v1481 = vunpack.c.l.b16 %v1405
    %v1482 = vunpack.c.l.b16 %v1406
    %v1483 = vunpack.c.h.b16 %v1406
    %v1484 = vunpack.c.l.b16 %v1407
    %v1485 = vunpack.c.l.b16 %v1408
    %v1486 = vunpack.c.h.b16 %v1408
    %v1487 = vunpack.c.l.b16 %v1409
    %v1488 = vunpack.c.l.b16 %v1410
    %v1489 = vunpack.c.h.b16 %v1410
    %v1490 = vunpack.c.l.b16 %v1411
    %v1491 = vunpack.c.l.b16 %v1412
    %v1492 = vunpack.c.h.b16 %v1412
    %v1493 = vunpack.c.l.b16 %v1413
    %v1494 = vpack.c.b16 %v1449, %v1446
    %v1495 = vpack.c.b16 %v1450, %v1447
    %v1496 = vpack.c.b16 %v1451, %v1448
    %v1497 = vpack.c.b16 %v1455, %v1452
    %v1498 = vpack.c.b16 %v1456, %v1453
    %v1499 = vpack.c.b16 %v1457, %v1454
    %v1500 = vpack.c.b16 %v1461, %v1458
    %v1501 = vpack.c.b16 %v1462, %v1459
    %v1502 = vpack.c.b16 %v1463, %v1460
    %v1503 = vpack.c.b16 %v1467, %v1464
    %v1504 = vpack.c.b16 %v1468, %v1465
    %v1505 = vpack.c.b16 %v1469, %v1466
    %v1506 = vpack.c.b16 %v1473, %v1470
    %v1507 = vpack.c.b16 %v1474, %v1471
    %v1508 = vpack.c.b16 %v1475, %v1472
    %v1509 = vpack.c.b16 %v1479, %v1476
    %v1510 = vpack.c.b16 %v1480, %v1477
    %v1511 = vpack.c.b16 %v1481, %v1478
    %v1512 = vpack.c.b16 %v1485, %v1482
    %v1513 = vpack.c.b16 %v1486, %v1483
    %v1514 = vpack.c.b16 %v1487, %v1484
    %v1515 = vpack.c.b16 %v1491, %v1488
    %v1516 = vpack.c.b16 %v1492, %v1489
    %v1517 = vpack.c.b16 %v1493, %v1490
    %1542 = vmatprep.subr.bf16.mxu0 %v1516
    %1543 = vmatpush1.bf16.msra.mxu0 %v1515
    %1544 = vmatprep.subr.bf16.mxu0 %v1513
    %1545 = vmatpush1.bf16.msra.mxu0 %v1512
    %1546 = vmatprep.subr.bf16.mxu0 %v1510
    %1547 = vmatpush1.bf16.msra.mxu0 %v1509
    %1548 = vmatprep.subr.bf16.mxu0 %v1507
    %1549 = vmatpush1.bf16.msra.mxu0 %v1506
    %1550 = vmatprep.subr.bf16.mxu0 %v1504
    %1551 = vmatpush1.bf16.msra.mxu0 %v1503
    %1552 = vmatprep.subr.bf16.mxu0 %v1501
    %1553 = vmatpush1.bf16.msra.mxu0 %v1500
    %1554 = vmatprep.subr.bf16.mxu0 %v1498
    %1555 = vmatpush1.bf16.msra.mxu0 %v1497
    %1556 = vmatprep.subr.bf16.mxu0 %v1495
    %1557 = vmatpush1.bf16.msra.mxu0 %v1494
    %1558 = vmatprep.subr.bf16.mxu0 0
    %1559 = vmatpush2.bf16.msra.mxu0 0
    %1560 = vmatprep.subr.bf16.mxu0 0
    %1561 = vmatpush2.bf16.msra.mxu0 0
    %1562 = vmatprep.subr.bf16.mxu0 0
    %1563 = vmatpush2.bf16.msra.mxu0 0
    %1564 = vmatprep.subr.bf16.mxu0 0
    %1565 = vmatpush2.bf16.msra.mxu0 0
    %1566 = vmatprep.subr.bf16.mxu0 0
    %1567 = vmatpush2.bf16.msra.mxu0 0
    %1568 = vmatprep.subr.bf16.mxu0 0
    %1569 = vmatpush2.bf16.msra.mxu0 0
    %1570 = vmatprep.subr.bf16.mxu0 0
    %1571 = vmatpush2.bf16.msra.mxu0 0
    %1572 = vmatprep.subr.bf16.mxu0 0
    %1573 = vmatpush2.bf16.msra.mxu0 0
    %1574 = vmatprep.mubr.bf16.mxu0 0
    %1575 = vmatmul.mubr.bf16.gmra.mxu0 %v1381
    %v1576 = vpop.f32.mrf.mxu0
    %v1577 = vadd.f32 0.0, %v1576
    %v1578 = vpop.f32.mrf.mxu0
    %v1579 = vadd.f32 0.0, %v1578
    %v1580 = vpop.f32.mrf.mxu0
    %v1581 = vpop.f32.mrf.mxu0
    %1582 = vdwg.mxu0
    %1583 = vmatprep.subr.bf16.mxu0 0
    %1584 = vmatpush1.bf16.msra.mxu0 %v1517
    %1585 = vmatprep.subr.bf16.mxu0 0
    %1586 = vmatpush1.bf16.msra.mxu0 %v1514
    %1587 = vmatprep.subr.bf16.mxu0 0
    %1588 = vmatpush1.bf16.msra.mxu0 %v1511
    %1589 = vmatprep.subr.bf16.mxu0 0
    %1590 = vmatpush1.bf16.msra.mxu0 %v1508
    %1591 = vmatprep.subr.bf16.mxu0 0
    %1592 = vmatpush1.bf16.msra.mxu0 %v1505
    %1593 = vmatprep.subr.bf16.mxu0 0
    %1594 = vmatpush1.bf16.msra.mxu0 %v1502
    %1595 = vmatprep.subr.bf16.mxu0 0
    %1596 = vmatpush1.bf16.msra.mxu0 %v1499
    %1597 = vmatprep.subr.bf16.mxu0 0
    %1598 = vmatpush1.bf16.msra.mxu0 %v1496
    %1599 = vmatprep.subr.bf16.mxu0 0
    %1600 = vmatpush2.bf16.msra.mxu0 0
    %1601 = vmatprep.subr.bf16.mxu0 0
    %1602 = vmatpush2.bf16.msra.mxu0 0
    %1603 = vmatprep.subr.bf16.mxu0 0
    %1604 = vmatpush2.bf16.msra.mxu0 0
    %1605 = vmatprep.subr.bf16.mxu0 0
    %1606 = vmatpush2.bf16.msra.mxu0 0
    %1607 = vmatprep.subr.bf16.mxu0 0
    %1608 = vmatpush2.bf16.msra.mxu0 0
    %1609 = vmatprep.subr.bf16.mxu0 0
    %1610 = vmatpush2.bf16.msra.mxu0 0
    %1611 = vmatprep.subr.bf16.mxu0 0
    %1612 = vmatpush2.bf16.msra.mxu0 0
    %1613 = vmatprep.subr.bf16.mxu0 0
    %1614 = vmatpush2.bf16.msra.mxu0 0
    %1615 = vmatprep.mubr.bf16.mxu0 0
    %1616 = vmatmul.mubr.bf16.gmra.mxu0 %v1381
    %v1617 = vpop.f32.mrf.mxu0
    %v1618 = vadd.f32 0.0, %v1617
    %v1619 = vpop.f32.mrf.mxu0
    %v1620 = vpop.f32.mrf.mxu0
    %v1621 = vpop.f32.mrf.mxu0
    %1622 = vdwg.mxu0
    %v1623 = vld [vmem:[%s3] sm:$0x1]
    %v1624 = vadd.f32 %v1378, %v1577
    %v1625 = vadd.f32 %v1379, %v1579
    %v1626 = vxor.u32 %v1624, 2147483648
    %v1627 = vxor.u32 %v1625, 2147483648
    %v1628 = vmul.f32 %v1626, 1.442695
    %v1629 = vpow.pop %v1628
    %v1630 = vmul.f32 %v1627, 1.442695
    %v1631 = vpow.pop %v1630
    %v1632 = vadd.f32 %v1629, 1.0
    %v1633 = vadd.f32 %v1631, 1.0
    %v1634 = vrcp.pop %v1632
    %v1635 = vmul.f32 1.0, %v1634
    %v1636 = vrcp.pop %v1633
    %v1637 = vmul.f32 1.0, %v1636
    %v1639 = vlaneseq
    %v1640 = vshrl.u32 %v1639, 7
    %v1641 = vsub.s32 0, %v1640
    %v1642 = vrot.slane %v1623, %v1641
    %v1644 = vadd.f32 %v1618, %v1642
    %v1645 = vmul.f32 %v1635, %v1644
    %v1646 = vadd.f32 %v1380, %v1645
    %v1647 = vtanh.pop %v1646
    %v1648 = vsub.f32 %v1372, %v1647
    %v1649 = vmul.f32 %v1637, %v1648
    %v1650 = vadd.f32 %v1647, %v1649
    %s1651 = scalar_lea.vmem [#allocation3], 40
    %1652 = vst [vmem:[%s1651] sm:$0xff] %v1650
    %s1653 = smul.u32 6, 3
    %s1654 = smul.addr %s1653, 8
    %s1655 = scalar_lea.vmem [#allocation2], %s1654
    %v1656 = vld [vmem:[%s1655] sm:$0xff]
    %v1657 = vld [vmem:[%s1655 + $0x8] sm:$0xff]
    %v1658 = vld [vmem:[%s1655 + $0x10] sm:$0xff]
    %v1659 = vpack.c.bf16 %v1650, %v1650
    %v1660 = vld [vmem:[#allocation5] sm:$0xff]
    %v1661 = vld [vmem:[#allocation5 + $0x8] sm:$0xf]
    %v1662 = vld [vmem:[#allocation5 + $0xc] sm:$0xff]
    %v1663 = vld [vmem:[#allocation5 + $0x14] sm:$0xf]
    %v1664 = vld [vmem:[#allocation5 + $0x18] sm:$0xff]
    %v1665 = vld [vmem:[#allocation5 + $0x20] sm:$0xf]
    %v1666 = vld [vmem:[#allocation5 + $0x24] sm:$0xff]
    %v1667 = vld [vmem:[#allocation5 + $0x2c] sm:$0xf]
    %v1668 = vld [vmem:[#allocation5 + $0x30] sm:$0xff]
    %v1669 = vld [vmem:[#allocation5 + $0x38] sm:$0xf]
    %v1670 = vld [vmem:[#allocation5 + $0x3c] sm:$0xff]
    %v1671 = vld [vmem:[#allocation5 + $0x44] sm:$0xf]
    %v1672 = vld [vmem:[#allocation5 + $0x48] sm:$0xff]
    %v1673 = vld [vmem:[#allocation5 + $0x50] sm:$0xf]
    %v1674 = vld [vmem:[#allocation5 + $0x54] sm:$0xff]
    %v1675 = vld [vmem:[#allocation5 + $0x5c] sm:$0xf]
    %v1676 = vld [vmem:[#allocation5 + $0x60] sm:$0xff]
    %v1677 = vld [vmem:[#allocation5 + $0x68] sm:$0xf]
    %v1678 = vld [vmem:[#allocation5 + $0x6c] sm:$0xff]
    %v1679 = vld [vmem:[#allocation5 + $0x74] sm:$0xf]
    %v1680 = vld [vmem:[#allocation5 + $0x78] sm:$0xff]
    %v1681 = vld [vmem:[#allocation5 + $0x80] sm:$0xf]
    %v1682 = vld [vmem:[#allocation5 + $0x84] sm:$0xff]
    %v1683 = vld [vmem:[#allocation5 + $0x8c] sm:$0xf]
    %v1684 = vld [vmem:[#allocation5 + $0x90] sm:$0xff]
    %v1685 = vld [vmem:[#allocation5 + $0x98] sm:$0xf]
    %v1686 = vld [vmem:[#allocation5 + $0x9c] sm:$0xff]
    %v1687 = vld [vmem:[#allocation5 + $0xa4] sm:$0xf]
    %v1688 = vld [vmem:[#allocation5 + $0xa8] sm:$0xff]
    %v1689 = vld [vmem:[#allocation5 + $0xb0] sm:$0xf]
    %v1690 = vld [vmem:[#allocation5 + $0xb4] sm:$0xff]
    %v1691 = vld [vmem:[#allocation5 + $0xbc] sm:$0xf]
    %v1724 = vunpack.c.l.b16 %v1660
    %v1725 = vunpack.c.h.b16 %v1660
    %v1726 = vunpack.c.l.b16 %v1661
    %v1727 = vunpack.c.l.b16 %v1662
    %v1728 = vunpack.c.h.b16 %v1662
    %v1729 = vunpack.c.l.b16 %v1663
    %v1730 = vunpack.c.l.b16 %v1664
    %v1731 = vunpack.c.h.b16 %v1664
    %v1732 = vunpack.c.l.b16 %v1665
    %v1733 = vunpack.c.l.b16 %v1666
    %v1734 = vunpack.c.h.b16 %v1666
    %v1735 = vunpack.c.l.b16 %v1667
    %v1736 = vunpack.c.l.b16 %v1668
    %v1737 = vunpack.c.h.b16 %v1668
    %v1738 = vunpack.c.l.b16 %v1669
    %v1739 = vunpack.c.l.b16 %v1670
    %v1740 = vunpack.c.h.b16 %v1670
    %v1741 = vunpack.c.l.b16 %v1671
    %v1742 = vunpack.c.l.b16 %v1672
    %v1743 = vunpack.c.h.b16 %v1672
    %v1744 = vunpack.c.l.b16 %v1673
    %v1745 = vunpack.c.l.b16 %v1674
    %v1746 = vunpack.c.h.b16 %v1674
    %v1747 = vunpack.c.l.b16 %v1675
    %v1748 = vunpack.c.l.b16 %v1676
    %v1749 = vunpack.c.h.b16 %v1676
    %v1750 = vunpack.c.l.b16 %v1677
    %v1751 = vunpack.c.l.b16 %v1678
    %v1752 = vunpack.c.h.b16 %v1678
    %v1753 = vunpack.c.l.b16 %v1679
    %v1754 = vunpack.c.l.b16 %v1680
    %v1755 = vunpack.c.h.b16 %v1680
    %v1756 = vunpack.c.l.b16 %v1681
    %v1757 = vunpack.c.l.b16 %v1682
    %v1758 = vunpack.c.h.b16 %v1682
    %v1759 = vunpack.c.l.b16 %v1683
    %v1760 = vunpack.c.l.b16 %v1684
    %v1761 = vunpack.c.h.b16 %v1684
    %v1762 = vunpack.c.l.b16 %v1685
    %v1763 = vunpack.c.l.b16 %v1686
    %v1764 = vunpack.c.h.b16 %v1686
    %v1765 = vunpack.c.l.b16 %v1687
    %v1766 = vunpack.c.l.b16 %v1688
    %v1767 = vunpack.c.h.b16 %v1688
    %v1768 = vunpack.c.l.b16 %v1689
    %v1769 = vunpack.c.l.b16 %v1690
    %v1770 = vunpack.c.h.b16 %v1690
    %v1771 = vunpack.c.l.b16 %v1691
    %v1772 = vpack.c.b16 %v1727, %v1724
    %v1773 = vpack.c.b16 %v1728, %v1725
    %v1774 = vpack.c.b16 %v1729, %v1726
    %v1775 = vpack.c.b16 %v1733, %v1730
    %v1776 = vpack.c.b16 %v1734, %v1731
    %v1777 = vpack.c.b16 %v1735, %v1732
    %v1778 = vpack.c.b16 %v1739, %v1736
    %v1779 = vpack.c.b16 %v1740, %v1737
    %v1780 = vpack.c.b16 %v1741, %v1738
    %v1781 = vpack.c.b16 %v1745, %v1742
    %v1782 = vpack.c.b16 %v1746, %v1743
    %v1783 = vpack.c.b16 %v1747, %v1744
    %v1784 = vpack.c.b16 %v1751, %v1748
    %v1785 = vpack.c.b16 %v1752, %v1749
    %v1786 = vpack.c.b16 %v1753, %v1750
    %v1787 = vpack.c.b16 %v1757, %v1754
    %v1788 = vpack.c.b16 %v1758, %v1755
    %v1789 = vpack.c.b16 %v1759, %v1756
    %v1790 = vpack.c.b16 %v1763, %v1760
    %v1791 = vpack.c.b16 %v1764, %v1761
    %v1792 = vpack.c.b16 %v1765, %v1762
    %v1793 = vpack.c.b16 %v1769, %v1766
    %v1794 = vpack.c.b16 %v1770, %v1767
    %v1795 = vpack.c.b16 %v1771, %v1768
    %1820 = vmatprep.subr.bf16.mxu0 %v1794
    %1821 = vmatpush1.bf16.msra.mxu0 %v1793
    %1822 = vmatprep.subr.bf16.mxu0 %v1791
    %1823 = vmatpush1.bf16.msra.mxu0 %v1790
    %1824 = vmatprep.subr.bf16.mxu0 %v1788
    %1825 = vmatpush1.bf16.msra.mxu0 %v1787
    %1826 = vmatprep.subr.bf16.mxu0 %v1785
    %1827 = vmatpush1.bf16.msra.mxu0 %v1784
    %1828 = vmatprep.subr.bf16.mxu0 %v1782
    %1829 = vmatpush1.bf16.msra.mxu0 %v1781
    %1830 = vmatprep.subr.bf16.mxu0 %v1779
    %1831 = vmatpush1.bf16.msra.mxu0 %v1778
    %1832 = vmatprep.subr.bf16.mxu0 %v1776
    %1833 = vmatpush1.bf16.msra.mxu0 %v1775
    %1834 = vmatprep.subr.bf16.mxu0 %v1773
    %1835 = vmatpush1.bf16.msra.mxu0 %v1772
    %1836 = vmatprep.subr.bf16.mxu0 0
    %1837 = vmatpush2.bf16.msra.mxu0 0
    %1838 = vmatprep.subr.bf16.mxu0 0
    %1839 = vmatpush2.bf16.msra.mxu0 0
    %1840 = vmatprep.subr.bf16.mxu0 0
    %1841 = vmatpush2.bf16.msra.mxu0 0
    %1842 = vmatprep.subr.bf16.mxu0 0
    %1843 = vmatpush2.bf16.msra.mxu0 0
    %1844 = vmatprep.subr.bf16.mxu0 0
    %1845 = vmatpush2.bf16.msra.mxu0 0
    %1846 = vmatprep.subr.bf16.mxu0 0
    %1847 = vmatpush2.bf16.msra.mxu0 0
    %1848 = vmatprep.subr.bf16.mxu0 0
    %1849 = vmatpush2.bf16.msra.mxu0 0
    %1850 = vmatprep.subr.bf16.mxu0 0
    %1851 = vmatpush2.bf16.msra.mxu0 0
    %1852 = vmatprep.mubr.bf16.mxu0 0
    %1853 = vmatmul.mubr.bf16.gmra.mxu0 %v1659
    %v1854 = vpop.f32.mrf.mxu0
    %v1855 = vadd.f32 0.0, %v1854
    %v1856 = vpop.f32.mrf.mxu0
    %v1857 = vadd.f32 0.0, %v1856
    %v1858 = vpop.f32.mrf.mxu0
    %v1859 = vpop.f32.mrf.mxu0
    %1860 = vdwg.mxu0
    %1861 = vmatprep.subr.bf16.mxu0 0
    %1862 = vmatpush1.bf16.msra.mxu0 %v1795
    %1863 = vmatprep.subr.bf16.mxu0 0
    %1864 = vmatpush1.bf16.msra.mxu0 %v1792
    %1865 = vmatprep.subr.bf16.mxu0 0
    %1866 = vmatpush1.bf16.msra.mxu0 %v1789
    %1867 = vmatprep.subr.bf16.mxu0 0
    %1868 = vmatpush1.bf16.msra.mxu0 %v1786
    %1869 = vmatprep.subr.bf16.mxu0 0
    %1870 = vmatpush1.bf16.msra.mxu0 %v1783
    %1871 = vmatprep.subr.bf16.mxu0 0
    %1872 = vmatpush1.bf16.msra.mxu0 %v1780
    %1873 = vmatprep.subr.bf16.mxu0 0
    %1874 = vmatpush1.bf16.msra.mxu0 %v1777
    %1875 = vmatprep.subr.bf16.mxu0 0
    %1876 = vmatpush1.bf16.msra.mxu0 %v1774
    %1877 = vmatprep.subr.bf16.mxu0 0
    %1878 = vmatpush2.bf16.msra.mxu0 0
    %1879 = vmatprep.subr.bf16.mxu0 0
    %1880 = vmatpush2.bf16.msra.mxu0 0
    %1881 = vmatprep.subr.bf16.mxu0 0
    %1882 = vmatpush2.bf16.msra.mxu0 0
    %1883 = vmatprep.subr.bf16.mxu0 0
    %1884 = vmatpush2.bf16.msra.mxu0 0
    %1885 = vmatprep.subr.bf16.mxu0 0
    %1886 = vmatpush2.bf16.msra.mxu0 0
    %1887 = vmatprep.subr.bf16.mxu0 0
    %1888 = vmatpush2.bf16.msra.mxu0 0
    %1889 = vmatprep.subr.bf16.mxu0 0
    %1890 = vmatpush2.bf16.msra.mxu0 0
    %1891 = vmatprep.subr.bf16.mxu0 0
    %1892 = vmatpush2.bf16.msra.mxu0 0
    %1893 = vmatprep.mubr.bf16.mxu0 0
    %1894 = vmatmul.mubr.bf16.gmra.mxu0 %v1659
    %v1895 = vpop.f32.mrf.mxu0
    %v1896 = vadd.f32 0.0, %v1895
    %v1897 = vpop.f32.mrf.mxu0
    %v1898 = vpop.f32.mrf.mxu0
    %v1899 = vpop.f32.mrf.mxu0
    %1900 = vdwg.mxu0
    %v1901 = vld [vmem:[%s3] sm:$0x1]
    %v1902 = vadd.f32 %v1656, %v1855
    %v1903 = vadd.f32 %v1657, %v1857
    %v1904 = vxor.u32 %v1902, 2147483648
    %v1905 = vxor.u32 %v1903, 2147483648
    %v1906 = vmul.f32 %v1904, 1.442695
    %v1907 = vpow.pop %v1906
    %v1908 = vmul.f32 %v1905, 1.442695
    %v1909 = vpow.pop %v1908
    %v1910 = vadd.f32 %v1907, 1.0
    %v1911 = vadd.f32 %v1909, 1.0
    %v1912 = vrcp.pop %v1910
    %v1913 = vmul.f32 1.0, %v1912
    %v1914 = vrcp.pop %v1911
    %v1915 = vmul.f32 1.0, %v1914
    %v1917 = vlaneseq
    %v1918 = vshrl.u32 %v1917, 7
    %v1919 = vsub.s32 0, %v1918
    %v1920 = vrot.slane %v1901, %v1919
    %v1922 = vadd.f32 %v1896, %v1920
    %v1923 = vmul.f32 %v1913, %v1922
    %v1924 = vadd.f32 %v1658, %v1923
    %v1925 = vtanh.pop %v1924
    %v1926 = vsub.f32 %v1650, %v1925
    %v1927 = vmul.f32 %v1915, %v1926
    %v1928 = vadd.f32 %v1925, %v1927
    %s1929 = scalar_lea.vmem [#allocation3], 48
    %1930 = vst [vmem:[%s1929] sm:$0xff] %v1928
    %s1931 = smul.u32 7, 3
    %s1932 = smul.addr %s1931, 8
    %s1933 = scalar_lea.vmem [#allocation2], %s1932
    %v1934 = vld [vmem:[%s1933] sm:$0xff]
    %v1935 = vld [vmem:[%s1933 + $0x8] sm:$0xff]
    %v1936 = vld [vmem:[%s1933 + $0x10] sm:$0xff]
    %v1937 = vpack.c.bf16 %v1928, %v1928
    %v1938 = vld [vmem:[#allocation5] sm:$0xff]
    %v1939 = vld [vmem:[#allocation5 + $0x8] sm:$0xf]
    %v1940 = vld [vmem:[#allocation5 + $0xc] sm:$0xff]
    %v1941 = vld [vmem:[#allocation5 + $0x14] sm:$0xf]
    %v1942 = vld [vmem:[#allocation5 + $0x18] sm:$0xff]
    %v1943 = vld [vmem:[#allocation5 + $0x20] sm:$0xf]
    %v1944 = vld [vmem:[#allocation5 + $0x24] sm:$0xff]
    %v1945 = vld [vmem:[#allocation5 + $0x2c] sm:$0xf]
    %v1946 = vld [vmem:[#allocation5 + $0x30] sm:$0xff]
    %v1947 = vld [vmem:[#allocation5 + $0x38] sm:$0xf]
    %v1948 = vld [vmem:[#allocation5 + $0x3c] sm:$0xff]
    %v1949 = vld [vmem:[#allocation5 + $0x44] sm:$0xf]
    %v1950 = vld [vmem:[#allocation5 + $0x48] sm:$0xff]
    %v1951 = vld [vmem:[#allocation5 + $0x50] sm:$0xf]
    %v1952 = vld [vmem:[#allocation5 + $0x54] sm:$0xff]
    %v1953 = vld [vmem:[#allocation5 + $0x5c] sm:$0xf]
    %v1954 = vld [vmem:[#allocation5 + $0x60] sm:$0xff]
    %v1955 = vld [vmem:[#allocation5 + $0x68] sm:$0xf]
    %v1956 = vld [vmem:[#allocation5 + $0x6c] sm:$0xff]
    %v1957 = vld [vmem:[#allocation5 + $0x74] sm:$0xf]
    %v1958 = vld [vmem:[#allocation5 + $0x78] sm:$0xff]
    %v1959 = vld [vmem:[#allocation5 + $0x80] sm:$0xf]
    %v1960 = vld [vmem:[#allocation5 + $0x84] sm:$0xff]
    %v1961 = vld [vmem:[#allocation5 + $0x8c] sm:$0xf]
    %v1962 = vld [vmem:[#allocation5 + $0x90] sm:$0xff]
    %v1963 = vld [vmem:[#allocation5 + $0x98] sm:$0xf]
    %v1964 = vld [vmem:[#allocation5 + $0x9c] sm:$0xff]
    %v1965 = vld [vmem:[#allocation5 + $0xa4] sm:$0xf]
    %v1966 = vld [vmem:[#allocation5 + $0xa8] sm:$0xff]
    %v1967 = vld [vmem:[#allocation5 + $0xb0] sm:$0xf]
    %v1968 = vld [vmem:[#allocation5 + $0xb4] sm:$0xff]
    %v1969 = vld [vmem:[#allocation5 + $0xbc] sm:$0xf]
    %v2002 = vunpack.c.l.b16 %v1938
    %v2003 = vunpack.c.h.b16 %v1938
    %v2004 = vunpack.c.l.b16 %v1939
    %v2005 = vunpack.c.l.b16 %v1940
    %v2006 = vunpack.c.h.b16 %v1940
    %v2007 = vunpack.c.l.b16 %v1941
    %v2008 = vunpack.c.l.b16 %v1942
    %v2009 = vunpack.c.h.b16 %v1942
    %v2010 = vunpack.c.l.b16 %v1943
    %v2011 = vunpack.c.l.b16 %v1944
    %v2012 = vunpack.c.h.b16 %v1944
    %v2013 = vunpack.c.l.b16 %v1945
    %v2014 = vunpack.c.l.b16 %v1946
    %v2015 = vunpack.c.h.b16 %v1946
    %v2016 = vunpack.c.l.b16 %v1947
    %v2017 = vunpack.c.l.b16 %v1948
    %v2018 = vunpack.c.h.b16 %v1948
    %v2019 = vunpack.c.l.b16 %v1949
    %v2020 = vunpack.c.l.b16 %v1950
    %v2021 = vunpack.c.h.b16 %v1950
    %v2022 = vunpack.c.l.b16 %v1951
    %v2023 = vunpack.c.l.b16 %v1952
    %v2024 = vunpack.c.h.b16 %v1952
    %v2025 = vunpack.c.l.b16 %v1953
    %v2026 = vunpack.c.l.b16 %v1954
    %v2027 = vunpack.c.h.b16 %v1954
    %v2028 = vunpack.c.l.b16 %v1955
    %v2029 = vunpack.c.l.b16 %v1956
    %v2030 = vunpack.c.h.b16 %v1956
    %v2031 = vunpack.c.l.b16 %v1957
    %v2032 = vunpack.c.l.b16 %v1958
    %v2033 = vunpack.c.h.b16 %v1958
    %v2034 = vunpack.c.l.b16 %v1959
    %v2035 = vunpack.c.l.b16 %v1960
    %v2036 = vunpack.c.h.b16 %v1960
    %v2037 = vunpack.c.l.b16 %v1961
    %v2038 = vunpack.c.l.b16 %v1962
    %v2039 = vunpack.c.h.b16 %v1962
    %v2040 = vunpack.c.l.b16 %v1963
    %v2041 = vunpack.c.l.b16 %v1964
    %v2042 = vunpack.c.h.b16 %v1964
    %v2043 = vunpack.c.l.b16 %v1965
    %v2044 = vunpack.c.l.b16 %v1966
    %v2045 = vunpack.c.h.b16 %v1966
    %v2046 = vunpack.c.l.b16 %v1967
    %v2047 = vunpack.c.l.b16 %v1968
    %v2048 = vunpack.c.h.b16 %v1968
    %v2049 = vunpack.c.l.b16 %v1969
    %v2050 = vpack.c.b16 %v2005, %v2002
    %v2051 = vpack.c.b16 %v2006, %v2003
    %v2052 = vpack.c.b16 %v2007, %v2004
    %v2053 = vpack.c.b16 %v2011, %v2008
    %v2054 = vpack.c.b16 %v2012, %v2009
    %v2055 = vpack.c.b16 %v2013, %v2010
    %v2056 = vpack.c.b16 %v2017, %v2014
    %v2057 = vpack.c.b16 %v2018, %v2015
    %v2058 = vpack.c.b16 %v2019, %v2016
    %v2059 = vpack.c.b16 %v2023, %v2020
    %v2060 = vpack.c.b16 %v2024, %v2021
    %v2061 = vpack.c.b16 %v2025, %v2022
    %v2062 = vpack.c.b16 %v2029, %v2026
    %v2063 = vpack.c.b16 %v2030, %v2027
    %v2064 = vpack.c.b16 %v2031, %v2028
    %v2065 = vpack.c.b16 %v2035, %v2032
    %v2066 = vpack.c.b16 %v2036, %v2033
    %v2067 = vpack.c.b16 %v2037, %v2034
    %v2068 = vpack.c.b16 %v2041, %v2038
    %v2069 = vpack.c.b16 %v2042, %v2039
    %v2070 = vpack.c.b16 %v2043, %v2040
    %v2071 = vpack.c.b16 %v2047, %v2044
    %v2072 = vpack.c.b16 %v2048, %v2045
    %v2073 = vpack.c.b16 %v2049, %v2046
    %2098 = vmatprep.subr.bf16.mxu0 %v2072
    %2099 = vmatpush1.bf16.msra.mxu0 %v2071
    %2100 = vmatprep.subr.bf16.mxu0 %v2069
    %2101 = vmatpush1.bf16.msra.mxu0 %v2068
    %2102 = vmatprep.subr.bf16.mxu0 %v2066
    %2103 = vmatpush1.bf16.msra.mxu0 %v2065
    %2104 = vmatprep.subr.bf16.mxu0 %v2063
    %2105 = vmatpush1.bf16.msra.mxu0 %v2062
    %2106 = vmatprep.subr.bf16.mxu0 %v2060
    %2107 = vmatpush1.bf16.msra.mxu0 %v2059
    %2108 = vmatprep.subr.bf16.mxu0 %v2057
    %2109 = vmatpush1.bf16.msra.mxu0 %v2056
    %2110 = vmatprep.subr.bf16.mxu0 %v2054
    %2111 = vmatpush1.bf16.msra.mxu0 %v2053
    %2112 = vmatprep.subr.bf16.mxu0 %v2051
    %2113 = vmatpush1.bf16.msra.mxu0 %v2050
    %2114 = vmatprep.subr.bf16.mxu0 0
    %2115 = vmatpush2.bf16.msra.mxu0 0
    %2116 = vmatprep.subr.bf16.mxu0 0
    %2117 = vmatpush2.bf16.msra.mxu0 0
    %2118 = vmatprep.subr.bf16.mxu0 0
    %2119 = vmatpush2.bf16.msra.mxu0 0
    %2120 = vmatprep.subr.bf16.mxu0 0
    %2121 = vmatpush2.bf16.msra.mxu0 0
    %2122 = vmatprep.subr.bf16.mxu0 0
    %2123 = vmatpush2.bf16.msra.mxu0 0
    %2124 = vmatprep.subr.bf16.mxu0 0
    %2125 = vmatpush2.bf16.msra.mxu0 0
    %2126 = vmatprep.subr.bf16.mxu0 0
    %2127 = vmatpush2.bf16.msra.mxu0 0
    %2128 = vmatprep.subr.bf16.mxu0 0
    %2129 = vmatpush2.bf16.msra.mxu0 0
    %2130 = vmatprep.mubr.bf16.mxu0 0
    %2131 = vmatmul.mubr.bf16.gmra.mxu0 %v1937
    %v2132 = vpop.f32.mrf.mxu0
    %v2133 = vadd.f32 0.0, %v2132
    %v2134 = vpop.f32.mrf.mxu0
    %v2135 = vadd.f32 0.0, %v2134
    %v2136 = vpop.f32.mrf.mxu0
    %v2137 = vpop.f32.mrf.mxu0
    %2138 = vdwg.mxu0
    %2139 = vmatprep.subr.bf16.mxu0 0
    %2140 = vmatpush1.bf16.msra.mxu0 %v2073
    %2141 = vmatprep.subr.bf16.mxu0 0
    %2142 = vmatpush1.bf16.msra.mxu0 %v2070
    %2143 = vmatprep.subr.bf16.mxu0 0
    %2144 = vmatpush1.bf16.msra.mxu0 %v2067
    %2145 = vmatprep.subr.bf16.mxu0 0
    %2146 = vmatpush1.bf16.msra.mxu0 %v2064
    %2147 = vmatprep.subr.bf16.mxu0 0
    %2148 = vmatpush1.bf16.msra.mxu0 %v2061
    %2149 = vmatprep.subr.bf16.mxu0 0
    %2150 = vmatpush1.bf16.msra.mxu0 %v2058
    %2151 = vmatprep.subr.bf16.mxu0 0
    %2152 = vmatpush1.bf16.msra.mxu0 %v2055
    %2153 = vmatprep.subr.bf16.mxu0 0
    %2154 = vmatpush1.bf16.msra.mxu0 %v2052
    %2155 = vmatprep.subr.bf16.mxu0 0
    %2156 = vmatpush2.bf16.msra.mxu0 0
    %2157 = vmatprep.subr.bf16.mxu0 0
    %2158 = vmatpush2.bf16.msra.mxu0 0
    %2159 = vmatprep.subr.bf16.mxu0 0
    %2160 = vmatpush2.bf16.msra.mxu0 0
    %2161 = vmatprep.subr.bf16.mxu0 0
    %2162 = vmatpush2.bf16.msra.mxu0 0
    %2163 = vmatprep.subr.bf16.mxu0 0
    %2164 = vmatpush2.bf16.msra.mxu0 0
    %2165 = vmatprep.subr.bf16.mxu0 0
    %2166 = vmatpush2.bf16.msra.mxu0 0
    %2167 = vmatprep.subr.bf16.mxu0 0
    %2168 = vmatpush2.bf16.msra.mxu0 0
    %2169 = vmatprep.subr.bf16.mxu0 0
    %2170 = vmatpush2.bf16.msra.mxu0 0
    %2171 = vmatprep.mubr.bf16.mxu0 0
    %2172 = vmatmul.mubr.bf16.gmra.mxu0 %v1937
    %v2173 = vpop.f32.mrf.mxu0
    %v2174 = vadd.f32 0.0, %v2173
    %v2175 = vpop.f32.mrf.mxu0
    %v2176 = vpop.f32.mrf.mxu0
    %v2177 = vpop.f32.mrf.mxu0
    %2178 = vdwg.mxu0
    %v2179 = vld [vmem:[%s3] sm:$0x1]
    %v2180 = vadd.f32 %v1934, %v2133
    %v2181 = vadd.f32 %v1935, %v2135
    %v2182 = vxor.u32 %v2180, 2147483648
    %v2183 = vxor.u32 %v2181, 2147483648
    %v2184 = vmul.f32 %v2182, 1.442695
    %v2185 = vpow.pop %v2184
    %v2186 = vmul.f32 %v2183, 1.442695
    %v2187 = vpow.pop %v2186
    %v2188 = vadd.f32 %v2185, 1.0
    %v2189 = vadd.f32 %v2187, 1.0
    %v2190 = vrcp.pop %v2188
    %v2191 = vmul.f32 1.0, %v2190
    %v2192 = vrcp.pop %v2189
    %v2193 = vmul.f32 1.0, %v2192
    %v2195 = vlaneseq
    %v2196 = vshrl.u32 %v2195, 7
    %v2197 = vsub.s32 0, %v2196
    %v2198 = vrot.slane %v2179, %v2197
    %v2200 = vadd.f32 %v2174, %v2198
    %v2201 = vmul.f32 %v2191, %v2200
    %v2202 = vadd.f32 %v1936, %v2201
    %v2203 = vtanh.pop %v2202
    %v2204 = vsub.f32 %v1928, %v2203
    %v2205 = vmul.f32 %v2193, %v2204
    %v2206 = vadd.f32 %v2203, %v2205
    %s2207 = scalar_lea.vmem [#allocation3], 56
    %2208 = vst [vmem:[%s2207] sm:$0xff] %v2206
    %v2209 = vld [vmem:[#allocation3] sm:$0xff]
    %v2210 = vld [vmem:[#allocation3 + $0x8] sm:$0xff]
    %v2211 = vld [vmem:[#allocation3 + $0x10] sm:$0xff]
    %v2212 = vld [vmem:[#allocation3 + $0x18] sm:$0xff]
    %v2213 = vld [vmem:[#allocation3 + $0x20] sm:$0xff]
    %v2214 = vld [vmem:[#allocation3 + $0x28] sm:$0xff]
    %v2215 = vld [vmem:[#allocation3 + $0x30] sm:$0xff]
    %v2216 = vld [vmem:[#allocation3 + $0x38] sm:$0xff]
    %v2217 = vpack.c.bf16 %v2210, %v2209
    %v2218 = vpack.c.bf16 %v2212, %v2211
    %v2219 = vpack.c.bf16 %v2214, %v2213
    %v2220 = vpack.c.bf16 %v2216, %v2215
    %v2221 = vld [vmem:[#allocation7] sm:$0xff]
    %v2222 = vld [vmem:[#allocation7 + $0x8] sm:$0xf]
    %v2223 = vld [vmem:[#allocation7 + $0xc] sm:$0xff]
    %v2224 = vld [vmem:[#allocation7 + $0x14] sm:$0xf]
    %v2225 = vld [vmem:[#allocation7 + $0x18] sm:$0xff]
    %v2226 = vld [vmem:[#allocation7 + $0x20] sm:$0xf]
    %v2227 = vld [vmem:[#allocation7 + $0x24] sm:$0xff]
    %v2228 = vld [vmem:[#allocation7 + $0x2c] sm:$0xf]
    %v2229 = vld [vmem:[#allocation7 + $0x30] sm:$0xff]
    %v2230 = vld [vmem:[#allocation7 + $0x38] sm:$0xf]
    %v2231 = vld [vmem:[#allocation7 + $0x3c] sm:$0xff]
    %v2232 = vld [vmem:[#allocation7 + $0x44] sm:$0xf]
    %v2233 = vld [vmem:[#allocation7 + $0x48] sm:$0xff]
    %v2234 = vld [vmem:[#allocation7 + $0x50] sm:$0xf]
    %v2235 = vld [vmem:[#allocation7 + $0x54] sm:$0xff]
    %v2236 = vld [vmem:[#allocation7 + $0x5c] sm:$0xf]
    %v2237 = vld [vmem:[#allocation7 + $0x60] sm:$0xff]
    %v2238 = vld [vmem:[#allocation7 + $0x68] sm:$0xf]
    %v2239 = vld [vmem:[#allocation7 + $0x6c] sm:$0xff]
    %v2240 = vld [vmem:[#allocation7 + $0x74] sm:$0xf]
    %v2241 = vld [vmem:[#allocation7 + $0x78] sm:$0xff]
    %v2242 = vld [vmem:[#allocation7 + $0x80] sm:$0xf]
    %v2243 = vld [vmem:[#allocation7 + $0x84] sm:$0xff]
    %v2244 = vld [vmem:[#allocation7 + $0x8c] sm:$0xf]
    %v2245 = vld [vmem:[#allocation7 + $0x90] sm:$0xff]
    %v2246 = vld [vmem:[#allocation7 + $0x98] sm:$0xf]
    %v2247 = vld [vmem:[#allocation7 + $0x9c] sm:$0xff]
    %v2248 = vld [vmem:[#allocation7 + $0xa4] sm:$0xf]
    %v2249 = vld [vmem:[#allocation7 + $0xa8] sm:$0xff]
    %v2250 = vld [vmem:[#allocation7 + $0xb0] sm:$0xf]
    %v2251 = vld [vmem:[#allocation7 + $0xb4] sm:$0xff]
    %v2252 = vld [vmem:[#allocation7 + $0xbc] sm:$0xf]
    %v2253 = vld [vmem:[%s6] sm:$0x7]
    %v2255 = vlaneseq
    %v2256 = vshrl.u32 %v2255, 7
    %v2257 = vsub.s32 0, %v2256
    %v2258 = vrot.slane %v2253, %v2257
    %v2259 = vlaneseq
    %v2260 = vshrl.u32 %v2259, 7
    %v2261 = vsub.s32 1, %v2260
    %v2262 = vrot.slane %v2253, %v2261
    %v2263 = vlaneseq
    %v2264 = vshrl.u32 %v2263, 7
    %v2265 = vsub.s32 2, %v2264
    %v2266 = vrot.slane %v2253, %v2265
    %v2302 = vunpack.c.l.b16 %v2221
    %v2303 = vunpack.c.h.b16 %v2221
    %v2304 = vunpack.c.l.b16 %v2222
    %v2305 = vunpack.c.l.b16 %v2223
    %v2306 = vunpack.c.h.b16 %v2223
    %v2307 = vunpack.c.l.b16 %v2224
    %v2308 = vunpack.c.l.b16 %v2225
    %v2309 = vunpack.c.h.b16 %v2225
    %v2310 = vunpack.c.l.b16 %v2226
    %v2311 = vunpack.c.l.b16 %v2227
    %v2312 = vunpack.c.h.b16 %v2227
    %v2313 = vunpack.c.l.b16 %v2228
    %v2314 = vunpack.c.l.b16 %v2229
    %v2315 = vunpack.c.h.b16 %v2229
    %v2316 = vunpack.c.l.b16 %v2230
    %v2317 = vunpack.c.l.b16 %v2231
    %v2318 = vunpack.c.h.b16 %v2231
    %v2319 = vunpack.c.l.b16 %v2232
    %v2320 = vunpack.c.l.b16 %v2233
    %v2321 = vunpack.c.h.b16 %v2233
    %v2322 = vunpack.c.l.b16 %v2234
    %v2323 = vunpack.c.l.b16 %v2235
    %v2324 = vunpack.c.h.b16 %v2235
    %v2325 = vunpack.c.l.b16 %v2236
    %v2326 = vunpack.c.l.b16 %v2237
    %v2327 = vunpack.c.h.b16 %v2237
    %v2328 = vunpack.c.l.b16 %v2238
    %v2329 = vunpack.c.l.b16 %v2239
    %v2330 = vunpack.c.h.b16 %v2239
    %v2331 = vunpack.c.l.b16 %v2240
    %v2332 = vunpack.c.l.b16 %v2241
    %v2333 = vunpack.c.h.b16 %v2241
    %v2334 = vunpack.c.l.b16 %v2242
    %v2335 = vunpack.c.l.b16 %v2243
    %v2336 = vunpack.c.h.b16 %v2243
    %v2337 = vunpack.c.l.b16 %v2244
    %v2338 = vunpack.c.l.b16 %v2245
    %v2339 = vunpack.c.h.b16 %v2245
    %v2340 = vunpack.c.l.b16 %v2246
    %v2341 = vunpack.c.l.b16 %v2247
    %v2342 = vunpack.c.h.b16 %v2247
    %v2343 = vunpack.c.l.b16 %v2248
    %v2344 = vunpack.c.l.b16 %v2249
    %v2345 = vunpack.c.h.b16 %v2249
    %v2346 = vunpack.c.l.b16 %v2250
    %v2347 = vunpack.c.l.b16 %v2251
    %v2348 = vunpack.c.h.b16 %v2251
    %v2349 = vunpack.c.l.b16 %v2252
    %v2350 = vpack.c.b16 %v2305, %v2302
    %v2351 = vpack.c.b16 %v2306, %v2303
    %v2352 = vpack.c.b16 %v2307, %v2304
    %v2353 = vpack.c.b16 %v2311, %v2308
    %v2354 = vpack.c.b16 %v2312, %v2309
    %v2355 = vpack.c.b16 %v2313, %v2310
    %v2356 = vpack.c.b16 %v2317, %v2314
    %v2357 = vpack.c.b16 %v2318, %v2315
    %v2358 = vpack.c.b16 %v2319, %v2316
    %v2359 = vpack.c.b16 %v2323, %v2320
    %v2360 = vpack.c.b16 %v2324, %v2321
    %v2361 = vpack.c.b16 %v2325, %v2322
    %v2362 = vpack.c.b16 %v2329, %v2326
    %v2363 = vpack.c.b16 %v2330, %v2327
    %v2364 = vpack.c.b16 %v2331, %v2328
    %v2365 = vpack.c.b16 %v2335, %v2332
    %v2366 = vpack.c.b16 %v2336, %v2333
    %v2367 = vpack.c.b16 %v2337, %v2334
    %v2368 = vpack.c.b16 %v2341, %v2338
    %v2369 = vpack.c.b16 %v2342, %v2339
    %v2370 = vpack.c.b16 %v2343, %v2340
    %v2371 = vpack.c.b16 %v2347, %v2344
    %v2372 = vpack.c.b16 %v2348, %v2345
    %v2373 = vpack.c.b16 %v2349, %v2346
    %2398 = vmatprep.subr.bf16.mxu0 %v2372
    %2399 = vmatpush1.bf16.msra.mxu0 %v2371
    %2400 = vmatprep.subr.bf16.mxu0 %v2369
    %2401 = vmatpush1.bf16.msra.mxu0 %v2368
    %2402 = vmatprep.subr.bf16.mxu0 %v2366
    %2403 = vmatpush1.bf16.msra.mxu0 %v2365
    %2404 = vmatprep.subr.bf16.mxu0 %v2363
    %2405 = vmatpush1.bf16.msra.mxu0 %v2362
    %2406 = vmatprep.subr.bf16.mxu0 %v2360
    %2407 = vmatpush1.bf16.msra.mxu0 %v2359
    %2408 = vmatprep.subr.bf16.mxu0 %v2357
    %2409 = vmatpush1.bf16.msra.mxu0 %v2356
    %2410 = vmatprep.subr.bf16.mxu0 %v2354
    %2411 = vmatpush1.bf16.msra.mxu0 %v2353
    %2412 = vmatprep.subr.bf16.mxu0 %v2351
    %2413 = vmatpush1.bf16.msra.mxu0 %v2350
    %2414 = vmatprep.subr.bf16.mxu0 0
    %2415 = vmatpush2.bf16.msra.mxu0 0
    %2416 = vmatprep.subr.bf16.mxu0 0
    %2417 = vmatpush2.bf16.msra.mxu0 0
    %2418 = vmatprep.subr.bf16.mxu0 0
    %2419 = vmatpush2.bf16.msra.mxu0 0
    %2420 = vmatprep.subr.bf16.mxu0 0
    %2421 = vmatpush2.bf16.msra.mxu0 0
    %2422 = vmatprep.subr.bf16.mxu0 0
    %2423 = vmatpush2.bf16.msra.mxu0 0
    %2424 = vmatprep.subr.bf16.mxu0 0
    %2425 = vmatpush2.bf16.msra.mxu0 0
    %2426 = vmatprep.subr.bf16.mxu0 0
    %2427 = vmatpush2.bf16.msra.mxu0 0
    %2428 = vmatprep.subr.bf16.mxu0 0
    %2429 = vmatpush2.bf16.msra.mxu0 0
    %2430 = vmatprep.mubr.bf16.mxu0 0
    %2431 = vmatmul.mubr.bf16.gmra.mxu0 %v2217
    %v2432 = vpop.f32.mrf.mxu0
    %v2433 = vadd.f32 %v2258, %v2432
    %v2434 = vpop.f32.mrf.mxu0
    %v2435 = vadd.f32 %v2262, %v2434
    %v2436 = vpop.f32.mrf.mxu0
    %v2437 = vadd.f32 %v2258, %v2436
    %v2438 = vpop.f32.mrf.mxu0
    %v2439 = vadd.f32 %v2262, %v2438
    %2440 = vmatprep.mubr.bf16.mxu0 0
    %2441 = vmatmul.mubr.bf16.gmra.mxu0 %v2218
    %v2442 = vpop.f32.mrf.mxu0
    %v2443 = vadd.f32 %v2258, %v2442
    %v2444 = vpop.f32.mrf.mxu0
    %v2445 = vadd.f32 %v2262, %v2444
    %v2446 = vpop.f32.mrf.mxu0
    %v2447 = vadd.f32 %v2258, %v2446
    %v2448 = vpop.f32.mrf.mxu0
    %v2449 = vadd.f32 %v2262, %v2448
    %2450 = vmatprep.mubr.bf16.mxu0 0
    %2451 = vmatmul.mubr.bf16.gmra.mxu0 %v2219
    %v2452 = vpop.f32.mrf.mxu0
    %v2453 = vadd.f32 %v2258, %v2452
    %v2454 = vpop.f32.mrf.mxu0
    %v2455 = vadd.f32 %v2262, %v2454
    %v2456 = vpop.f32.mrf.mxu0
    %v2457 = vadd.f32 %v2258, %v2456
    %v2458 = vpop.f32.mrf.mxu0
    %v2459 = vadd.f32 %v2262, %v2458
    %2460 = vmatprep.mubr.bf16.mxu0 0
    %2461 = vmatmul.mubr.bf16.gmra.mxu0 %v2220
    %v2462 = vpop.f32.mrf.mxu0
    %v2463 = vadd.f32 %v2258, %v2462
    %v2464 = vpop.f32.mrf.mxu0
    %v2465 = vadd.f32 %v2262, %v2464
    %v2466 = vpop.f32.mrf.mxu0
    %v2467 = vadd.f32 %v2258, %v2466
    %v2468 = vpop.f32.mrf.mxu0
    %v2469 = vadd.f32 %v2262, %v2468
    %2470 = vdwg.mxu0
    %2471 = vmatprep.subr.bf16.mxu0 0
    %2472 = vmatpush1.bf16.msra.mxu0 %v2373
    %2473 = vmatprep.subr.bf16.mxu0 0
    %2474 = vmatpush1.bf16.msra.mxu0 %v2370
    %2475 = vmatprep.subr.bf16.mxu0 0
    %2476 = vmatpush1.bf16.msra.mxu0 %v2367
    %2477 = vmatprep.subr.bf16.mxu0 0
    %2478 = vmatpush1.bf16.msra.mxu0 %v2364
    %2479 = vmatprep.subr.bf16.mxu0 0
    %2480 = vmatpush1.bf16.msra.mxu0 %v2361
    %2481 = vmatprep.subr.bf16.mxu0 0
    %2482 = vmatpush1.bf16.msra.mxu0 %v2358
    %2483 = vmatprep.subr.bf16.mxu0 0
    %2484 = vmatpush1.bf16.msra.mxu0 %v2355
    %2485 = vmatprep.subr.bf16.mxu0 0
    %2486 = vmatpush1.bf16.msra.mxu0 %v2352
    %2487 = vmatprep.subr.bf16.mxu0 0
    %2488 = vmatpush2.bf16.msra.mxu0 0
    %2489 = vmatprep.subr.bf16.mxu0 0
    %2490 = vmatpush2.bf16.msra.mxu0 0
    %2491 = vmatprep.subr.bf16.mxu0 0
    %2492 = vmatpush2.bf16.msra.mxu0 0
    %2493 = vmatprep.subr.bf16.mxu0 0
    %2494 = vmatpush2.bf16.msra.mxu0 0
    %2495 = vmatprep.subr.bf16.mxu0 0
    %2496 = vmatpush2.bf16.msra.mxu0 0
    %2497 = vmatprep.subr.bf16.mxu0 0
    %2498 = vmatpush2.bf16.msra.mxu0 0
    %2499 = vmatprep.subr.bf16.mxu0 0
    %2500 = vmatpush2.bf16.msra.mxu0 0
    %2501 = vmatprep.subr.bf16.mxu0 0
    %2502 = vmatpush2.bf16.msra.mxu0 0
    %2503 = vmatprep.mubr.bf16.mxu0 0
    %2504 = vmatmul.mubr.bf16.gmra.mxu0 %v2217
    %v2505 = vpop.f32.mrf.mxu0
    %v2506 = vadd.f32 %v2266, %v2505
    %v2507 = vpop.f32.mrf.mxu0
    %v2508 = vpop.f32.mrf.mxu0
    %v2509 = vadd.f32 %v2266, %v2508
    %v2510 = vpop.f32.mrf.mxu0
    %2511 = vmatprep.mubr.bf16.mxu0 0
    %2512 = vmatmul.mubr.bf16.gmra.mxu0 %v2218
    %v2513 = vpop.f32.mrf.mxu0
    %v2514 = vadd.f32 %v2266, %v2513
    %v2515 = vpop.f32.mrf.mxu0
    %v2516 = vpop.f32.mrf.mxu0
    %v2517 = vadd.f32 %v2266, %v2516
    %v2518 = vpop.f32.mrf.mxu0
    %2519 = vmatprep.mubr.bf16.mxu0 0
    %2520 = vmatmul.mubr.bf16.gmra.mxu0 %v2219
    %v2521 = vpop.f32.mrf.mxu0
    %v2522 = vadd.f32 %v2266, %v2521
    %v2523 = vpop.f32.mrf.mxu0
    %v2524 = vpop.f32.mrf.mxu0
    %v2525 = vadd.f32 %v2266, %v2524
    %v2526 = vpop.f32.mrf.mxu0
    %2527 = vmatprep.mubr.bf16.mxu0 0
    %2528 = vmatmul.mubr.bf16.gmra.mxu0 %v2220
    %v2529 = vpop.f32.mrf.mxu0
    %v2530 = vadd.f32 %v2266, %v2529
    %v2531 = vpop.f32.mrf.mxu0
    %v2532 = vpop.f32.mrf.mxu0
    %v2533 = vadd.f32 %v2266, %v2532
    %v2534 = vpop.f32.mrf.mxu0
    %2535 = vdwg.mxu0
    %2536 = vst [vmem:[#allocation4] sm:$0xff] %v2433
    %2537 = vst [vmem:[#allocation4 + $0x8] sm:$0xff] %v2435
    %2538 = vst [vmem:[#allocation4 + $0x10] sm:$0xff] %v2506
    %2539 = vst [vmem:[#allocation4 + $0x18] sm:$0xff] %v2437
    %2540 = vst [vmem:[#allocation4 + $0x20] sm:$0xff] %v2439
    %2541 = vst [vmem:[#allocation4 + $0x28] sm:$0xff] %v2509
    %2542 = vst [vmem:[#allocation4 + $0x30] sm:$0xff] %v2443
    %2543 = vst [vmem:[#allocation4 + $0x38] sm:$0xff] %v2445
    %2544 = vst [vmem:[#allocation4 + $0x40] sm:$0xff] %v2514
    %2545 = vst [vmem:[#allocation4 + $0x48] sm:$0xff] %v2447
    %2546 = vst [vmem:[#allocation4 + $0x50] sm:$0xff] %v2449
    %2547 = vst [vmem:[#allocation4 + $0x58] sm:$0xff] %v2517
    %2548 = vst [vmem:[#allocation4 + $0x60] sm:$0xff] %v2453
    %2549 = vst [vmem:[#allocation4 + $0x68] sm:$0xff] %v2455
    %2550 = vst [vmem:[#allocation4 + $0x70] sm:$0xff] %v2522
    %2551 = vst [vmem:[#allocation4 + $0x78] sm:$0xff] %v2457
    %2552 = vst [vmem:[#allocation4 + $0x80] sm:$0xff] %v2459
    %2553 = vst [vmem:[#allocation4 + $0x88] sm:$0xff] %v2525
    %2554 = vst [vmem:[#allocation4 + $0x90] sm:$0xff] %v2463
    %2555 = vst [vmem:[#allocation4 + $0x98] sm:$0xff] %v2465
    %2556 = vst [vmem:[#allocation4 + $0xa0] sm:$0xff] %v2530
    %2557 = vst [vmem:[#allocation4 + $0xa8] sm:$0xff] %v2467
    %2558 = vst [vmem:[#allocation4 + $0xb0] sm:$0xff] %v2469
    %2559 = vst [vmem:[#allocation4 + $0xb8] sm:$0xff] %v2533
    %v2560 = vld [vmem:[#allocation4] sm:$0xff]
    %v2561 = vld [vmem:[#allocation4 + $0x8] sm:$0xff]
    %v2562 = vld [vmem:[#allocation4 + $0x10] sm:$0xff]
    %v2563 = vld [vmem:[%s7] sm:$0x1]
    %v2564 = vxor.u32 %v2560, 2147483648
    %v2565 = vxor.u32 %v2561, 2147483648
    %v2566 = vmul.f32 %v2564, 1.442695
    %v2567 = vpow.pop %v2566
    %v2568 = vmul.f32 %v2565, 1.442695
    %v2569 = vpow.pop %v2568
    %v2570 = vadd.f32 %v2567, 1.0
    %v2571 = vadd.f32 %v2569, 1.0
    %v2572 = vrcp.pop %v2570
    %v2573 = vmul.f32 1.0, %v2572
    %v2574 = vrcp.pop %v2571
    %v2575 = vmul.f32 1.0, %v2574
    %v2577 = vlaneseq
    %v2578 = vshrl.u32 %v2577, 7
    %v2579 = vsub.s32 0, %v2578
    %v2580 = vrot.slane %v2563, %v2579
    %v2582 = vmul.f32 %v2573, %v2580
    %v2583 = vadd.f32 %v2562, %v2582
    %v2584 = vtanh.pop %v2583
    %v2585 = vsub.f32 0.0, %v2584
    %v2586 = vmul.f32 %v2575, %v2585
    %v2587 = vadd.f32 %v2584, %v2586
    %s2588 = smul.addr %s263, 8
    %s2589 = scalar_lea.vmem [#allocation4], %s2588
    %v2590 = vld [vmem:[%s2589] sm:$0xff]
    %v2591 = vld [vmem:[%s2589 + $0x8] sm:$0xff]
    %v2592 = vld [vmem:[%s2589 + $0x10] sm:$0xff]
    %v2593 = vpack.c.bf16 %v2587, %v2587
    %v2594 = vld [vmem:[#allocation9] sm:$0xff]
    %v2595 = vld [vmem:[#allocation9 + $0x8] sm:$0xf]
    %v2596 = vld [vmem:[#allocation9 + $0xc] sm:$0xff]
    %v2597 = vld [vmem:[#allocation9 + $0x14] sm:$0xf]
    %v2598 = vld [vmem:[#allocation9 + $0x18] sm:$0xff]
    %v2599 = vld [vmem:[#allocation9 + $0x20] sm:$0xf]
    %v2600 = vld [vmem:[#allocation9 + $0x24] sm:$0xff]
    %v2601 = vld [vmem:[#allocation9 + $0x2c] sm:$0xf]
    %v2602 = vld [vmem:[#allocation9 + $0x30] sm:$0xff]
    %v2603 = vld [vmem:[#allocation9 + $0x38] sm:$0xf]
    %v2604 = vld [vmem:[#allocation9 + $0x3c] sm:$0xff]
    %v2605 = vld [vmem:[#allocation9 + $0x44] sm:$0xf]
    %v2606 = vld [vmem:[#allocation9 + $0x48] sm:$0xff]
    %v2607 = vld [vmem:[#allocation9 + $0x50] sm:$0xf]
    %v2608 = vld [vmem:[#allocation9 + $0x54] sm:$0xff]
    %v2609 = vld [vmem:[#allocation9 + $0x5c] sm:$0xf]
    %v2610 = vld [vmem:[#allocation9 + $0x60] sm:$0xff]
    %v2611 = vld [vmem:[#allocation9 + $0x68] sm:$0xf]
    %v2612 = vld [vmem:[#allocation9 + $0x6c] sm:$0xff]
    %v2613 = vld [vmem:[#allocation9 + $0x74] sm:$0xf]
    %v2614 = vld [vmem:[#allocation9 + $0x78] sm:$0xff]
    %v2615 = vld [vmem:[#allocation9 + $0x80] sm:$0xf]
    %v2616 = vld [vmem:[#allocation9 + $0x84] sm:$0xff]
    %v2617 = vld [vmem:[#allocation9 + $0x8c] sm:$0xf]
    %v2618 = vld [vmem:[#allocation9 + $0x90] sm:$0xff]
    %v2619 = vld [vmem:[#allocation9 + $0x98] sm:$0xf]
    %v2620 = vld [vmem:[#allocation9 + $0x9c] sm:$0xff]
    %v2621 = vld [vmem:[#allocation9 + $0xa4] sm:$0xf]
    %v2622 = vld [vmem:[#allocation9 + $0xa8] sm:$0xff]
    %v2623 = vld [vmem:[#allocation9 + $0xb0] sm:$0xf]
    %v2624 = vld [vmem:[#allocation9 + $0xb4] sm:$0xff]
    %v2625 = vld [vmem:[#allocation9 + $0xbc] sm:$0xf]
    %v2658 = vunpack.c.l.b16 %v2594
    %v2659 = vunpack.c.h.b16 %v2594
    %v2660 = vunpack.c.l.b16 %v2595
    %v2661 = vunpack.c.l.b16 %v2596
    %v2662 = vunpack.c.h.b16 %v2596
    %v2663 = vunpack.c.l.b16 %v2597
    %v2664 = vunpack.c.l.b16 %v2598
    %v2665 = vunpack.c.h.b16 %v2598
    %v2666 = vunpack.c.l.b16 %v2599
    %v2667 = vunpack.c.l.b16 %v2600
    %v2668 = vunpack.c.h.b16 %v2600
    %v2669 = vunpack.c.l.b16 %v2601
    %v2670 = vunpack.c.l.b16 %v2602
    %v2671 = vunpack.c.h.b16 %v2602
    %v2672 = vunpack.c.l.b16 %v2603
    %v2673 = vunpack.c.l.b16 %v2604
    %v2674 = vunpack.c.h.b16 %v2604
    %v2675 = vunpack.c.l.b16 %v2605
    %v2676 = vunpack.c.l.b16 %v2606
    %v2677 = vunpack.c.h.b16 %v2606
    %v2678 = vunpack.c.l.b16 %v2607
    %v2679 = vunpack.c.l.b16 %v2608
    %v2680 = vunpack.c.h.b16 %v2608
    %v2681 = vunpack.c.l.b16 %v2609
    %v2682 = vunpack.c.l.b16 %v2610
    %v2683 = vunpack.c.h.b16 %v2610
    %v2684 = vunpack.c.l.b16 %v2611
    %v2685 = vunpack.c.l.b16 %v2612
    %v2686 = vunpack.c.h.b16 %v2612
    %v2687 = vunpack.c.l.b16 %v2613
    %v2688 = vunpack.c.l.b16 %v2614
    %v2689 = vunpack.c.h.b16 %v2614
    %v2690 = vunpack.c.l.b16 %v2615
    %v2691 = vunpack.c.l.b16 %v2616
    %v2692 = vunpack.c.h.b16 %v2616
    %v2693 = vunpack.c.l.b16 %v2617
    %v2694 = vunpack.c.l.b16 %v2618
    %v2695 = vunpack.c.h.b16 %v2618
    %v2696 = vunpack.c.l.b16 %v2619
    %v2697 = vunpack.c.l.b16 %v2620
    %v2698 = vunpack.c.h.b16 %v2620
    %v2699 = vunpack.c.l.b16 %v2621
    %v2700 = vunpack.c.l.b16 %v2622
    %v2701 = vunpack.c.h.b16 %v2622
    %v2702 = vunpack.c.l.b16 %v2623
    %v2703 = vunpack.c.l.b16 %v2624
    %v2704 = vunpack.c.h.b16 %v2624
    %v2705 = vunpack.c.l.b16 %v2625
    %v2706 = vpack.c.b16 %v2661, %v2658
    %v2707 = vpack.c.b16 %v2662, %v2659
    %v2708 = vpack.c.b16 %v2663, %v2660
    %v2709 = vpack.c.b16 %v2667, %v2664
    %v2710 = vpack.c.b16 %v2668, %v2665
    %v2711 = vpack.c.b16 %v2669, %v2666
    %v2712 = vpack.c.b16 %v2673, %v2670
    %v2713 = vpack.c.b16 %v2674, %v2671
    %v2714 = vpack.c.b16 %v2675, %v2672
    %v2715 = vpack.c.b16 %v2679, %v2676
    %v2716 = vpack.c.b16 %v2680, %v2677
    %v2717 = vpack.c.b16 %v2681, %v2678
    %v2718 = vpack.c.b16 %v2685, %v2682
    %v2719 = vpack.c.b16 %v2686, %v2683
    %v2720 = vpack.c.b16 %v2687, %v2684
    %v2721 = vpack.c.b16 %v2691, %v2688
    %v2722 = vpack.c.b16 %v2692, %v2689
    %v2723 = vpack.c.b16 %v2693, %v2690
    %v2724 = vpack.c.b16 %v2697, %v2694
    %v2725 = vpack.c.b16 %v2698, %v2695
    %v2726 = vpack.c.b16 %v2699, %v2696
    %v2727 = vpack.c.b16 %v2703, %v2700
    %v2728 = vpack.c.b16 %v2704, %v2701
    %v2729 = vpack.c.b16 %v2705, %v2702
    %2754 = vmatprep.subr.bf16.mxu0 %v2728
    %2755 = vmatpush1.bf16.msra.mxu0 %v2727
    %2756 = vmatprep.subr.bf16.mxu0 %v2725
    %2757 = vmatpush1.bf16.msra.mxu0 %v2724
    %2758 = vmatprep.subr.bf16.mxu0 %v2722
    %2759 = vmatpush1.bf16.msra.mxu0 %v2721
    %2760 = vmatprep.subr.bf16.mxu0 %v2719
    %2761 = vmatpush1.bf16.msra.mxu0 %v2718
    %2762 = vmatprep.subr.bf16.mxu0 %v2716
    %2763 = vmatpush1.bf16.msra.mxu0 %v2715
    %2764 = vmatprep.subr.bf16.mxu0 %v2713
    %2765 = vmatpush1.bf16.msra.mxu0 %v2712
    %2766 = vmatprep.subr.bf16.mxu0 %v2710
    %2767 = vmatpush1.bf16.msra.mxu0 %v2709
    %2768 = vmatprep.subr.bf16.mxu0 %v2707
    %2769 = vmatpush1.bf16.msra.mxu0 %v2706
    %2770 = vmatprep.subr.bf16.mxu0 0
    %2771 = vmatpush2.bf16.msra.mxu0 0
    %2772 = vmatprep.subr.bf16.mxu0 0
    %2773 = vmatpush2.bf16.msra.mxu0 0
    %2774 = vmatprep.subr.bf16.mxu0 0
    %2775 = vmatpush2.bf16.msra.mxu0 0
    %2776 = vmatprep.subr.bf16.mxu0 0
    %2777 = vmatpush2.bf16.msra.mxu0 0
    %2778 = vmatprep.subr.bf16.mxu0 0
    %2779 = vmatpush2.bf16.msra.mxu0 0
    %2780 = vmatprep.subr.bf16.mxu0 0
    %2781 = vmatpush2.bf16.msra.mxu0 0
    %2782 = vmatprep.subr.bf16.mxu0 0
    %2783 = vmatpush2.bf16.msra.mxu0 0
    %2784 = vmatprep.subr.bf16.mxu0 0
    %2785 = vmatpush2.bf16.msra.mxu0 0
    %2786 = vmatprep.mubr.bf16.mxu0 0
    %2787 = vmatmul.mubr.bf16.gmra.mxu0 %v2593
    %v2788 = vpop.f32.mrf.mxu0
    %v2789 = vadd.f32 0.0, %v2788
    %v2790 = vpop.f32.mrf.mxu0
    %v2791 = vadd.f32 0.0, %v2790
    %v2792 = vpop.f32.mrf.mxu0
    %v2793 = vpop.f32.mrf.mxu0
    %2794 = vdwg.mxu0
    %2795 = vmatprep.subr.bf16.mxu0 0
    %2796 = vmatpush1.bf16.msra.mxu0 %v2729
    %2797 = vmatprep.subr.bf16.mxu0 0
    %2798 = vmatpush1.bf16.msra.mxu0 %v2726
    %2799 = vmatprep.subr.bf16.mxu0 0
    %2800 = vmatpush1.bf16.msra.mxu0 %v2723
    %2801 = vmatprep.subr.bf16.mxu0 0
    %2802 = vmatpush1.bf16.msra.mxu0 %v2720
    %2803 = vmatprep.subr.bf16.mxu0 0
    %2804 = vmatpush1.bf16.msra.mxu0 %v2717
    %2805 = vmatprep.subr.bf16.mxu0 0
    %2806 = vmatpush1.bf16.msra.mxu0 %v2714
    %2807 = vmatprep.subr.bf16.mxu0 0
    %2808 = vmatpush1.bf16.msra.mxu0 %v2711
    %2809 = vmatprep.subr.bf16.mxu0 0
    %2810 = vmatpush1.bf16.msra.mxu0 %v2708
    %2811 = vmatprep.subr.bf16.mxu0 0
    %2812 = vmatpush2.bf16.msra.mxu0 0
    %2813 = vmatprep.subr.bf16.mxu0 0
    %2814 = vmatpush2.bf16.msra.mxu0 0
    %2815 = vmatprep.subr.bf16.mxu0 0
    %2816 = vmatpush2.bf16.msra.mxu0 0
    %2817 = vmatprep.subr.bf16.mxu0 0
    %2818 = vmatpush2.bf16.msra.mxu0 0
    %2819 = vmatprep.subr.bf16.mxu0 0
    %2820 = vmatpush2.bf16.msra.mxu0 0
    %2821 = vmatprep.subr.bf16.mxu0 0
    %2822 = vmatpush2.bf16.msra.mxu0 0
    %2823 = vmatprep.subr.bf16.mxu0 0
    %2824 = vmatpush2.bf16.msra.mxu0 0
    %2825 = vmatprep.subr.bf16.mxu0 0
    %2826 = vmatpush2.bf16.msra.mxu0 0
    %2827 = vmatprep.mubr.bf16.mxu0 0
    %2828 = vmatmul.mubr.bf16.gmra.mxu0 %v2593
    %v2829 = vpop.f32.mrf.mxu0
    %v2830 = vadd.f32 0.0, %v2829
    %v2831 = vpop.f32.mrf.mxu0
    %v2832 = vpop.f32.mrf.mxu0
    %v2833 = vpop.f32.mrf.mxu0
    %2834 = vdwg.mxu0
    %v2835 = vadd.f32 %v2590, %v2789
    %v2836 = vadd.f32 %v2591, %v2791
    %v2837 = vxor.u32 %v2835, 2147483648
    %v2838 = vxor.u32 %v2836, 2147483648
    %v2839 = vmul.f32 %v2837, 1.442695
    %v2840 = vpow.pop %v2839
    %v2841 = vmul.f32 %v2838, 1.442695
    %v2842 = vpow.pop %v2841
    %v2843 = vadd.f32 %v2840, 1.0
    %v2844 = vadd.f32 %v2842, 1.0
    %v2845 = vrcp.pop %v2843
    %v2846 = vmul.f32 1.0, %v2845
    %v2847 = vrcp.pop %v2844
    %v2848 = vmul.f32 1.0, %v2847
    %v2849 = vadd.f32 %v2830, %v2580
    %v2850 = vmul.f32 %v2846, %v2849
    %v2851 = vadd.f32 %v2592, %v2850
    %v2852 = vtanh.pop %v2851
    %v2853 = vsub.f32 %v2587, %v2852
    %v2854 = vmul.f32 %v2848, %v2853
    %v2855 = vadd.f32 %v2852, %v2854
    %s2856 = smul.addr %s541, 8
    %s2857 = scalar_lea.vmem [#allocation4], %s2856
    %v2858 = vld [vmem:[%s2857] sm:$0xff]
    %v2859 = vld [vmem:[%s2857 + $0x8] sm:$0xff]
    %v2860 = vld [vmem:[%s2857 + $0x10] sm:$0xff]
    %v2861 = vpack.c.bf16 %v2855, %v2855
    %2862 = vmatprep.subr.bf16.mxu0 %v2728
    %2863 = vmatpush1.bf16.msra.mxu0 %v2727
    %2864 = vmatprep.subr.bf16.mxu0 %v2725
    %2865 = vmatpush1.bf16.msra.mxu0 %v2724
    %2866 = vmatprep.subr.bf16.mxu0 %v2722
    %2867 = vmatpush1.bf16.msra.mxu0 %v2721
    %2868 = vmatprep.subr.bf16.mxu0 %v2719
    %2869 = vmatpush1.bf16.msra.mxu0 %v2718
    %2870 = vmatprep.subr.bf16.mxu0 %v2716
    %2871 = vmatpush1.bf16.msra.mxu0 %v2715
    %2872 = vmatprep.subr.bf16.mxu0 %v2713
    %2873 = vmatpush1.bf16.msra.mxu0 %v2712
    %2874 = vmatprep.subr.bf16.mxu0 %v2710
    %2875 = vmatpush1.bf16.msra.mxu0 %v2709
    %2876 = vmatprep.subr.bf16.mxu0 %v2707
    %2877 = vmatpush1.bf16.msra.mxu0 %v2706
    %2878 = vmatprep.subr.bf16.mxu0 0
    %2879 = vmatpush2.bf16.msra.mxu0 0
    %2880 = vmatprep.subr.bf16.mxu0 0
    %2881 = vmatpush2.bf16.msra.mxu0 0
    %2882 = vmatprep.subr.bf16.mxu0 0
    %2883 = vmatpush2.bf16.msra.mxu0 0
    %2884 = vmatprep.subr.bf16.mxu0 0
    %2885 = vmatpush2.bf16.msra.mxu0 0
    %2886 = vmatprep.subr.bf16.mxu0 0
    %2887 = vmatpush2.bf16.msra.mxu0 0
    %2888 = vmatprep.subr.bf16.mxu0 0
    %2889 = vmatpush2.bf16.msra.mxu0 0
    %2890 = vmatprep.subr.bf16.mxu0 0
    %2891 = vmatpush2.bf16.msra.mxu0 0
    %2892 = vmatprep.subr.bf16.mxu0 0
    %2893 = vmatpush2.bf16.msra.mxu0 0
    %2894 = vmatprep.mubr.bf16.mxu0 0
    %2895 = vmatmul.mubr.bf16.gmra.mxu0 %v2861
    %v2896 = vpop.f32.mrf.mxu0
    %v2897 = vadd.f32 0.0, %v2896
    %v2898 = vpop.f32.mrf.mxu0
    %v2899 = vadd.f32 0.0, %v2898
    %v2900 = vpop.f32.mrf.mxu0
    %v2901 = vpop.f32.mrf.mxu0
    %2902 = vdwg.mxu0
    %2903 = vmatprep.subr.bf16.mxu0 0
    %2904 = vmatpush1.bf16.msra.mxu0 %v2729
    %2905 = vmatprep.subr.bf16.mxu0 0
    %2906 = vmatpush1.bf16.msra.mxu0 %v2726
    %2907 = vmatprep.subr.bf16.mxu0 0
    %2908 = vmatpush1.bf16.msra.mxu0 %v2723
    %2909 = vmatprep.subr.bf16.mxu0 0
    %2910 = vmatpush1.bf16.msra.mxu0 %v2720
    %2911 = vmatprep.subr.bf16.mxu0 0
    %2912 = vmatpush1.bf16.msra.mxu0 %v2717
    %2913 = vmatprep.subr.bf16.mxu0 0
    %2914 = vmatpush1.bf16.msra.mxu0 %v2714
    %2915 = vmatprep.subr.bf16.mxu0 0
    %2916 = vmatpush1.bf16.msra.mxu0 %v2711
    %2917 = vmatprep.subr.bf16.mxu0 0
    %2918 = vmatpush1.bf16.msra.mxu0 %v2708
    %2919 = vmatprep.subr.bf16.mxu0 0
    %2920 = vmatpush2.bf16.msra.mxu0 0
    %2921 = vmatprep.subr.bf16.mxu0 0
    %2922 = vmatpush2.bf16.msra.mxu0 0
    %2923 = vmatprep.subr.bf16.mxu0 0
    %2924 = vmatpush2.bf16.msra.mxu0 0
    %2925 = vmatprep.subr.bf16.mxu0 0
    %2926 = vmatpush2.bf16.msra.mxu0 0
    %2927 = vmatprep.subr.bf16.mxu0 0
    %2928 = vmatpush2.bf16.msra.mxu0 0
    %2929 = vmatprep.subr.bf16.mxu0 0
    %2930 = vmatpush2.bf16.msra.mxu0 0
    %2931 = vmatprep.subr.bf16.mxu0 0
    %2932 = vmatpush2.bf16.msra.mxu0 0
    %2933 = vmatprep.subr.bf16.mxu0 0
    %2934 = vmatpush2.bf16.msra.mxu0 0
    %2935 = vmatprep.mubr.bf16.mxu0 0
    %2936 = vmatmul.mubr.bf16.gmra.mxu0 %v2861
    %v2937 = vpop.f32.mrf.mxu0
    %v2938 = vadd.f32 0.0, %v2937
    %v2939 = vpop.f32.mrf.mxu0
    %v2940 = vpop.f32.mrf.mxu0
    %v2941 = vpop.f32.mrf.mxu0
    %2942 = vdwg.mxu0
    %v2943 = vadd.f32 %v2858, %v2897
    %v2944 = vadd.f32 %v2859, %v2899
    %v2945 = vxor.u32 %v2943, 2147483648
    %v2946 = vxor.u32 %v2944, 2147483648
    %v2947 = vmul.f32 %v2945, 1.442695
    %v2948 = vpow.pop %v2947
    %v2949 = vmul.f32 %v2946, 1.442695
    %v2950 = vpow.pop %v2949
    %v2951 = vadd.f32 %v2948, 1.0
    %v2952 = vadd.f32 %v2950, 1.0
    %v2953 = vrcp.pop %v2951
    %v2954 = vmul.f32 1.0, %v2953
    %v2955 = vrcp.pop %v2952
    %v2956 = vmul.f32 1.0, %v2955
    %v2957 = vadd.f32 %v2938, %v2580
    %v2958 = vmul.f32 %v2954, %v2957
    %v2959 = vadd.f32 %v2860, %v2958
    %v2960 = vtanh.pop %v2959
    %v2961 = vsub.f32 %v2855, %v2960
    %v2962 = vmul.f32 %v2956, %v2961
    %v2963 = vadd.f32 %v2960, %v2962
    %s2964 = smul.addr %s819, 8
    %s2965 = scalar_lea.vmem [#allocation4], %s2964
    %v2966 = vld [vmem:[%s2965] sm:$0xff]
    %v2967 = vld [vmem:[%s2965 + $0x8] sm:$0xff]
    %v2968 = vld [vmem:[%s2965 + $0x10] sm:$0xff]
    %v2969 = vpack.c.bf16 %v2963, %v2963
    %2970 = vmatprep.subr.bf16.mxu0 %v2728
    %2971 = vmatpush1.bf16.msra.mxu0 %v2727
    %2972 = vmatprep.subr.bf16.mxu0 %v2725
    %2973 = vmatpush1.bf16.msra.mxu0 %v2724
    %2974 = vmatprep.subr.bf16.mxu0 %v2722
    %2975 = vmatpush1.bf16.msra.mxu0 %v2721
    %2976 = vmatprep.subr.bf16.mxu0 %v2719
    %2977 = vmatpush1.bf16.msra.mxu0 %v2718
    %2978 = vmatprep.subr.bf16.mxu0 %v2716
    %2979 = vmatpush1.bf16.msra.mxu0 %v2715
    %2980 = vmatprep.subr.bf16.mxu0 %v2713
    %2981 = vmatpush1.bf16.msra.mxu0 %v2712
    %2982 = vmatprep.subr.bf16.mxu0 %v2710
    %2983 = vmatpush1.bf16.msra.mxu0 %v2709
    %2984 = vmatprep.subr.bf16.mxu0 %v2707
    %2985 = vmatpush1.bf16.msra.mxu0 %v2706
    %2986 = vmatprep.subr.bf16.mxu0 0
    %2987 = vmatpush2.bf16.msra.mxu0 0
    %2988 = vmatprep.subr.bf16.mxu0 0
    %2989 = vmatpush2.bf16.msra.mxu0 0
    %2990 = vmatprep.subr.bf16.mxu0 0
    %2991 = vmatpush2.bf16.msra.mxu0 0
    %2992 = vmatprep.subr.bf16.mxu0 0
    %2993 = vmatpush2.bf16.msra.mxu0 0
    %2994 = vmatprep.subr.bf16.mxu0 0
    %2995 = vmatpush2.bf16.msra.mxu0 0
    %2996 = vmatprep.subr.bf16.mxu0 0
    %2997 = vmatpush2.bf16.msra.mxu0 0
    %2998 = vmatprep.subr.bf16.mxu0 0
    %2999 = vmatpush2.bf16.msra.mxu0 0
    %3000 = vmatprep.subr.bf16.mxu0 0
    %3001 = vmatpush2.bf16.msra.mxu0 0
    %3002 = vmatprep.mubr.bf16.mxu0 0
    %3003 = vmatmul.mubr.bf16.gmra.mxu0 %v2969
    %v3004 = vpop.f32.mrf.mxu0
    %v3005 = vadd.f32 0.0, %v3004
    %v3006 = vpop.f32.mrf.mxu0
    %v3007 = vadd.f32 0.0, %v3006
    %v3008 = vpop.f32.mrf.mxu0
    %v3009 = vpop.f32.mrf.mxu0
    %3010 = vdwg.mxu0
    %3011 = vmatprep.subr.bf16.mxu0 0
    %3012 = vmatpush1.bf16.msra.mxu0 %v2729
    %3013 = vmatprep.subr.bf16.mxu0 0
    %3014 = vmatpush1.bf16.msra.mxu0 %v2726
    %3015 = vmatprep.subr.bf16.mxu0 0
    %3016 = vmatpush1.bf16.msra.mxu0 %v2723
    %3017 = vmatprep.subr.bf16.mxu0 0
    %3018 = vmatpush1.bf16.msra.mxu0 %v2720
    %3019 = vmatprep.subr.bf16.mxu0 0
    %3020 = vmatpush1.bf16.msra.mxu0 %v2717
    %3021 = vmatprep.subr.bf16.mxu0 0
    %3022 = vmatpush1.bf16.msra.mxu0 %v2714
    %3023 = vmatprep.subr.bf16.mxu0 0
    %3024 = vmatpush1.bf16.msra.mxu0 %v2711
    %3025 = vmatprep.subr.bf16.mxu0 0
    %3026 = vmatpush1.bf16.msra.mxu0 %v2708
    %3027 = vmatprep.subr.bf16.mxu0 0
    %3028 = vmatpush2.bf16.msra.mxu0 0
    %3029 = vmatprep.subr.bf16.mxu0 0
    %3030 = vmatpush2.bf16.msra.mxu0 0
    %3031 = vmatprep.subr.bf16.mxu0 0
    %3032 = vmatpush2.bf16.msra.mxu0 0
    %3033 = vmatprep.subr.bf16.mxu0 0
    %3034 = vmatpush2.bf16.msra.mxu0 0
    %3035 = vmatprep.subr.bf16.mxu0 0
    %3036 = vmatpush2.bf16.msra.mxu0 0
    %3037 = vmatprep.subr.bf16.mxu0 0
    %3038 = vmatpush2.bf16.msra.mxu0 0
    %3039 = vmatprep.subr.bf16.mxu0 0
    %3040 = vmatpush2.bf16.msra.mxu0 0
    %3041 = vmatprep.subr.bf16.mxu0 0
    %3042 = vmatpush2.bf16.msra.mxu0 0
    %3043 = vmatprep.mubr.bf16.mxu0 0
    %3044 = vmatmul.mubr.bf16.gmra.mxu0 %v2969
    %v3045 = vpop.f32.mrf.mxu0
    %v3046 = vadd.f32 0.0, %v3045
    %v3047 = vpop.f32.mrf.mxu0
    %v3048 = vpop.f32.mrf.mxu0
    %v3049 = vpop.f32.mrf.mxu0
    %3050 = vdwg.mxu0
    %v3051 = vadd.f32 %v2966, %v3005
    %v3052 = vadd.f32 %v2967, %v3007
    %v3053 = vxor.u32 %v3051, 2147483648
    %v3054 = vxor.u32 %v3052, 2147483648
    %v3055 = vmul.f32 %v3053, 1.442695
    %v3056 = vpow.pop %v3055
    %v3057 = vmul.f32 %v3054, 1.442695
    %v3058 = vpow.pop %v3057
    %v3059 = vadd.f32 %v3056, 1.0
    %v3060 = vadd.f32 %v3058, 1.0
    %v3061 = vrcp.pop %v3059
    %v3062 = vmul.f32 1.0, %v3061
    %v3063 = vrcp.pop %v3060
    %v3064 = vmul.f32 1.0, %v3063
    %v3065 = vadd.f32 %v3046, %v2580
    %v3066 = vmul.f32 %v3062, %v3065
    %v3067 = vadd.f32 %v2968, %v3066
    %v3068 = vtanh.pop %v3067
    %v3069 = vsub.f32 %v2963, %v3068
    %v3070 = vmul.f32 %v3064, %v3069
    %v3071 = vadd.f32 %v3068, %v3070
    %s3072 = smul.addr %s1097, 8
    %s3073 = scalar_lea.vmem [#allocation4], %s3072
    %v3074 = vld [vmem:[%s3073] sm:$0xff]
    %v3075 = vld [vmem:[%s3073 + $0x8] sm:$0xff]
    %v3076 = vld [vmem:[%s3073 + $0x10] sm:$0xff]
    %v3077 = vpack.c.bf16 %v3071, %v3071
    %3078 = vmatprep.subr.bf16.mxu0 %v2728
    %3079 = vmatpush1.bf16.msra.mxu0 %v2727
    %3080 = vmatprep.subr.bf16.mxu0 %v2725
    %3081 = vmatpush1.bf16.msra.mxu0 %v2724
    %3082 = vmatprep.subr.bf16.mxu0 %v2722
    %3083 = vmatpush1.bf16.msra.mxu0 %v2721
    %3084 = vmatprep.subr.bf16.mxu0 %v2719
    %3085 = vmatpush1.bf16.msra.mxu0 %v2718
    %3086 = vmatprep.subr.bf16.mxu0 %v2716
    %3087 = vmatpush1.bf16.msra.mxu0 %v2715
    %3088 = vmatprep.subr.bf16.mxu0 %v2713
    %3089 = vmatpush1.bf16.msra.mxu0 %v2712
    %3090 = vmatprep.subr.bf16.mxu0 %v2710
    %3091 = vmatpush1.bf16.msra.mxu0 %v2709
    %3092 = vmatprep.subr.bf16.mxu0 %v2707
    %3093 = vmatpush1.bf16.msra.mxu0 %v2706
    %3094 = vmatprep.subr.bf16.mxu0 0
    %3095 = vmatpush2.bf16.msra.mxu0 0
    %3096 = vmatprep.subr.bf16.mxu0 0
    %3097 = vmatpush2.bf16.msra.mxu0 0
    %3098 = vmatprep.subr.bf16.mxu0 0
    %3099 = vmatpush2.bf16.msra.mxu0 0
    %3100 = vmatprep.subr.bf16.mxu0 0
    %3101 = vmatpush2.bf16.msra.mxu0 0
    %3102 = vmatprep.subr.bf16.mxu0 0
    %3103 = vmatpush2.bf16.msra.mxu0 0
    %3104 = vmatprep.subr.bf16.mxu0 0
    %3105 = vmatpush2.bf16.msra.mxu0 0
    %3106 = vmatprep.subr.bf16.mxu0 0
    %3107 = vmatpush2.bf16.msra.mxu0 0
    %3108 = vmatprep.subr.bf16.mxu0 0
    %3109 = vmatpush2.bf16.msra.mxu0 0
    %3110 = vmatprep.mubr.bf16.mxu0 0
    %3111 = vmatmul.mubr.bf16.gmra.mxu0 %v3077
    %v3112 = vpop.f32.mrf.mxu0
    %v3113 = vadd.f32 0.0, %v3112
    %v3114 = vpop.f32.mrf.mxu0
    %v3115 = vadd.f32 0.0, %v3114
    %v3116 = vpop.f32.mrf.mxu0
    %v3117 = vpop.f32.mrf.mxu0
    %3118 = vdwg.mxu0
    %3119 = vmatprep.subr.bf16.mxu0 0
    %3120 = vmatpush1.bf16.msra.mxu0 %v2729
    %3121 = vmatprep.subr.bf16.mxu0 0
    %3122 = vmatpush1.bf16.msra.mxu0 %v2726
    %3123 = vmatprep.subr.bf16.mxu0 0
    %3124 = vmatpush1.bf16.msra.mxu0 %v2723
    %3125 = vmatprep.subr.bf16.mxu0 0
    %3126 = vmatpush1.bf16.msra.mxu0 %v2720
    %3127 = vmatprep.subr.bf16.mxu0 0
    %3128 = vmatpush1.bf16.msra.mxu0 %v2717
    %3129 = vmatprep.subr.bf16.mxu0 0
    %3130 = vmatpush1.bf16.msra.mxu0 %v2714
    %3131 = vmatprep.subr.bf16.mxu0 0
    %3132 = vmatpush1.bf16.msra.mxu0 %v2711
    %3133 = vmatprep.subr.bf16.mxu0 0
    %3134 = vmatpush1.bf16.msra.mxu0 %v2708
    %3135 = vmatprep.subr.bf16.mxu0 0
    %3136 = vmatpush2.bf16.msra.mxu0 0
    %3137 = vmatprep.subr.bf16.mxu0 0
    %3138 = vmatpush2.bf16.msra.mxu0 0
    %3139 = vmatprep.subr.bf16.mxu0 0
    %3140 = vmatpush2.bf16.msra.mxu0 0
    %3141 = vmatprep.subr.bf16.mxu0 0
    %3142 = vmatpush2.bf16.msra.mxu0 0
    %3143 = vmatprep.subr.bf16.mxu0 0
    %3144 = vmatpush2.bf16.msra.mxu0 0
    %3145 = vmatprep.subr.bf16.mxu0 0
    %3146 = vmatpush2.bf16.msra.mxu0 0
    %3147 = vmatprep.subr.bf16.mxu0 0
    %3148 = vmatpush2.bf16.msra.mxu0 0
    %3149 = vmatprep.subr.bf16.mxu0 0
    %3150 = vmatpush2.bf16.msra.mxu0 0
    %3151 = vmatprep.mubr.bf16.mxu0 0
    %3152 = vmatmul.mubr.bf16.gmra.mxu0 %v3077
    %v3153 = vpop.f32.mrf.mxu0
    %v3154 = vadd.f32 0.0, %v3153
    %v3155 = vpop.f32.mrf.mxu0
    %v3156 = vpop.f32.mrf.mxu0
    %v3157 = vpop.f32.mrf.mxu0
    %3158 = vdwg.mxu0
    %v3159 = vadd.f32 %v3074, %v3113
    %v3160 = vadd.f32 %v3075, %v3115
    %v3161 = vxor.u32 %v3159, 2147483648
    %v3162 = vxor.u32 %v3160, 2147483648
    %v3163 = vmul.f32 %v3161, 1.442695
    %v3164 = vpow.pop %v3163
    %v3165 = vmul.f32 %v3162, 1.442695
    %v3166 = vpow.pop %v3165
    %v3167 = vadd.f32 %v3164, 1.0
    %v3168 = vadd.f32 %v3166, 1.0
    %v3169 = vrcp.pop %v3167
    %v3170 = vmul.f32 1.0, %v3169
    %v3171 = vrcp.pop %v3168
    %v3172 = vmul.f32 1.0, %v3171
    %v3173 = vadd.f32 %v3154, %v2580
    %v3174 = vmul.f32 %v3170, %v3173
    %v3175 = vadd.f32 %v3076, %v3174
    %v3176 = vtanh.pop %v3175
    %v3177 = vsub.f32 %v3071, %v3176
    %v3178 = vmul.f32 %v3172, %v3177
    %v3179 = vadd.f32 %v3176, %v3178
    %s3180 = smul.addr %s1375, 8
    %s3181 = scalar_lea.vmem [#allocation4], %s3180
    %v3182 = vld [vmem:[%s3181] sm:$0xff]
    %v3183 = vld [vmem:[%s3181 + $0x8] sm:$0xff]
    %v3184 = vld [vmem:[%s3181 + $0x10] sm:$0xff]
    %v3185 = vpack.c.bf16 %v3179, %v3179
    %3186 = vmatprep.subr.bf16.mxu0 %v2728
    %3187 = vmatpush1.bf16.msra.mxu0 %v2727
    %3188 = vmatprep.subr.bf16.mxu0 %v2725
    %3189 = vmatpush1.bf16.msra.mxu0 %v2724
    %3190 = vmatprep.subr.bf16.mxu0 %v2722
    %3191 = vmatpush1.bf16.msra.mxu0 %v2721
    %3192 = vmatprep.subr.bf16.mxu0 %v2719
    %3193 = vmatpush1.bf16.msra.mxu0 %v2718
    %3194 = vmatprep.subr.bf16.mxu0 %v2716
    %3195 = vmatpush1.bf16.msra.mxu0 %v2715
    %3196 = vmatprep.subr.bf16.mxu0 %v2713
    %3197 = vmatpush1.bf16.msra.mxu0 %v2712
    %3198 = vmatprep.subr.bf16.mxu0 %v2710
    %3199 = vmatpush1.bf16.msra.mxu0 %v2709
    %3200 = vmatprep.subr.bf16.mxu0 %v2707
    %3201 = vmatpush1.bf16.msra.mxu0 %v2706
    %3202 = vmatprep.subr.bf16.mxu0 0
    %3203 = vmatpush2.bf16.msra.mxu0 0
    %3204 = vmatprep.subr.bf16.mxu0 0
    %3205 = vmatpush2.bf16.msra.mxu0 0
    %3206 = vmatprep.subr.bf16.mxu0 0
    %3207 = vmatpush2.bf16.msra.mxu0 0
    %3208 = vmatprep.subr.bf16.mxu0 0
    %3209 = vmatpush2.bf16.msra.mxu0 0
    %3210 = vmatprep.subr.bf16.mxu0 0
    %3211 = vmatpush2.bf16.msra.mxu0 0
    %3212 = vmatprep.subr.bf16.mxu0 0
    %3213 = vmatpush2.bf16.msra.mxu0 0
    %3214 = vmatprep.subr.bf16.mxu0 0
    %3215 = vmatpush2.bf16.msra.mxu0 0
    %3216 = vmatprep.subr.bf16.mxu0 0
    %3217 = vmatpush2.bf16.msra.mxu0 0
    %3218 = vmatprep.mubr.bf16.mxu0 0
    %3219 = vmatmul.mubr.bf16.gmra.mxu0 %v3185
    %v3220 = vpop.f32.mrf.mxu0
    %v3221 = vadd.f32 0.0, %v3220
    %v3222 = vpop.f32.mrf.mxu0
    %v3223 = vadd.f32 0.0, %v3222
    %v3224 = vpop.f32.mrf.mxu0
    %v3225 = vpop.f32.mrf.mxu0
    %3226 = vdwg.mxu0
    %3227 = vmatprep.subr.bf16.mxu0 0
    %3228 = vmatpush1.bf16.msra.mxu0 %v2729
    %3229 = vmatprep.subr.bf16.mxu0 0
    %3230 = vmatpush1.bf16.msra.mxu0 %v2726
    %3231 = vmatprep.subr.bf16.mxu0 0
    %3232 = vmatpush1.bf16.msra.mxu0 %v2723
    %3233 = vmatprep.subr.bf16.mxu0 0
    %3234 = vmatpush1.bf16.msra.mxu0 %v2720
    %3235 = vmatprep.subr.bf16.mxu0 0
    %3236 = vmatpush1.bf16.msra.mxu0 %v2717
    %3237 = vmatprep.subr.bf16.mxu0 0
    %3238 = vmatpush1.bf16.msra.mxu0 %v2714
    %3239 = vmatprep.subr.bf16.mxu0 0
    %3240 = vmatpush1.bf16.msra.mxu0 %v2711
    %3241 = vmatprep.subr.bf16.mxu0 0
    %3242 = vmatpush1.bf16.msra.mxu0 %v2708
    %3243 = vmatprep.subr.bf16.mxu0 0
    %3244 = vmatpush2.bf16.msra.mxu0 0
    %3245 = vmatprep.subr.bf16.mxu0 0
    %3246 = vmatpush2.bf16.msra.mxu0 0
    %3247 = vmatprep.subr.bf16.mxu0 0
    %3248 = vmatpush2.bf16.msra.mxu0 0
    %3249 = vmatprep.subr.bf16.mxu0 0
    %3250 = vmatpush2.bf16.msra.mxu0 0
    %3251 = vmatprep.subr.bf16.mxu0 0
    %3252 = vmatpush2.bf16.msra.mxu0 0
    %3253 = vmatprep.subr.bf16.mxu0 0
    %3254 = vmatpush2.bf16.msra.mxu0 0
    %3255 = vmatprep.subr.bf16.mxu0 0
    %3256 = vmatpush2.bf16.msra.mxu0 0
    %3257 = vmatprep.subr.bf16.mxu0 0
    %3258 = vmatpush2.bf16.msra.mxu0 0
    %3259 = vmatprep.mubr.bf16.mxu0 0
    %3260 = vmatmul.mubr.bf16.gmra.mxu0 %v3185
    %v3261 = vpop.f32.mrf.mxu0
    %v3262 = vadd.f32 0.0, %v3261
    %v3263 = vpop.f32.mrf.mxu0
    %v3264 = vpop.f32.mrf.mxu0
    %v3265 = vpop.f32.mrf.mxu0
    %3266 = vdwg.mxu0
    %v3267 = vadd.f32 %v3182, %v3221
    %v3268 = vadd.f32 %v3183, %v3223
    %v3269 = vxor.u32 %v3267, 2147483648
    %v3270 = vxor.u32 %v3268, 2147483648
    %v3271 = vmul.f32 %v3269, 1.442695
    %v3272 = vpow.pop %v3271
    %v3273 = vmul.f32 %v3270, 1.442695
    %v3274 = vpow.pop %v3273
    %v3275 = vadd.f32 %v3272, 1.0
    %v3276 = vadd.f32 %v3274, 1.0
    %v3277 = vrcp.pop %v3275
    %v3278 = vmul.f32 1.0, %v3277
    %v3279 = vrcp.pop %v3276
    %v3280 = vmul.f32 1.0, %v3279
    %v3281 = vadd.f32 %v3262, %v2580
    %v3282 = vmul.f32 %v3278, %v3281
    %v3283 = vadd.f32 %v3184, %v3282
    %v3284 = vtanh.pop %v3283
    %v3285 = vsub.f32 %v3179, %v3284
    %v3286 = vmul.f32 %v3280, %v3285
    %v3287 = vadd.f32 %v3284, %v3286
    %s3288 = smul.addr %s1653, 8
    %s3289 = scalar_lea.vmem [#allocation4], %s3288
    %v3290 = vld [vmem:[%s3289] sm:$0xff]
    %v3291 = vld [vmem:[%s3289 + $0x8] sm:$0xff]
    %v3292 = vld [vmem:[%s3289 + $0x10] sm:$0xff]
    %v3293 = vpack.c.bf16 %v3287, %v3287
    %3294 = vmatprep.subr.bf16.mxu0 %v2728
    %3295 = vmatpush1.bf16.msra.mxu0 %v2727
    %3296 = vmatprep.subr.bf16.mxu0 %v2725
    %3297 = vmatpush1.bf16.msra.mxu0 %v2724
    %3298 = vmatprep.subr.bf16.mxu0 %v2722
    %3299 = vmatpush1.bf16.msra.mxu0 %v2721
    %3300 = vmatprep.subr.bf16.mxu0 %v2719
    %3301 = vmatpush1.bf16.msra.mxu0 %v2718
    %3302 = vmatprep.subr.bf16.mxu0 %v2716
    %3303 = vmatpush1.bf16.msra.mxu0 %v2715
    %3304 = vmatprep.subr.bf16.mxu0 %v2713
    %3305 = vmatpush1.bf16.msra.mxu0 %v2712
    %3306 = vmatprep.subr.bf16.mxu0 %v2710
    %3307 = vmatpush1.bf16.msra.mxu0 %v2709
    %3308 = vmatprep.subr.bf16.mxu0 %v2707
    %3309 = vmatpush1.bf16.msra.mxu0 %v2706
    %3310 = vmatprep.subr.bf16.mxu0 0
    %3311 = vmatpush2.bf16.msra.mxu0 0
    %3312 = vmatprep.subr.bf16.mxu0 0
    %3313 = vmatpush2.bf16.msra.mxu0 0
    %3314 = vmatprep.subr.bf16.mxu0 0
    %3315 = vmatpush2.bf16.msra.mxu0 0
    %3316 = vmatprep.subr.bf16.mxu0 0
    %3317 = vmatpush2.bf16.msra.mxu0 0
    %3318 = vmatprep.subr.bf16.mxu0 0
    %3319 = vmatpush2.bf16.msra.mxu0 0
    %3320 = vmatprep.subr.bf16.mxu0 0
    %3321 = vmatpush2.bf16.msra.mxu0 0
    %3322 = vmatprep.subr.bf16.mxu0 0
    %3323 = vmatpush2.bf16.msra.mxu0 0
    %3324 = vmatprep.subr.bf16.mxu0 0
    %3325 = vmatpush2.bf16.msra.mxu0 0
    %3326 = vmatprep.mubr.bf16.mxu0 0
    %3327 = vmatmul.mubr.bf16.gmra.mxu0 %v3293
    %v3328 = vpop.f32.mrf.mxu0
    %v3329 = vadd.f32 0.0, %v3328
    %v3330 = vpop.f32.mrf.mxu0
    %v3331 = vadd.f32 0.0, %v3330
    %v3332 = vpop.f32.mrf.mxu0
    %v3333 = vpop.f32.mrf.mxu0
    %3334 = vdwg.mxu0
    %3335 = vmatprep.subr.bf16.mxu0 0
    %3336 = vmatpush1.bf16.msra.mxu0 %v2729
    %3337 = vmatprep.subr.bf16.mxu0 0
    %3338 = vmatpush1.bf16.msra.mxu0 %v2726
    %3339 = vmatprep.subr.bf16.mxu0 0
    %3340 = vmatpush1.bf16.msra.mxu0 %v2723
    %3341 = vmatprep.subr.bf16.mxu0 0
    %3342 = vmatpush1.bf16.msra.mxu0 %v2720
    %3343 = vmatprep.subr.bf16.mxu0 0
    %3344 = vmatpush1.bf16.msra.mxu0 %v2717
    %3345 = vmatprep.subr.bf16.mxu0 0
    %3346 = vmatpush1.bf16.msra.mxu0 %v2714
    %3347 = vmatprep.subr.bf16.mxu0 0
    %3348 = vmatpush1.bf16.msra.mxu0 %v2711
    %3349 = vmatprep.subr.bf16.mxu0 0
    %3350 = vmatpush1.bf16.msra.mxu0 %v2708
    %3351 = vmatprep.subr.bf16.mxu0 0
    %3352 = vmatpush2.bf16.msra.mxu0 0
    %3353 = vmatprep.subr.bf16.mxu0 0
    %3354 = vmatpush2.bf16.msra.mxu0 0
    %3355 = vmatprep.subr.bf16.mxu0 0
    %3356 = vmatpush2.bf16.msra.mxu0 0
    %3357 = vmatprep.subr.bf16.mxu0 0
    %3358 = vmatpush2.bf16.msra.mxu0 0
    %3359 = vmatprep.subr.bf16.mxu0 0
    %3360 = vmatpush2.bf16.msra.mxu0 0
    %3361 = vmatprep.subr.bf16.mxu0 0
    %3362 = vmatpush2.bf16.msra.mxu0 0
    %3363 = vmatprep.subr.bf16.mxu0 0
    %3364 = vmatpush2.bf16.msra.mxu0 0
    %3365 = vmatprep.subr.bf16.mxu0 0
    %3366 = vmatpush2.bf16.msra.mxu0 0
    %3367 = vmatprep.mubr.bf16.mxu0 0
    %3368 = vmatmul.mubr.bf16.gmra.mxu0 %v3293
    %v3369 = vpop.f32.mrf.mxu0
    %v3370 = vadd.f32 0.0, %v3369
    %v3371 = vpop.f32.mrf.mxu0
    %v3372 = vpop.f32.mrf.mxu0
    %v3373 = vpop.f32.mrf.mxu0
    %3374 = vdwg.mxu0
    %v3375 = vadd.f32 %v3290, %v3329
    %v3376 = vadd.f32 %v3291, %v3331
    %v3377 = vxor.u32 %v3375, 2147483648
    %v3378 = vxor.u32 %v3376, 2147483648
    %v3379 = vmul.f32 %v3377, 1.442695
    %v3380 = vpow.pop %v3379
    %v3381 = vmul.f32 %v3378, 1.442695
    %v3382 = vpow.pop %v3381
    %v3383 = vadd.f32 %v3380, 1.0
    %v3384 = vadd.f32 %v3382, 1.0
    %v3385 = vrcp.pop %v3383
    %v3386 = vmul.f32 1.0, %v3385
    %v3387 = vrcp.pop %v3384
    %v3388 = vmul.f32 1.0, %v3387
    %v3389 = vadd.f32 %v3370, %v2580
    %v3390 = vmul.f32 %v3386, %v3389
    %v3391 = vadd.f32 %v3292, %v3390
    %v3392 = vtanh.pop %v3391
    %v3393 = vsub.f32 %v3287, %v3392
    %v3394 = vmul.f32 %v3388, %v3393
    %v3395 = vadd.f32 %v3392, %v3394
    %s3396 = smul.addr %s1931, 8
    %s3397 = scalar_lea.vmem [#allocation4], %s3396
    %v3398 = vld [vmem:[%s3397] sm:$0xff]
    %v3399 = vld [vmem:[%s3397 + $0x8] sm:$0xff]
    %v3400 = vld [vmem:[%s3397 + $0x10] sm:$0xff]
    %v3401 = vpack.c.bf16 %v3395, %v3395
    %3402 = vmatprep.subr.bf16.mxu0 %v2728
    %3403 = vmatpush1.bf16.msra.mxu0 %v2727
    %3404 = vmatprep.subr.bf16.mxu0 %v2725
    %3405 = vmatpush1.bf16.msra.mxu0 %v2724
    %3406 = vmatprep.subr.bf16.mxu0 %v2722
    %3407 = vmatpush1.bf16.msra.mxu0 %v2721
    %3408 = vmatprep.subr.bf16.mxu0 %v2719
    %3409 = vmatpush1.bf16.msra.mxu0 %v2718
    %3410 = vmatprep.subr.bf16.mxu0 %v2716
    %3411 = vmatpush1.bf16.msra.mxu0 %v2715
    %3412 = vmatprep.subr.bf16.mxu0 %v2713
    %3413 = vmatpush1.bf16.msra.mxu0 %v2712
    %3414 = vmatprep.subr.bf16.mxu0 %v2710
    %3415 = vmatpush1.bf16.msra.mxu0 %v2709
    %3416 = vmatprep.subr.bf16.mxu0 %v2707
    %3417 = vmatpush1.bf16.msra.mxu0 %v2706
    %3418 = vmatprep.subr.bf16.mxu0 0
    %3419 = vmatpush2.bf16.msra.mxu0 0
    %3420 = vmatprep.subr.bf16.mxu0 0
    %3421 = vmatpush2.bf16.msra.mxu0 0
    %3422 = vmatprep.subr.bf16.mxu0 0
    %3423 = vmatpush2.bf16.msra.mxu0 0
    %3424 = vmatprep.subr.bf16.mxu0 0
    %3425 = vmatpush2.bf16.msra.mxu0 0
    %3426 = vmatprep.subr.bf16.mxu0 0
    %3427 = vmatpush2.bf16.msra.mxu0 0
    %3428 = vmatprep.subr.bf16.mxu0 0
    %3429 = vmatpush2.bf16.msra.mxu0 0
    %3430 = vmatprep.subr.bf16.mxu0 0
    %3431 = vmatpush2.bf16.msra.mxu0 0
    %3432 = vmatprep.subr.bf16.mxu0 0
    %3433 = vmatpush2.bf16.msra.mxu0 0
    %3434 = vmatprep.mubr.bf16.mxu0 0
    %3435 = vmatmul.mubr.bf16.gmra.mxu0 %v3401
    %v3436 = vpop.f32.mrf.mxu0
    %v3437 = vadd.f32 0.0, %v3436
    %v3438 = vpop.f32.mrf.mxu0
    %v3439 = vadd.f32 0.0, %v3438
    %v3440 = vpop.f32.mrf.mxu0
    %v3441 = vpop.f32.mrf.mxu0
    %3442 = vdwg.mxu0
    %3443 = vmatprep.subr.bf16.mxu0 0
    %3444 = vmatpush1.bf16.msra.mxu0 %v2729
    %3445 = vmatprep.subr.bf16.mxu0 0
    %3446 = vmatpush1.bf16.msra.mxu0 %v2726
    %3447 = vmatprep.subr.bf16.mxu0 0
    %3448 = vmatpush1.bf16.msra.mxu0 %v2723
    %3449 = vmatprep.subr.bf16.mxu0 0
    %3450 = vmatpush1.bf16.msra.mxu0 %v2720
    %3451 = vmatprep.subr.bf16.mxu0 0
    %3452 = vmatpush1.bf16.msra.mxu0 %v2717
    %3453 = vmatprep.subr.bf16.mxu0 0
    %3454 = vmatpush1.bf16.msra.mxu0 %v2714
    %3455 = vmatprep.subr.bf16.mxu0 0
    %3456 = vmatpush1.bf16.msra.mxu0 %v2711
    %3457 = vmatprep.subr.bf16.mxu0 0
    %3458 = vmatpush1.bf16.msra.mxu0 %v2708
    %3459 = vmatprep.subr.bf16.mxu0 0
    %3460 = vmatpush2.bf16.msra.mxu0 0
    %3461 = vmatprep.subr.bf16.mxu0 0
    %3462 = vmatpush2.bf16.msra.mxu0 0
    %3463 = vmatprep.subr.bf16.mxu0 0
    %3464 = vmatpush2.bf16.msra.mxu0 0
    %3465 = vmatprep.subr.bf16.mxu0 0
    %3466 = vmatpush2.bf16.msra.mxu0 0
    %3467 = vmatprep.subr.bf16.mxu0 0
    %3468 = vmatpush2.bf16.msra.mxu0 0
    %3469 = vmatprep.subr.bf16.mxu0 0
    %3470 = vmatpush2.bf16.msra.mxu0 0
    %3471 = vmatprep.subr.bf16.mxu0 0
    %3472 = vmatpush2.bf16.msra.mxu0 0
    %3473 = vmatprep.subr.bf16.mxu0 0
    %3474 = vmatpush2.bf16.msra.mxu0 0
    %3475 = vmatprep.mubr.bf16.mxu0 0
    %3476 = vmatmul.mubr.bf16.gmra.mxu0 %v3401
    %v3477 = vpop.f32.mrf.mxu0
    %v3478 = vadd.f32 0.0, %v3477
    %v3479 = vpop.f32.mrf.mxu0
    %v3480 = vpop.f32.mrf.mxu0
    %v3481 = vpop.f32.mrf.mxu0
    %3482 = vdwg.mxu0
    %v3483 = vadd.f32 %v3398, %v3437
    %v3484 = vadd.f32 %v3399, %v3439
    %v3485 = vxor.u32 %v3483, 2147483648
    %v3486 = vxor.u32 %v3484, 2147483648
    %v3487 = vmul.f32 %v3485, 1.442695
    %v3488 = vpow.pop %v3487
    %v3489 = vmul.f32 %v3486, 1.442695
    %v3490 = vpow.pop %v3489
    %v3491 = vadd.f32 %v3488, 1.0
    %v3492 = vadd.f32 %v3490, 1.0
    %v3493 = vrcp.pop %v3491
    %v3494 = vmul.f32 1.0, %v3493
    %v3495 = vrcp.pop %v3492
    %v3496 = vmul.f32 1.0, %v3495
    %v3497 = vadd.f32 %v3478, %v2580
    %v3498 = vmul.f32 %v3494, %v3497
    %v3499 = vadd.f32 %v3400, %v3498
    %v3500 = vtanh.pop %v3499
    %v3501 = vsub.f32 %v3395, %v3500
    %v3502 = vmul.f32 %v3496, %v3501
    %v3503 = vadd.f32 %v3500, %v3502
    %v3504 = vld [vmem:[%s9] sm:$0x1]
    %v3506 = vlaneseq
    %v3507 = vshrl.u32 %v3506, 7
    %v3508 = vsub.s32 0, %v3507
    %v3509 = vrot.slane %v3504, %v3508
    %v3511 = vmul.f32 %v3503, %v3509
    %3512 = vadd.xlane.f32.xlu0 %v3511
    %v3513 = vpop.xlane.xlu0 %3512
    %v3514 = vld [vmem:[%s10] sm:$0x1]
    %v3516 = vlaneseq
    %v3517 = vshrl.u32 %v3516, 7
    %v3518 = vsub.s32 0, %v3517
    %v3519 = vrot.slane %v3514, %v3518
    %v3521 = vadd.f32 %v3513, %v3519
    %3522 = vst [vmem:[%s11] sm:$0xff] %v3521
    // Predicated region
    $region58: #{gru_model_forward.1} parent=1 // pred_check
      _
    $region59: #{gru_model_forward.1} parent=1 // pred_check_branch
      %3524 = sbr.rel (0) target = $region61
    $region60: #{gru_model_forward.1} parent=1 // pred_region
      _
    $region61: #{gru_model_forward.1} parent=1 // pred_fallthru
      _
    // Predicated region
    $region62: #{gru_model_forward.1} parent=1 // pred_check
      _
    $region63: #{gru_model_forward.1} parent=1 // pred_check_branch
      %3526 = sbr.rel (0) target = $region65
    $region64: #{gru_model_forward.1} parent=1 // pred_region
      _
    $region65: #{gru_model_forward.1} parent=1 // pred_fallthru
      _
    %3527 = vsyncpa [#allocation6], 1
    %3528 = vsyncpa [#allocation8], 1

</llo_original>
